<compile_context>
chip_gen: v7x
topology: tpu7x:2x2x1
jax: 0.10.0
libtpu: 0.0.40
codegen_flags: <defaults>
</compile_context>

<pallas_src>
import functools

import jax
import jax.numpy as jnp
from jax.experimental import pallas as pl
from jax.experimental.pallas import tpu as pltpu

D_IN, D_H1, D_H2 = 768, 256, 128
LANES = 128


def _round_up(x, m):
    return ((x + m - 1) // m) * m


def _encoder_kernel(x_ref, w1_ref, b1_ref, w2_ref, b2_ref, w3_ref, b3_ref,
                    o_ref):
    # x_ref: (tm, 768) f32 tile of the flattened BERT embeddings.  Cast to
    # bf16 in-kernel (cheap VPU pack, hidden under the dominant x DMA) so the
    # wrapper never needs an extra HBM pass over x.
    x = x_ref[...].astype(jnp.bfloat16)

    # fc1 -> relu   (768 -> 256); bf16 MXU inputs, f32 accumulation.
    h1 = jnp.dot(x, w1_ref[...], preferred_element_type=jnp.float32)
    h1 = jnp.maximum(h1 + b1_ref[...], 0.0)
    # dropout (inference / model.eval()): identity
    # TODO(synk): training-mode dropout would need pltpu.prng_seed/prng_random_bits.

    # fc2 -> relu   (256 -> 128)
    h2 = jnp.dot(h1.astype(jnp.bfloat16), w2_ref[...],
                 preferred_element_type=jnp.float32)
    h2 = jnp.maximum(h2 + b2_ref[...], 0.0)

    # fc3 -> relu   (128 -> latent_dim, zero-padded to 128 lanes)
    h3 = jnp.dot(h2.astype(jnp.bfloat16), w3_ref[...],
                 preferred_element_type=jnp.float32)
    h3 = jnp.maximum(h3 + b3_ref[...], 0.0)

    o_ref[...] = h3.astype(o_ref.dtype)


@functools.partial(jax.jit, static_argnames=("tm",))
def encoder_bert_forward(x, w1, b1, w2, b2, w3, b3, *, tm=1024):
    """x: (N, 768) float32.  Returns (N, latent_dim) float32."""
    n, d_in = x.shape
    assert d_in == D_IN
    latent_dim = w3.shape[1]
    lat_pad = _round_up(latent_dim, LANES)

    # Row tile: large enough to fill the MXU and amortize the ~0.35us/step
    # pipeline overhead; multiple of 256 (v6e/v7x MXU edge, also multiple of
    # v5e's 128).  Clamped so tiny problems don't allocate oversized tiles.
    tm = min(tm, _round_up(n, 256))
    num_tiles = pl.cdiv(n, tm)      # partial last block is handled by Pallas

    # Weights to bf16 once (tiny, one-off).  Biases stay f32.
    w1b = w1.astype(jnp.bfloat16)
    w2b = w2.astype(jnp.bfloat16)
    w3b = jnp.pad(w3, ((0, 0), (0, lat_pad - latent_dim))).astype(jnp.bfloat16)
    b3p = jnp.pad(b3, ((0, 0), (0, lat_pad - latent_dim)))

    row_in_spec = pl.BlockSpec((tm, D_IN), lambda i: (i, 0))
    row_out_spec = pl.BlockSpec((tm, lat_pad), lambda i: (i, 0))
    # Grid-invariant (resident) operands: weights and biases.
    resident = lambda r, c: pl.BlockSpec((r, c), lambda i: (0, 0))

    flops = 2 * n * (D_IN * D_H1 + D_H1 * D_H2 + D_H2 * lat_pad)
    bytes_accessed = (n * D_IN * 4                                       # x (f32)
                      + (D_IN * D_H1 + D_H1 * D_H2 + D_H2 * lat_pad) * 2  # weights bf16
                      + (D_H1 + D_H2 + lat_pad) * 4                       # biases f32
                      + n * lat_pad * 4)                                  # output f32
    cost = pl.CostEstimate(flops=flops, transcendentals=0,
                           bytes_accessed=bytes_accessed)

    out = pl.pallas_call(
        _encoder_kernel,
        out_shape=jax.ShapeDtypeStruct((n, lat_pad), jnp.float32),
        grid_spec=pltpu.PrefetchScalarGridSpec(
            num_scalar_prefetch=0,
            grid=(num_tiles,),
            in_specs=[
                row_in_spec,               # x tile (tm, 768) f32
                resident(D_IN, D_H1),      # w1 (768, 256) bf16
                resident(1, D_H1),         # b1 f32
                resident(D_H1, D_H2),      # w2 (256, 128) bf16
                resident(1, D_H2),         # b2 f32
                resident(D_H2, lat_pad),   # w3 (128, 128) bf16 (zero-padded)
                resident(1, lat_pad),      # b3 f32 (zero-padded)
            ],
            out_specs=row_out_spec,        # (tm, 128) f32, lane-dense stores
        ),
        compiler_params=pltpu.CompilerParams(
            dimension_semantics=("parallel",),
            # Live VMEM at tm=1024 (f32 x tile, double-buffered, + resident
            # weights) is ~8 MiB; 32 MiB is pure headroom and matches the
            # v6e/v7x scoped defaults (>= v5e's 16 MiB default).
            vmem_limit_bytes=32 * 1024 * 1024,
        ),
        cost_estimate=cost,
    )(x, w1b, b1, w2b, b2, w3b, b3p)

    return out[:, :latent_dim]


def _init_linear(key, fan_in, fan_out):
    # Mimic torch.nn.Linear default init: U(-1/sqrt(fan_in), 1/sqrt(fan_in)),
    # deterministic via JAX PRNG.  Weight stored as (in, out).
    kw, kb = jax.random.split(key)
    bound = 1.0 / (fan_in ** 0.5)
    w = jax.random.uniform(kw, (fan_in, fan_out), jnp.float32, -bound, bound)
    b = jax.random.uniform(kb, (1, fan_out), jnp.float32, -bound, bound)
    return w, b


if __name__ == "__main__":
    latent_dim = 32
    n_edges = 600  # not a multiple of the tile -> exercises the partial-block path

    root = jax.random.PRNGKey(0)
    k_x, k1, k2, k3 = jax.random.split(root, 4)

    # data.edge_list_bert_embedding -> view(-1, 768)
    x = jax.random.normal(k_x, (n_edges, D_IN), jnp.float32)

    w1, b1 = _init_linear(k1, D_IN, D_H1)
    w2, b2 = _init_linear(k2, D_H1, D_H2)
    w3, b3 = _init_linear(k3, D_H2, latent_dim)

    out = encoder_bert_forward(x, w1, b1, w2, b2, w3, b3)
    out = jax.block_until_ready(out)
    assert out.shape == (n_edges, latent_dim)

    # Reference with matching numerics (bf16 matmul inputs, f32 accumulation).
    def bf16_ref(x, w1, b1, w2, b2, w3, b3):
        h = jnp.dot(x.astype(jnp.bfloat16), w1.astype(jnp.bfloat16),
                    preferred_element_type=jnp.float32)
        h = jnp.maximum(h + b1, 0.0)
        h = jnp.dot(h.astype(jnp.bfloat16), w2.astype(jnp.bfloat16),
                    preferred_element_type=jnp.float32)
        h = jnp.maximum(h + b2, 0.0)
        h = jnp.dot(h.astype(jnp.bfloat16), w3.astype(jnp.bfloat16),
                    preferred_element_type=jnp.float32)
        return jnp.maximum(h + b3, 0.0)

    ref_bf16 = bf16_ref(x, w1, b1, w2, b2, w3, b3)
    assert jnp.allclose(out, ref_bf16, atol=2e-2, rtol=2e-2)

    # Looser check against the pure-f32 math (bf16 matmul inputs perturb
    # numerics slightly; acceptable for inference).
    ref_f32 = jnp.maximum(x @ w1 + b1, 0.0)
    ref_f32 = jnp.maximum(ref_f32 @ w2 + b2, 0.0)
    ref_f32 = jnp.maximum(ref_f32 @ w3 + b3, 0.0)
    assert jnp.allclose(out, ref_f32, atol=5e-2, rtol=5e-2)

    print("KERNEL_OK")
</pallas_src>

<mosaic_0001>
module attributes {stable_mosaic.version = 11 : i64} {
  func.func @_encoder_kernel(%arg0: i32, %arg1: memref<768x768xf32, #tpu.memory_space<vmem>>, %arg2: memref<768x256xbf16, #tpu.memory_space<vmem>>, %arg3: memref<1x256xf32, #tpu.memory_space<vmem>>, %arg4: memref<256x128xbf16, #tpu.memory_space<vmem>>, %arg5: memref<1x128xf32, #tpu.memory_space<vmem>>, %arg6: memref<128x128xbf16, #tpu.memory_space<vmem>>, %arg7: memref<1x128xf32, #tpu.memory_space<vmem>>, %arg8: memref<768x128xf32, #tpu.memory_space<vmem>>) attributes {dimension_semantics = [#tpu.dimension_semantics<parallel>], iteration_bounds = array<i64: 1>, scalar_prefetch = 0 : i64, scratch_operands = 0 : i64, tpu.core_type = #tpu.core_type<tc>, window_params = [{transform_indices = @transform_0, window_bounds = array<i64: 768, 768>}, {pipeline_mode = #tpu.pipeline_mode<synchronous>, transform_indices = @transform_1, window_bounds = array<i64: 768, 256>}, {pipeline_mode = #tpu.pipeline_mode<synchronous>, transform_indices = @transform_2, window_bounds = array<i64: 1, 256>}, {pipeline_mode = #tpu.pipeline_mode<synchronous>, transform_indices = @transform_3, window_bounds = array<i64: 256, 128>}, {pipeline_mode = #tpu.pipeline_mode<synchronous>, transform_indices = @transform_4, window_bounds = array<i64: 1, 128>}, {pipeline_mode = #tpu.pipeline_mode<synchronous>, transform_indices = @transform_5, window_bounds = array<i64: 128, 128>}, {pipeline_mode = #tpu.pipeline_mode<synchronous>, transform_indices = @transform_6, window_bounds = array<i64: 1, 128>}, {transform_indices = @transform_7, window_bounds = array<i64: 768, 128>}]} {
    %c0 = arith.constant 0 : index
    %c0_0 = arith.constant 0 : index
    %0 = vector.load %arg1[%c0, %c0_0] : memref<768x768xf32, #tpu.memory_space<vmem>>, vector<768x768xf32>
    %1 = arith.truncf %0 : vector<768x768xf32> to vector<768x768xbf16>
    %c0_1 = arith.constant 0 : index
    %c0_2 = arith.constant 0 : index
    %2 = vector.load %arg2[%c0_1, %c0_2] : memref<768x256xbf16, #tpu.memory_space<vmem>>, vector<768x256xbf16>
    %cst = arith.constant dense<0.000000e+00> : vector<768x256xf32>
    %3 = tpu.matmul %1, %2, %cst {dimension_numbers = #tpu.dot_dimension_numbers<[1], [0], [0], [1], [0, 0, 1, 1], [], []>} : vector<768x768xbf16>, vector<768x256xbf16>, vector<768x256xf32> -> vector<768x256xf32>
    %c0_3 = arith.constant 0 : index
    %c0_4 = arith.constant 0 : index
    %4 = vector.load %arg3[%c0_3, %c0_4] : memref<1x256xf32, #tpu.memory_space<vmem>>, vector<1x256xf32>
    %5 = vector.broadcast %4 : vector<1x256xf32> to vector<768x256xf32>
    %6 = arith.addf %3, %5 : vector<768x256xf32>
    %cst_5 = arith.constant 0.000000e+00 : f32
    %7 = vector.broadcast %cst_5 : f32 to vector<768x256xf32>
    %8 = arith.maximumf %6, %7 : vector<768x256xf32>
    %9 = arith.truncf %8 : vector<768x256xf32> to vector<768x256xbf16>
    %c0_6 = arith.constant 0 : index
    %c0_7 = arith.constant 0 : index
    %10 = vector.load %arg4[%c0_6, %c0_7] : memref<256x128xbf16, #tpu.memory_space<vmem>>, vector<256x128xbf16>
    %cst_8 = arith.constant dense<0.000000e+00> : vector<768x128xf32>
    %11 = tpu.matmul %9, %10, %cst_8 {dimension_numbers = #tpu.dot_dimension_numbers<[1], [0], [0], [1], [0, 0, 1, 1], [], []>} : vector<768x256xbf16>, vector<256x128xbf16>, vector<768x128xf32> -> vector<768x128xf32>
    %c0_9 = arith.constant 0 : index
    %c0_10 = arith.constant 0 : index
    %12 = vector.load %arg5[%c0_9, %c0_10] : memref<1x128xf32, #tpu.memory_space<vmem>>, vector<1x128xf32>
    %13 = vector.broadcast %12 : vector<1x128xf32> to vector<768x128xf32>
    %14 = arith.addf %11, %13 : vector<768x128xf32>
    %cst_11 = arith.constant 0.000000e+00 : f32
    %15 = vector.broadcast %cst_11 : f32 to vector<768x128xf32>
    %16 = arith.maximumf %14, %15 : vector<768x128xf32>
    %17 = arith.truncf %16 : vector<768x128xf32> to vector<768x128xbf16>
    %c0_12 = arith.constant 0 : index
    %c0_13 = arith.constant 0 : index
    %18 = vector.load %arg6[%c0_12, %c0_13] : memref<128x128xbf16, #tpu.memory_space<vmem>>, vector<128x128xbf16>
    %cst_14 = arith.constant dense<0.000000e+00> : vector<768x128xf32>
    %19 = tpu.matmul %17, %18, %cst_14 {dimension_numbers = #tpu.dot_dimension_numbers<[1], [0], [0], [1], [0, 0, 1, 1], [], []>} : vector<768x128xbf16>, vector<128x128xbf16>, vector<768x128xf32> -> vector<768x128xf32>
    %c0_15 = arith.constant 0 : index
    %c0_16 = arith.constant 0 : index
    %20 = vector.load %arg7[%c0_15, %c0_16] : memref<1x128xf32, #tpu.memory_space<vmem>>, vector<1x128xf32>
    %21 = vector.broadcast %20 : vector<1x128xf32> to vector<768x128xf32>
    %22 = arith.addf %19, %21 : vector<768x128xf32>
    %cst_17 = arith.constant 0.000000e+00 : f32
    %23 = vector.broadcast %cst_17 : f32 to vector<768x128xf32>
    %24 = arith.maximumf %22, %23 : vector<768x128xf32>
    %c0_18 = arith.constant 0 : index
    %c0_19 = arith.constant 0 : index
    %25 = vector.load %arg8[%c0_18, %c0_19] : memref<768x128xf32, #tpu.memory_space<vmem>>, vector<768x128xf32>
    tpu.vector_store %arg8[%c0_18, %c0_19], %24 {strides = array<i32>} : memref<768x128xf32, #tpu.memory_space<vmem>>, vector<768x128xf32>,
    return
  }
  func.func @transform_0(%arg0: i32) -> (i32, i32) {
    %c0_i32 = arith.constant 0 : i32
    %c0_i32_0 = arith.constant 0 : i32
    return %arg0, %c0_i32 : i32, i32
  }
  func.func @transform_1(%arg0: i32) -> (i32, i32) {
    %c0_i32 = arith.constant 0 : i32
    %c0_i32_0 = arith.constant 0 : i32
    %c0_i32_1 = arith.constant 0 : i32
    return %c0_i32, %c0_i32_0 : i32, i32
  }
  func.func @transform_2(%arg0: i32) -> (i32, i32) {
    %c0_i32 = arith.constant 0 : i32
    %c0_i32_0 = arith.constant 0 : i32
    %c0_i32_1 = arith.constant 0 : i32
    return %c0_i32, %c0_i32_0 : i32, i32
  }
  func.func @transform_3(%arg0: i32) -> (i32, i32) {
    %c0_i32 = arith.constant 0 : i32
    %c0_i32_0 = arith.constant 0 : i32
    %c0_i32_1 = arith.constant 0 : i32
    return %c0_i32, %c0_i32_0 : i32, i32
  }
  func.func @transform_4(%arg0: i32) -> (i32, i32) {
    %c0_i32 = arith.constant 0 : i32
    %c0_i32_0 = arith.constant 0 : i32
    %c0_i32_1 = arith.constant 0 : i32
    return %c0_i32, %c0_i32_0 : i32, i32
  }
  func.func @transform_5(%arg0: i32) -> (i32, i32) {
    %c0_i32 = arith.constant 0 : i32
    %c0_i32_0 = arith.constant 0 : i32
    %c0_i32_1 = arith.constant 0 : i32
    return %c0_i32, %c0_i32_0 : i32, i32
  }
  func.func @transform_6(%arg0: i32) -> (i32, i32) {
    %c0_i32 = arith.constant 0 : i32
    %c0_i32_0 = arith.constant 0 : i32
    %c0_i32_1 = arith.constant 0 : i32
    return %c0_i32, %c0_i32_0 : i32, i32
  }
  func.func @transform_7(%arg0: i32) -> (i32, i32) {
    %c0_i32 = arith.constant 0 : i32
    %c0_i32_0 = arith.constant 0 : i32
    return %arg0, %c0_i32 : i32, i32
  }
}

</mosaic_0001>

<llo_original>
// kernel: encoder_bert_forward.1
$region0: #{encoder_bert_forward.1}
  #allocation0 [shape = 'u32[]', space=smem, size = 0x4, offset = 0x4, fixed_abs, tag = 'smem constant byte address 0x4 - core index']
  #allocation1 [shape = 'u32[144,128]{1,0:T(1,128)}', space=vmem, size = 0x12000, scoped, tag = 'internal scratch']
  %s0 = inlined_call_operand.hbm [shape: f32[600,768], index: 0, kind: input, shape index: {}]
  %s1 = inlined_call_operand.vmem [shape: bf16[768,256], index: 1, kind: input, shape index: {}]
  %s2 = inlined_call_operand.hbm [shape: f32[1,256], index: 2, kind: input, shape index: {}]
  %s3 = inlined_call_operand.vmem [shape: bf16[256,128], index: 3, kind: input, shape index: {}]
  %s4 = inlined_call_operand.hbm [shape: f32[1,128], index: 4, kind: input, shape index: {}]
  %s5 = inlined_call_operand.vmem [shape: bf16[128,128], index: 5, kind: input, shape index: {}]
  %s6 = inlined_call_operand.vmem [shape: f32[1,128], index: 6, kind: input, shape index: {}]
  %s7 = inlined_call_operand.vmem [shape: f32[600,128], index: 7, kind: output, shape index: {}]
  %s8 = sld [smem:[#allocation0]]
  $region84: #{encoder_bert_forward.1} parent=0
    _
  %s10 = ssub.s32 1, %s8
  %s11 = scalar_select 0, %s10, %s8
  $region1: #{encoder_bert_forward.1} parent=0
    #allocation2 [shape = 'u8[2359296]{0}', space=vmem, size = 0x240000, scoped, tag = 'input window, operand 0, single buffered']
    #allocation3 [shape = 's32[1]{0}', space=sflag, size = 0x4, scoped, tag = 'scoped memory for encoder_bert_forward.1']
    #allocation4 [shape = 'u8[1024]{0}', space=vmem, size = 0x400, scoped, tag = 'input window, operand 2, single buffered']
    #allocation5 [shape = 's32[1]{0}', space=sflag, size = 0x4, scoped, tag = 'scoped memory for encoder_bert_forward.1']
    #allocation6 [shape = 'u8[512]{0}', space=vmem, size = 0x400, scoped, tag = 'input window, operand 4, single buffered']
    #allocation7 [shape = 'u8[393216]{0}', space=vmem, size = 0x60000, scoped, tag = 'output window, operand 0, single buffered']
    %12 = vsyncpa [#allocation3], 0
    %13 = vsyncpa [#allocation5], 0
    // Predicated region
    $region2: #{encoder_bert_forward.1} parent=1 // pred_check
      _
    $region3: #{encoder_bert_forward.1} parent=1 // pred_check_branch
      %15 = sbr.rel (0) target = $region5
    $region4: #{encoder_bert_forward.1} parent=1 // pred_region
      %s17 = ssub.s32 73728, 57600
      %18 = vsyncadd [#allocation3], %s17
      %s19 = sshll.u32 [#allocation2], 4
      %s20 = int_to_ptr.vmem [resolvable:$true] %s19
      %25 = dma.hbm_to_vmem [thread:$0]  %s0, 57600, %s20, [#allocation3], 768, 768, 48
    $region5: #{encoder_bert_forward.1} parent=1 // pred_fallthru
      _
    // Predicated region
    $region6: #{encoder_bert_forward.1} parent=1 // pred_check
      _
    $region7: #{encoder_bert_forward.1} parent=1 // pred_check_branch
      %27 = sbr.rel (0) target = $region9
    $region8: #{encoder_bert_forward.1} parent=1 // pred_region
      _
    $region9: #{encoder_bert_forward.1} parent=1 // pred_fallthru
      _
    // Predicated region
    $region10: #{encoder_bert_forward.1} parent=1 // pred_check
      _
    $region11: #{encoder_bert_forward.1} parent=1 // pred_check_branch
      %29 = sbr.rel (0) target = $region13
    $region12: #{encoder_bert_forward.1} parent=1 // pred_region
      %s31 = ssub.s32 32, 32
      %32 = vsyncadd [#allocation5], %s31
      %s34 = sshll.u32 [#allocation4], 4
      %s35 = int_to_ptr.vmem [resolvable:$true] %s34
      %37 = dma.hbm_to_vmem [thread:$0]  %s2, 32, %s35, [#allocation5]
    $region13: #{encoder_bert_forward.1} parent=1 // pred_fallthru
      _
    // Predicated region
    $region14: #{encoder_bert_forward.1} parent=1 // pred_check
      _
    $region15: #{encoder_bert_forward.1} parent=1 // pred_check_branch
      %39 = sbr.rel (0) target = $region17
    $region16: #{encoder_bert_forward.1} parent=1 // pred_region
      _
    $region17: #{encoder_bert_forward.1} parent=1 // pred_fallthru
      _
    // Predicated region
    $region18: #{encoder_bert_forward.1} parent=1 // pred_check
      _
    $region19: #{encoder_bert_forward.1} parent=1 // pred_check_branch
      %41 = sbr.rel (0) target = $region21
    $region20: #{encoder_bert_forward.1} parent=1 // pred_region
      %s43 = ssub.s32 16, 16
      %44 = vsyncadd [#allocation5], %s43
      %s46 = sshll.u32 [#allocation6], 4
      %s47 = int_to_ptr.vmem [resolvable:$true] %s46
      %49 = dma.hbm_to_vmem [thread:$0]  %s4, 16, %s47, [#allocation5]
    $region21: #{encoder_bert_forward.1} parent=1 // pred_fallthru
      _
    // Predicated region
    $region22: #{encoder_bert_forward.1} parent=1 // pred_check
      _
    $region23: #{encoder_bert_forward.1} parent=1 // pred_check_branch
      %51 = sbr.rel (0) target = $region25
    $region24: #{encoder_bert_forward.1} parent=1 // pred_region
      _
    $region25: #{encoder_bert_forward.1} parent=1 // pred_fallthru
      _
    // Predicated region
    $region26: #{encoder_bert_forward.1} parent=1 // pred_check
      _
    $region27: #{encoder_bert_forward.1} parent=1 // pred_check_branch
      %53 = sbr.rel (0) target = $region29
    $region28: #{encoder_bert_forward.1} parent=1 // pred_region
      _
    $region29: #{encoder_bert_forward.1} parent=1 // pred_fallthru
      _
    // Predicated region
    $region30: #{encoder_bert_forward.1} parent=1 // pred_check
      _
    $region31: #{encoder_bert_forward.1} parent=1 // pred_check_branch
      %55 = sbr.rel (0) target = $region33
    $region32: #{encoder_bert_forward.1} parent=1 // pred_region
      %56 = dma.done [#allocation3], 73728
    $region33: #{encoder_bert_forward.1} parent=1 // pred_fallthru
      _
    // Predicated region
    $region34: #{encoder_bert_forward.1} parent=1 // pred_check
      _
    $region35: #{encoder_bert_forward.1} parent=1 // pred_check_branch
      %58 = sbr.rel (0) target = $region37
    $region36: #{encoder_bert_forward.1} parent=1 // pred_region
      %59 = dma.done [#allocation5], 32
    $region37: #{encoder_bert_forward.1} parent=1 // pred_fallthru
      _
    // Predicated region
    $region38: #{encoder_bert_forward.1} parent=1 // pred_check
      _
    $region39: #{encoder_bert_forward.1} parent=1 // pred_check_branch
      %61 = sbr.rel (0) target = $region41
    $region40: #{encoder_bert_forward.1} parent=1 // pred_region
      %62 = dma.done [#allocation5], 16
    $region41: #{encoder_bert_forward.1} parent=1 // pred_fallthru
      _
    %v64 = vld [vmem:[#allocation2] sm:$0xff]
    %v65 = vld [vmem:[#allocation2 + $0x8] sm:$0xff]
    %v66 = vld [vmem:[#allocation2 + $0x10] sm:$0xff]
    %v67 = vld [vmem:[#allocation2 + $0x18] sm:$0xff]
    %v68 = vld [vmem:[#allocation2 + $0x20] sm:$0xff]
    %v69 = vld [vmem:[#allocation2 + $0x28] sm:$0xff]
    %v70 = vld [vmem:[#allocation2 + $0x30] sm:$0xff]
    %v71 = vld [vmem:[#allocation2 + $0x38] sm:$0xff]
    %v72 = vld [vmem:[#allocation2 + $0x40] sm:$0xff]
    %v73 = vld [vmem:[#allocation2 + $0x48] sm:$0xff]
    %v74 = vld [vmem:[#allocation2 + $0x50] sm:$0xff]
    %v75 = vld [vmem:[#allocation2 + $0x58] sm:$0xff]
    %v76 = vld [vmem:[#allocation2 + $0x60] sm:$0xff]
    %v77 = vld [vmem:[#allocation2 + $0x68] sm:$0xff]
    %v78 = vld [vmem:[#allocation2 + $0x70] sm:$0xff]
    %v79 = vld [vmem:[#allocation2 + $0x78] sm:$0xff]
    %v80 = vld [vmem:[#allocation2 + $0x80] sm:$0xff]
    %v81 = vld [vmem:[#allocation2 + $0x88] sm:$0xff]
    %v82 = vld [vmem:[#allocation2 + $0x90] sm:$0xff]
    %v83 = vld [vmem:[#allocation2 + $0x98] sm:$0xff]
    %v84 = vld [vmem:[#allocation2 + $0xa0] sm:$0xff]
    %v85 = vld [vmem:[#allocation2 + $0xa8] sm:$0xff]
    %v86 = vld [vmem:[#allocation2 + $0xb0] sm:$0xff]
    %v87 = vld [vmem:[#allocation2 + $0xb8] sm:$0xff]
    %v88 = vld [vmem:[#allocation2 + $0xc0] sm:$0xff]
    %v89 = vld [vmem:[#allocation2 + $0xc8] sm:$0xff]
    %v90 = vld [vmem:[#allocation2 + $0xd0] sm:$0xff]
    %v91 = vld [vmem:[#allocation2 + $0xd8] sm:$0xff]
    %v92 = vld [vmem:[#allocation2 + $0xe0] sm:$0xff]
    %v93 = vld [vmem:[#allocation2 + $0xe8] sm:$0xff]
    %v94 = vld [vmem:[#allocation2 + $0xf0] sm:$0xff]
    %v95 = vld [vmem:[#allocation2 + $0xf8] sm:$0xff]
    %v96 = vld [vmem:[#allocation2 + $0x100] sm:$0xff]
    %v97 = vld [vmem:[#allocation2 + $0x108] sm:$0xff]
    %v98 = vld [vmem:[#allocation2 + $0x110] sm:$0xff]
    %v99 = vld [vmem:[#allocation2 + $0x118] sm:$0xff]
    %v100 = vld [vmem:[#allocation2 + $0x120] sm:$0xff]
    %v101 = vld [vmem:[#allocation2 + $0x128] sm:$0xff]
    %v102 = vld [vmem:[#allocation2 + $0x130] sm:$0xff]
    %v103 = vld [vmem:[#allocation2 + $0x138] sm:$0xff]
    %v104 = vld [vmem:[#allocation2 + $0x140] sm:$0xff]
    %v105 = vld [vmem:[#allocation2 + $0x148] sm:$0xff]
    %v106 = vld [vmem:[#allocation2 + $0x150] sm:$0xff]
    %v107 = vld [vmem:[#allocation2 + $0x158] sm:$0xff]
    %v108 = vld [vmem:[#allocation2 + $0x160] sm:$0xff]
    %v109 = vld [vmem:[#allocation2 + $0x168] sm:$0xff]
    %v110 = vld [vmem:[#allocation2 + $0x170] sm:$0xff]
    %v111 = vld [vmem:[#allocation2 + $0x178] sm:$0xff]
    %v112 = vld [vmem:[#allocation2 + $0x180] sm:$0xff]
    %v113 = vld [vmem:[#allocation2 + $0x188] sm:$0xff]
    %v114 = vld [vmem:[#allocation2 + $0x190] sm:$0xff]
    %v115 = vld [vmem:[#allocation2 + $0x198] sm:$0xff]
    %v116 = vld [vmem:[#allocation2 + $0x1a0] sm:$0xff]
    %v117 = vld [vmem:[#allocation2 + $0x1a8] sm:$0xff]
    %v118 = vld [vmem:[#allocation2 + $0x1b0] sm:$0xff]
    %v119 = vld [vmem:[#allocation2 + $0x1b8] sm:$0xff]
    %v120 = vld [vmem:[#allocation2 + $0x1c0] sm:$0xff]
    %v121 = vld [vmem:[#allocation2 + $0x1c8] sm:$0xff]
    %v122 = vld [vmem:[#allocation2 + $0x1d0] sm:$0xff]
    %v123 = vld [vmem:[#allocation2 + $0x1d8] sm:$0xff]
    %v124 = vld [vmem:[#allocation2 + $0x1e0] sm:$0xff]
    %v125 = vld [vmem:[#allocation2 + $0x1e8] sm:$0xff]
    %v126 = vld [vmem:[#allocation2 + $0x1f0] sm:$0xff]
    %v127 = vld [vmem:[#allocation2 + $0x1f8] sm:$0xff]
    %v128 = vld [vmem:[#allocation2 + $0x200] sm:$0xff]
    %v129 = vld [vmem:[#allocation2 + $0x208] sm:$0xff]
    %v130 = vld [vmem:[#allocation2 + $0x210] sm:$0xff]
    %v131 = vld [vmem:[#allocation2 + $0x218] sm:$0xff]
    %v132 = vld [vmem:[#allocation2 + $0x220] sm:$0xff]
    %v133 = vld [vmem:[#allocation2 + $0x228] sm:$0xff]
    %v134 = vld [vmem:[#allocation2 + $0x230] sm:$0xff]
    %v135 = vld [vmem:[#allocation2 + $0x238] sm:$0xff]
    %v136 = vld [vmem:[#allocation2 + $0x240] sm:$0xff]
    %v137 = vld [vmem:[#allocation2 + $0x248] sm:$0xff]
    %v138 = vld [vmem:[#allocation2 + $0x250] sm:$0xff]
    %v139 = vld [vmem:[#allocation2 + $0x258] sm:$0xff]
    %v140 = vld [vmem:[#allocation2 + $0x260] sm:$0xff]
    %v141 = vld [vmem:[#allocation2 + $0x268] sm:$0xff]
    %v142 = vld [vmem:[#allocation2 + $0x270] sm:$0xff]
    %v143 = vld [vmem:[#allocation2 + $0x278] sm:$0xff]
    %v144 = vld [vmem:[#allocation2 + $0x280] sm:$0xff]
    %v145 = vld [vmem:[#allocation2 + $0x288] sm:$0xff]
    %v146 = vld [vmem:[#allocation2 + $0x290] sm:$0xff]
    %v147 = vld [vmem:[#allocation2 + $0x298] sm:$0xff]
    %v148 = vld [vmem:[#allocation2 + $0x2a0] sm:$0xff]
    %v149 = vld [vmem:[#allocation2 + $0x2a8] sm:$0xff]
    %v150 = vld [vmem:[#allocation2 + $0x2b0] sm:$0xff]
    %v151 = vld [vmem:[#allocation2 + $0x2b8] sm:$0xff]
    %v152 = vld [vmem:[#allocation2 + $0x2c0] sm:$0xff]
    %v153 = vld [vmem:[#allocation2 + $0x2c8] sm:$0xff]
    %v154 = vld [vmem:[#allocation2 + $0x2d0] sm:$0xff]
    %v155 = vld [vmem:[#allocation2 + $0x2d8] sm:$0xff]
    %v156 = vld [vmem:[#allocation2 + $0x2e0] sm:$0xff]
    %v157 = vld [vmem:[#allocation2 + $0x2e8] sm:$0xff]
    %v158 = vld [vmem:[#allocation2 + $0x2f0] sm:$0xff]
    %v159 = vld [vmem:[#allocation2 + $0x2f8] sm:$0xff]
    %v160 = vld [vmem:[#allocation2 + $0x300] sm:$0xff]
    %v161 = vld [vmem:[#allocation2 + $0x308] sm:$0xff]
    %v162 = vld [vmem:[#allocation2 + $0x310] sm:$0xff]
    %v163 = vld [vmem:[#allocation2 + $0x318] sm:$0xff]
    %v164 = vld [vmem:[#allocation2 + $0x320] sm:$0xff]
    %v165 = vld [vmem:[#allocation2 + $0x328] sm:$0xff]
    %v166 = vld [vmem:[#allocation2 + $0x330] sm:$0xff]
    %v167 = vld [vmem:[#allocation2 + $0x338] sm:$0xff]
    %v168 = vld [vmem:[#allocation2 + $0x340] sm:$0xff]
    %v169 = vld [vmem:[#allocation2 + $0x348] sm:$0xff]
    %v170 = vld [vmem:[#allocation2 + $0x350] sm:$0xff]
    %v171 = vld [vmem:[#allocation2 + $0x358] sm:$0xff]
    %v172 = vld [vmem:[#allocation2 + $0x360] sm:$0xff]
    %v173 = vld [vmem:[#allocation2 + $0x368] sm:$0xff]
    %v174 = vld [vmem:[#allocation2 + $0x370] sm:$0xff]
    %v175 = vld [vmem:[#allocation2 + $0x378] sm:$0xff]
    %v176 = vld [vmem:[#allocation2 + $0x380] sm:$0xff]
    %v177 = vld [vmem:[#allocation2 + $0x388] sm:$0xff]
    %v178 = vld [vmem:[#allocation2 + $0x390] sm:$0xff]
    %v179 = vld [vmem:[#allocation2 + $0x398] sm:$0xff]
    %v180 = vld [vmem:[#allocation2 + $0x3a0] sm:$0xff]
    %v181 = vld [vmem:[#allocation2 + $0x3a8] sm:$0xff]
    %v182 = vld [vmem:[#allocation2 + $0x3b0] sm:$0xff]
    %v183 = vld [vmem:[#allocation2 + $0x3b8] sm:$0xff]
    %v184 = vld [vmem:[#allocation2 + $0x3c0] sm:$0xff]
    %v185 = vld [vmem:[#allocation2 + $0x3c8] sm:$0xff]
    %v186 = vld [vmem:[#allocation2 + $0x3d0] sm:$0xff]
    %v187 = vld [vmem:[#allocation2 + $0x3d8] sm:$0xff]
    %v188 = vld [vmem:[#allocation2 + $0x3e0] sm:$0xff]
    %v189 = vld [vmem:[#allocation2 + $0x3e8] sm:$0xff]
    %v190 = vld [vmem:[#allocation2 + $0x3f0] sm:$0xff]
    %v191 = vld [vmem:[#allocation2 + $0x3f8] sm:$0xff]
    %v192 = vld [vmem:[#allocation2 + $0x400] sm:$0xff]
    %v193 = vld [vmem:[#allocation2 + $0x408] sm:$0xff]
    %v194 = vld [vmem:[#allocation2 + $0x410] sm:$0xff]
    %v195 = vld [vmem:[#allocation2 + $0x418] sm:$0xff]
    %v196 = vld [vmem:[#allocation2 + $0x420] sm:$0xff]
    %v197 = vld [vmem:[#allocation2 + $0x428] sm:$0xff]
    %v198 = vld [vmem:[#allocation2 + $0x430] sm:$0xff]
    %v199 = vld [vmem:[#allocation2 + $0x438] sm:$0xff]
    %v200 = vld [vmem:[#allocation2 + $0x440] sm:$0xff]
    %v201 = vld [vmem:[#allocation2 + $0x448] sm:$0xff]
    %v202 = vld [vmem:[#allocation2 + $0x450] sm:$0xff]
    %v203 = vld [vmem:[#allocation2 + $0x458] sm:$0xff]
    %v204 = vld [vmem:[#allocation2 + $0x460] sm:$0xff]
    %v205 = vld [vmem:[#allocation2 + $0x468] sm:$0xff]
    %v206 = vld [vmem:[#allocation2 + $0x470] sm:$0xff]
    %v207 = vld [vmem:[#allocation2 + $0x478] sm:$0xff]
    %v208 = vld [vmem:[#allocation2 + $0x480] sm:$0xff]
    %v209 = vld [vmem:[#allocation2 + $0x488] sm:$0xff]
    %v210 = vld [vmem:[#allocation2 + $0x490] sm:$0xff]
    %v211 = vld [vmem:[#allocation2 + $0x498] sm:$0xff]
    %v212 = vld [vmem:[#allocation2 + $0x4a0] sm:$0xff]
    %v213 = vld [vmem:[#allocation2 + $0x4a8] sm:$0xff]
    %v214 = vld [vmem:[#allocation2 + $0x4b0] sm:$0xff]
    %v215 = vld [vmem:[#allocation2 + $0x4b8] sm:$0xff]
    %v216 = vld [vmem:[#allocation2 + $0x4c0] sm:$0xff]
    %v217 = vld [vmem:[#allocation2 + $0x4c8] sm:$0xff]
    %v218 = vld [vmem:[#allocation2 + $0x4d0] sm:$0xff]
    %v219 = vld [vmem:[#allocation2 + $0x4d8] sm:$0xff]
    %v220 = vld [vmem:[#allocation2 + $0x4e0] sm:$0xff]
    %v221 = vld [vmem:[#allocation2 + $0x4e8] sm:$0xff]
    %v222 = vld [vmem:[#allocation2 + $0x4f0] sm:$0xff]
    %v223 = vld [vmem:[#allocation2 + $0x4f8] sm:$0xff]
    %v224 = vld [vmem:[#allocation2 + $0x500] sm:$0xff]
    %v225 = vld [vmem:[#allocation2 + $0x508] sm:$0xff]
    %v226 = vld [vmem:[#allocation2 + $0x510] sm:$0xff]
    %v227 = vld [vmem:[#allocation2 + $0x518] sm:$0xff]
    %v228 = vld [vmem:[#allocation2 + $0x520] sm:$0xff]
    %v229 = vld [vmem:[#allocation2 + $0x528] sm:$0xff]
    %v230 = vld [vmem:[#allocation2 + $0x530] sm:$0xff]
    %v231 = vld [vmem:[#allocation2 + $0x538] sm:$0xff]
    %v232 = vld [vmem:[#allocation2 + $0x540] sm:$0xff]
    %v233 = vld [vmem:[#allocation2 + $0x548] sm:$0xff]
    %v234 = vld [vmem:[#allocation2 + $0x550] sm:$0xff]
    %v235 = vld [vmem:[#allocation2 + $0x558] sm:$0xff]
    %v236 = vld [vmem:[#allocation2 + $0x560] sm:$0xff]
    %v237 = vld [vmem:[#allocation2 + $0x568] sm:$0xff]
    %v238 = vld [vmem:[#allocation2 + $0x570] sm:$0xff]
    %v239 = vld [vmem:[#allocation2 + $0x578] sm:$0xff]
    %v240 = vld [vmem:[#allocation2 + $0x580] sm:$0xff]
    %v241 = vld [vmem:[#allocation2 + $0x588] sm:$0xff]
    %v242 = vld [vmem:[#allocation2 + $0x590] sm:$0xff]
    %v243 = vld [vmem:[#allocation2 + $0x598] sm:$0xff]
    %v244 = vld [vmem:[#allocation2 + $0x5a0] sm:$0xff]
    %v245 = vld [vmem:[#allocation2 + $0x5a8] sm:$0xff]
    %v246 = vld [vmem:[#allocation2 + $0x5b0] sm:$0xff]
    %v247 = vld [vmem:[#allocation2 + $0x5b8] sm:$0xff]
    %v248 = vld [vmem:[#allocation2 + $0x5c0] sm:$0xff]
    %v249 = vld [vmem:[#allocation2 + $0x5c8] sm:$0xff]
    %v250 = vld [vmem:[#allocation2 + $0x5d0] sm:$0xff]
    %v251 = vld [vmem:[#allocation2 + $0x5d8] sm:$0xff]
    %v252 = vld [vmem:[#allocation2 + $0x5e0] sm:$0xff]
    %v253 = vld [vmem:[#allocation2 + $0x5e8] sm:$0xff]
    %v254 = vld [vmem:[#allocation2 + $0x5f0] sm:$0xff]
    %v255 = vld [vmem:[#allocation2 + $0x5f8] sm:$0xff]
    %v256 = vld [vmem:[#allocation2 + $0x600] sm:$0xff]
    %v257 = vld [vmem:[#allocation2 + $0x608] sm:$0xff]
    %v258 = vld [vmem:[#allocation2 + $0x610] sm:$0xff]
    %v259 = vld [vmem:[#allocation2 + $0x618] sm:$0xff]
    %v260 = vld [vmem:[#allocation2 + $0x620] sm:$0xff]
    %v261 = vld [vmem:[#allocation2 + $0x628] sm:$0xff]
    %v262 = vld [vmem:[#allocation2 + $0x630] sm:$0xff]
    %v263 = vld [vmem:[#allocation2 + $0x638] sm:$0xff]
    %v264 = vld [vmem:[#allocation2 + $0x640] sm:$0xff]
    %v265 = vld [vmem:[#allocation2 + $0x648] sm:$0xff]
    %v266 = vld [vmem:[#allocation2 + $0x650] sm:$0xff]
    %v267 = vld [vmem:[#allocation2 + $0x658] sm:$0xff]
    %v268 = vld [vmem:[#allocation2 + $0x660] sm:$0xff]
    %v269 = vld [vmem:[#allocation2 + $0x668] sm:$0xff]
    %v270 = vld [vmem:[#allocation2 + $0x670] sm:$0xff]
    %v271 = vld [vmem:[#allocation2 + $0x678] sm:$0xff]
    %v272 = vld [vmem:[#allocation2 + $0x680] sm:$0xff]
    %v273 = vld [vmem:[#allocation2 + $0x688] sm:$0xff]
    %v274 = vld [vmem:[#allocation2 + $0x690] sm:$0xff]
    %v275 = vld [vmem:[#allocation2 + $0x698] sm:$0xff]
    %v276 = vld [vmem:[#allocation2 + $0x6a0] sm:$0xff]
    %v277 = vld [vmem:[#allocation2 + $0x6a8] sm:$0xff]
    %v278 = vld [vmem:[#allocation2 + $0x6b0] sm:$0xff]
    %v279 = vld [vmem:[#allocation2 + $0x6b8] sm:$0xff]
    %v280 = vld [vmem:[#allocation2 + $0x6c0] sm:$0xff]
    %v281 = vld [vmem:[#allocation2 + $0x6c8] sm:$0xff]
    %v282 = vld [vmem:[#allocation2 + $0x6d0] sm:$0xff]
    %v283 = vld [vmem:[#allocation2 + $0x6d8] sm:$0xff]
    %v284 = vld [vmem:[#allocation2 + $0x6e0] sm:$0xff]
    %v285 = vld [vmem:[#allocation2 + $0x6e8] sm:$0xff]
    %v286 = vld [vmem:[#allocation2 + $0x6f0] sm:$0xff]
    %v287 = vld [vmem:[#allocation2 + $0x6f8] sm:$0xff]
    %v288 = vld [vmem:[#allocation2 + $0x700] sm:$0xff]
    %v289 = vld [vmem:[#allocation2 + $0x708] sm:$0xff]
    %v290 = vld [vmem:[#allocation2 + $0x710] sm:$0xff]
    %v291 = vld [vmem:[#allocation2 + $0x718] sm:$0xff]
    %v292 = vld [vmem:[#allocation2 + $0x720] sm:$0xff]
    %v293 = vld [vmem:[#allocation2 + $0x728] sm:$0xff]
    %v294 = vld [vmem:[#allocation2 + $0x730] sm:$0xff]
    %v295 = vld [vmem:[#allocation2 + $0x738] sm:$0xff]
    %v296 = vld [vmem:[#allocation2 + $0x740] sm:$0xff]
    %v297 = vld [vmem:[#allocation2 + $0x748] sm:$0xff]
    %v298 = vld [vmem:[#allocation2 + $0x750] sm:$0xff]
    %v299 = vld [vmem:[#allocation2 + $0x758] sm:$0xff]
    %v300 = vld [vmem:[#allocation2 + $0x760] sm:$0xff]
    %v301 = vld [vmem:[#allocation2 + $0x768] sm:$0xff]
    %v302 = vld [vmem:[#allocation2 + $0x770] sm:$0xff]
    %v303 = vld [vmem:[#allocation2 + $0x778] sm:$0xff]
    %v304 = vld [vmem:[#allocation2 + $0x780] sm:$0xff]
    %v305 = vld [vmem:[#allocation2 + $0x788] sm:$0xff]
    %v306 = vld [vmem:[#allocation2 + $0x790] sm:$0xff]
    %v307 = vld [vmem:[#allocation2 + $0x798] sm:$0xff]
    %v308 = vld [vmem:[#allocation2 + $0x7a0] sm:$0xff]
    %v309 = vld [vmem:[#allocation2 + $0x7a8] sm:$0xff]
    %v310 = vld [vmem:[#allocation2 + $0x7b0] sm:$0xff]
    %v311 = vld [vmem:[#allocation2 + $0x7b8] sm:$0xff]
    %v312 = vld [vmem:[#allocation2 + $0x7c0] sm:$0xff]
    %v313 = vld [vmem:[#allocation2 + $0x7c8] sm:$0xff]
    %v314 = vld [vmem:[#allocation2 + $0x7d0] sm:$0xff]
    %v315 = vld [vmem:[#allocation2 + $0x7d8] sm:$0xff]
    %v316 = vld [vmem:[#allocation2 + $0x7e0] sm:$0xff]
    %v317 = vld [vmem:[#allocation2 + $0x7e8] sm:$0xff]
    %v318 = vld [vmem:[#allocation2 + $0x7f0] sm:$0xff]
    %v319 = vld [vmem:[#allocation2 + $0x7f8] sm:$0xff]
    %v320 = vld [vmem:[#allocation2 + $0x800] sm:$0xff]
    %v321 = vld [vmem:[#allocation2 + $0x808] sm:$0xff]
    %v322 = vld [vmem:[#allocation2 + $0x810] sm:$0xff]
    %v323 = vld [vmem:[#allocation2 + $0x818] sm:$0xff]
    %v324 = vld [vmem:[#allocation2 + $0x820] sm:$0xff]
    %v325 = vld [vmem:[#allocation2 + $0x828] sm:$0xff]
    %v326 = vld [vmem:[#allocation2 + $0x830] sm:$0xff]
    %v327 = vld [vmem:[#allocation2 + $0x838] sm:$0xff]
    %v328 = vld [vmem:[#allocation2 + $0x840] sm:$0xff]
    %v329 = vld [vmem:[#allocation2 + $0x848] sm:$0xff]
    %v330 = vld [vmem:[#allocation2 + $0x850] sm:$0xff]
    %v331 = vld [vmem:[#allocation2 + $0x858] sm:$0xff]
    %v332 = vld [vmem:[#allocation2 + $0x860] sm:$0xff]
    %v333 = vld [vmem:[#allocation2 + $0x868] sm:$0xff]
    %v334 = vld [vmem:[#allocation2 + $0x870] sm:$0xff]
    %v335 = vld [vmem:[#allocation2 + $0x878] sm:$0xff]
    %v336 = vld [vmem:[#allocation2 + $0x880] sm:$0xff]
    %v337 = vld [vmem:[#allocation2 + $0x888] sm:$0xff]
    %v338 = vld [vmem:[#allocation2 + $0x890] sm:$0xff]
    %v339 = vld [vmem:[#allocation2 + $0x898] sm:$0xff]
    %v340 = vld [vmem:[#allocation2 + $0x8a0] sm:$0xff]
    %v341 = vld [vmem:[#allocation2 + $0x8a8] sm:$0xff]
    %v342 = vld [vmem:[#allocation2 + $0x8b0] sm:$0xff]
    %v343 = vld [vmem:[#allocation2 + $0x8b8] sm:$0xff]
    %v344 = vld [vmem:[#allocation2 + $0x8c0] sm:$0xff]
    %v345 = vld [vmem:[#allocation2 + $0x8c8] sm:$0xff]
    %v346 = vld [vmem:[#allocation2 + $0x8d0] sm:$0xff]
    %v347 = vld [vmem:[#allocation2 + $0x8d8] sm:$0xff]
    %v348 = vld [vmem:[#allocation2 + $0x8e0] sm:$0xff]
    %v349 = vld [vmem:[#allocation2 + $0x8e8] sm:$0xff]
    %v350 = vld [vmem:[#allocation2 + $0x8f0] sm:$0xff]
    %v351 = vld [vmem:[#allocation2 + $0x8f8] sm:$0xff]
    %v352 = vld [vmem:[#allocation2 + $0x900] sm:$0xff]
    %v353 = vld [vmem:[#allocation2 + $0x908] sm:$0xff]
    %v354 = vld [vmem:[#allocation2 + $0x910] sm:$0xff]
    %v355 = vld [vmem:[#allocation2 + $0x918] sm:$0xff]
    %v356 = vld [vmem:[#allocation2 + $0x920] sm:$0xff]
    %v357 = vld [vmem:[#allocation2 + $0x928] sm:$0xff]
    %v358 = vld [vmem:[#allocation2 + $0x930] sm:$0xff]
    %v359 = vld [vmem:[#allocation2 + $0x938] sm:$0xff]
    %v360 = vld [vmem:[#allocation2 + $0x940] sm:$0xff]
    %v361 = vld [vmem:[#allocation2 + $0x948] sm:$0xff]
    %v362 = vld [vmem:[#allocation2 + $0x950] sm:$0xff]
    %v363 = vld [vmem:[#allocation2 + $0x958] sm:$0xff]
    %v364 = vld [vmem:[#allocation2 + $0x960] sm:$0xff]
    %v365 = vld [vmem:[#allocation2 + $0x968] sm:$0xff]
    %v366 = vld [vmem:[#allocation2 + $0x970] sm:$0xff]
    %v367 = vld [vmem:[#allocation2 + $0x978] sm:$0xff]
    %v368 = vld [vmem:[#allocation2 + $0x980] sm:$0xff]
    %v369 = vld [vmem:[#allocation2 + $0x988] sm:$0xff]
    %v370 = vld [vmem:[#allocation2 + $0x990] sm:$0xff]
    %v371 = vld [vmem:[#allocation2 + $0x998] sm:$0xff]
    %v372 = vld [vmem:[#allocation2 + $0x9a0] sm:$0xff]
    %v373 = vld [vmem:[#allocation2 + $0x9a8] sm:$0xff]
    %v374 = vld [vmem:[#allocation2 + $0x9b0] sm:$0xff]
    %v375 = vld [vmem:[#allocation2 + $0x9b8] sm:$0xff]
    %v376 = vld [vmem:[#allocation2 + $0x9c0] sm:$0xff]
    %v377 = vld [vmem:[#allocation2 + $0x9c8] sm:$0xff]
    %v378 = vld [vmem:[#allocation2 + $0x9d0] sm:$0xff]
    %v379 = vld [vmem:[#allocation2 + $0x9d8] sm:$0xff]
    %v380 = vld [vmem:[#allocation2 + $0x9e0] sm:$0xff]
    %v381 = vld [vmem:[#allocation2 + $0x9e8] sm:$0xff]
    %v382 = vld [vmem:[#allocation2 + $0x9f0] sm:$0xff]
    %v383 = vld [vmem:[#allocation2 + $0x9f8] sm:$0xff]
    %v384 = vld [vmem:[#allocation2 + $0xa00] sm:$0xff]
    %v385 = vld [vmem:[#allocation2 + $0xa08] sm:$0xff]
    %v386 = vld [vmem:[#allocation2 + $0xa10] sm:$0xff]
    %v387 = vld [vmem:[#allocation2 + $0xa18] sm:$0xff]
    %v388 = vld [vmem:[#allocation2 + $0xa20] sm:$0xff]
    %v389 = vld [vmem:[#allocation2 + $0xa28] sm:$0xff]
    %v390 = vld [vmem:[#allocation2 + $0xa30] sm:$0xff]
    %v391 = vld [vmem:[#allocation2 + $0xa38] sm:$0xff]
    %v392 = vld [vmem:[#allocation2 + $0xa40] sm:$0xff]
    %v393 = vld [vmem:[#allocation2 + $0xa48] sm:$0xff]
    %v394 = vld [vmem:[#allocation2 + $0xa50] sm:$0xff]
    %v395 = vld [vmem:[#allocation2 + $0xa58] sm:$0xff]
    %v396 = vld [vmem:[#allocation2 + $0xa60] sm:$0xff]
    %v397 = vld [vmem:[#allocation2 + $0xa68] sm:$0xff]
    %v398 = vld [vmem:[#allocation2 + $0xa70] sm:$0xff]
    %v399 = vld [vmem:[#allocation2 + $0xa78] sm:$0xff]
    %v400 = vld [vmem:[#allocation2 + $0xa80] sm:$0xff]
    %v401 = vld [vmem:[#allocation2 + $0xa88] sm:$0xff]
    %v402 = vld [vmem:[#allocation2 + $0xa90] sm:$0xff]
    %v403 = vld [vmem:[#allocation2 + $0xa98] sm:$0xff]
    %v404 = vld [vmem:[#allocation2 + $0xaa0] sm:$0xff]
    %v405 = vld [vmem:[#allocation2 + $0xaa8] sm:$0xff]
    %v406 = vld [vmem:[#allocation2 + $0xab0] sm:$0xff]
    %v407 = vld [vmem:[#allocation2 + $0xab8] sm:$0xff]
    %v408 = vld [vmem:[#allocation2 + $0xac0] sm:$0xff]
    %v409 = vld [vmem:[#allocation2 + $0xac8] sm:$0xff]
    %v410 = vld [vmem:[#allocation2 + $0xad0] sm:$0xff]
    %v411 = vld [vmem:[#allocation2 + $0xad8] sm:$0xff]
    %v412 = vld [vmem:[#allocation2 + $0xae0] sm:$0xff]
    %v413 = vld [vmem:[#allocation2 + $0xae8] sm:$0xff]
    %v414 = vld [vmem:[#allocation2 + $0xaf0] sm:$0xff]
    %v415 = vld [vmem:[#allocation2 + $0xaf8] sm:$0xff]
    %v416 = vld [vmem:[#allocation2 + $0xb00] sm:$0xff]
    %v417 = vld [vmem:[#allocation2 + $0xb08] sm:$0xff]
    %v418 = vld [vmem:[#allocation2 + $0xb10] sm:$0xff]
    %v419 = vld [vmem:[#allocation2 + $0xb18] sm:$0xff]
    %v420 = vld [vmem:[#allocation2 + $0xb20] sm:$0xff]
    %v421 = vld [vmem:[#allocation2 + $0xb28] sm:$0xff]
    %v422 = vld [vmem:[#allocation2 + $0xb30] sm:$0xff]
    %v423 = vld [vmem:[#allocation2 + $0xb38] sm:$0xff]
    %v424 = vld [vmem:[#allocation2 + $0xb40] sm:$0xff]
    %v425 = vld [vmem:[#allocation2 + $0xb48] sm:$0xff]
    %v426 = vld [vmem:[#allocation2 + $0xb50] sm:$0xff]
    %v427 = vld [vmem:[#allocation2 + $0xb58] sm:$0xff]
    %v428 = vld [vmem:[#allocation2 + $0xb60] sm:$0xff]
    %v429 = vld [vmem:[#allocation2 + $0xb68] sm:$0xff]
    %v430 = vld [vmem:[#allocation2 + $0xb70] sm:$0xff]
    %v431 = vld [vmem:[#allocation2 + $0xb78] sm:$0xff]
    %v432 = vld [vmem:[#allocation2 + $0xb80] sm:$0xff]
    %v433 = vld [vmem:[#allocation2 + $0xb88] sm:$0xff]
    %v434 = vld [vmem:[#allocation2 + $0xb90] sm:$0xff]
    %v435 = vld [vmem:[#allocation2 + $0xb98] sm:$0xff]
    %v436 = vld [vmem:[#allocation2 + $0xba0] sm:$0xff]
    %v437 = vld [vmem:[#allocation2 + $0xba8] sm:$0xff]
    %v438 = vld [vmem:[#allocation2 + $0xbb0] sm:$0xff]
    %v439 = vld [vmem:[#allocation2 + $0xbb8] sm:$0xff]
    %v440 = vld [vmem:[#allocation2 + $0xbc0] sm:$0xff]
    %v441 = vld [vmem:[#allocation2 + $0xbc8] sm:$0xff]
    %v442 = vld [vmem:[#allocation2 + $0xbd0] sm:$0xff]
    %v443 = vld [vmem:[#allocation2 + $0xbd8] sm:$0xff]
    %v444 = vld [vmem:[#allocation2 + $0xbe0] sm:$0xff]
    %v445 = vld [vmem:[#allocation2 + $0xbe8] sm:$0xff]
    %v446 = vld [vmem:[#allocation2 + $0xbf0] sm:$0xff]
    %v447 = vld [vmem:[#allocation2 + $0xbf8] sm:$0xff]
    %v448 = vld [vmem:[#allocation2 + $0xc00] sm:$0xff]
    %v449 = vld [vmem:[#allocation2 + $0xc08] sm:$0xff]
    %v450 = vld [vmem:[#allocation2 + $0xc10] sm:$0xff]
    %v451 = vld [vmem:[#allocation2 + $0xc18] sm:$0xff]
    %v452 = vld [vmem:[#allocation2 + $0xc20] sm:$0xff]
    %v453 = vld [vmem:[#allocation2 + $0xc28] sm:$0xff]
    %v454 = vld [vmem:[#allocation2 + $0xc30] sm:$0xff]
    %v455 = vld [vmem:[#allocation2 + $0xc38] sm:$0xff]
    %v456 = vld [vmem:[#allocation2 + $0xc40] sm:$0xff]
    %v457 = vld [vmem:[#allocation2 + $0xc48] sm:$0xff]
    %v458 = vld [vmem:[#allocation2 + $0xc50] sm:$0xff]
    %v459 = vld [vmem:[#allocation2 + $0xc58] sm:$0xff]
    %v460 = vld [vmem:[#allocation2 + $0xc60] sm:$0xff]
    %v461 = vld [vmem:[#allocation2 + $0xc68] sm:$0xff]
    %v462 = vld [vmem:[#allocation2 + $0xc70] sm:$0xff]
    %v463 = vld [vmem:[#allocation2 + $0xc78] sm:$0xff]
    %v464 = vld [vmem:[#allocation2 + $0xc80] sm:$0xff]
    %v465 = vld [vmem:[#allocation2 + $0xc88] sm:$0xff]
    %v466 = vld [vmem:[#allocation2 + $0xc90] sm:$0xff]
    %v467 = vld [vmem:[#allocation2 + $0xc98] sm:$0xff]
    %v468 = vld [vmem:[#allocation2 + $0xca0] sm:$0xff]
    %v469 = vld [vmem:[#allocation2 + $0xca8] sm:$0xff]
    %v470 = vld [vmem:[#allocation2 + $0xcb0] sm:$0xff]
    %v471 = vld [vmem:[#allocation2 + $0xcb8] sm:$0xff]
    %v472 = vld [vmem:[#allocation2 + $0xcc0] sm:$0xff]
    %v473 = vld [vmem:[#allocation2 + $0xcc8] sm:$0xff]
    %v474 = vld [vmem:[#allocation2 + $0xcd0] sm:$0xff]
    %v475 = vld [vmem:[#allocation2 + $0xcd8] sm:$0xff]
    %v476 = vld [vmem:[#allocation2 + $0xce0] sm:$0xff]
    %v477 = vld [vmem:[#allocation2 + $0xce8] sm:$0xff]
    %v478 = vld [vmem:[#allocation2 + $0xcf0] sm:$0xff]
    %v479 = vld [vmem:[#allocation2 + $0xcf8] sm:$0xff]
    %v480 = vld [vmem:[#allocation2 + $0xd00] sm:$0xff]
    %v481 = vld [vmem:[#allocation2 + $0xd08] sm:$0xff]
    %v482 = vld [vmem:[#allocation2 + $0xd10] sm:$0xff]
    %v483 = vld [vmem:[#allocation2 + $0xd18] sm:$0xff]
    %v484 = vld [vmem:[#allocation2 + $0xd20] sm:$0xff]
    %v485 = vld [vmem:[#allocation2 + $0xd28] sm:$0xff]
    %v486 = vld [vmem:[#allocation2 + $0xd30] sm:$0xff]
    %v487 = vld [vmem:[#allocation2 + $0xd38] sm:$0xff]
    %v488 = vld [vmem:[#allocation2 + $0xd40] sm:$0xff]
    %v489 = vld [vmem:[#allocation2 + $0xd48] sm:$0xff]
    %v490 = vld [vmem:[#allocation2 + $0xd50] sm:$0xff]
    %v491 = vld [vmem:[#allocation2 + $0xd58] sm:$0xff]
    %v492 = vld [vmem:[#allocation2 + $0xd60] sm:$0xff]
    %v493 = vld [vmem:[#allocation2 + $0xd68] sm:$0xff]
    %v494 = vld [vmem:[#allocation2 + $0xd70] sm:$0xff]
    %v495 = vld [vmem:[#allocation2 + $0xd78] sm:$0xff]
    %v496 = vld [vmem:[#allocation2 + $0xd80] sm:$0xff]
    %v497 = vld [vmem:[#allocation2 + $0xd88] sm:$0xff]
    %v498 = vld [vmem:[#allocation2 + $0xd90] sm:$0xff]
    %v499 = vld [vmem:[#allocation2 + $0xd98] sm:$0xff]
    %v500 = vld [vmem:[#allocation2 + $0xda0] sm:$0xff]
    %v501 = vld [vmem:[#allocation2 + $0xda8] sm:$0xff]
    %v502 = vld [vmem:[#allocation2 + $0xdb0] sm:$0xff]
    %v503 = vld [vmem:[#allocation2 + $0xdb8] sm:$0xff]
    %v504 = vld [vmem:[#allocation2 + $0xdc0] sm:$0xff]
    %v505 = vld [vmem:[#allocation2 + $0xdc8] sm:$0xff]
    %v506 = vld [vmem:[#allocation2 + $0xdd0] sm:$0xff]
    %v507 = vld [vmem:[#allocation2 + $0xdd8] sm:$0xff]
    %v508 = vld [vmem:[#allocation2 + $0xde0] sm:$0xff]
    %v509 = vld [vmem:[#allocation2 + $0xde8] sm:$0xff]
    %v510 = vld [vmem:[#allocation2 + $0xdf0] sm:$0xff]
    %v511 = vld [vmem:[#allocation2 + $0xdf8] sm:$0xff]
    %v512 = vld [vmem:[#allocation2 + $0xe00] sm:$0xff]
    %v513 = vld [vmem:[#allocation2 + $0xe08] sm:$0xff]
    %v514 = vld [vmem:[#allocation2 + $0xe10] sm:$0xff]
    %v515 = vld [vmem:[#allocation2 + $0xe18] sm:$0xff]
    %v516 = vld [vmem:[#allocation2 + $0xe20] sm:$0xff]
    %v517 = vld [vmem:[#allocation2 + $0xe28] sm:$0xff]
    %v518 = vld [vmem:[#allocation2 + $0xe30] sm:$0xff]
    %v519 = vld [vmem:[#allocation2 + $0xe38] sm:$0xff]
    %v520 = vld [vmem:[#allocation2 + $0xe40] sm:$0xff]
    %v521 = vld [vmem:[#allocation2 + $0xe48] sm:$0xff]
    %v522 = vld [vmem:[#allocation2 + $0xe50] sm:$0xff]
    %v523 = vld [vmem:[#allocation2 + $0xe58] sm:$0xff]
    %v524 = vld [vmem:[#allocation2 + $0xe60] sm:$0xff]
    %v525 = vld [vmem:[#allocation2 + $0xe68] sm:$0xff]
    %v526 = vld [vmem:[#allocation2 + $0xe70] sm:$0xff]
    %v527 = vld [vmem:[#allocation2 + $0xe78] sm:$0xff]
    %v528 = vld [vmem:[#allocation2 + $0xe80] sm:$0xff]
    %v529 = vld [vmem:[#allocation2 + $0xe88] sm:$0xff]
    %v530 = vld [vmem:[#allocation2 + $0xe90] sm:$0xff]
    %v531 = vld [vmem:[#allocation2 + $0xe98] sm:$0xff]
    %v532 = vld [vmem:[#allocation2 + $0xea0] sm:$0xff]
    %v533 = vld [vmem:[#allocation2 + $0xea8] sm:$0xff]
    %v534 = vld [vmem:[#allocation2 + $0xeb0] sm:$0xff]
    %v535 = vld [vmem:[#allocation2 + $0xeb8] sm:$0xff]
    %v536 = vld [vmem:[#allocation2 + $0xec0] sm:$0xff]
    %v537 = vld [vmem:[#allocation2 + $0xec8] sm:$0xff]
    %v538 = vld [vmem:[#allocation2 + $0xed0] sm:$0xff]
    %v539 = vld [vmem:[#allocation2 + $0xed8] sm:$0xff]
    %v540 = vld [vmem:[#allocation2 + $0xee0] sm:$0xff]
    %v541 = vld [vmem:[#allocation2 + $0xee8] sm:$0xff]
    %v542 = vld [vmem:[#allocation2 + $0xef0] sm:$0xff]
    %v543 = vld [vmem:[#allocation2 + $0xef8] sm:$0xff]
    %v544 = vld [vmem:[#allocation2 + $0xf00] sm:$0xff]
    %v545 = vld [vmem:[#allocation2 + $0xf08] sm:$0xff]
    %v546 = vld [vmem:[#allocation2 + $0xf10] sm:$0xff]
    %v547 = vld [vmem:[#allocation2 + $0xf18] sm:$0xff]
    %v548 = vld [vmem:[#allocation2 + $0xf20] sm:$0xff]
    %v549 = vld [vmem:[#allocation2 + $0xf28] sm:$0xff]
    %v550 = vld [vmem:[#allocation2 + $0xf30] sm:$0xff]
    %v551 = vld [vmem:[#allocation2 + $0xf38] sm:$0xff]
    %v552 = vld [vmem:[#allocation2 + $0xf40] sm:$0xff]
    %v553 = vld [vmem:[#allocation2 + $0xf48] sm:$0xff]
    %v554 = vld [vmem:[#allocation2 + $0xf50] sm:$0xff]
    %v555 = vld [vmem:[#allocation2 + $0xf58] sm:$0xff]
    %v556 = vld [vmem:[#allocation2 + $0xf60] sm:$0xff]
    %v557 = vld [vmem:[#allocation2 + $0xf68] sm:$0xff]
    %v558 = vld [vmem:[#allocation2 + $0xf70] sm:$0xff]
    %v559 = vld [vmem:[#allocation2 + $0xf78] sm:$0xff]
    %v560 = vld [vmem:[#allocation2 + $0xf80] sm:$0xff]
    %v561 = vld [vmem:[#allocation2 + $0xf88] sm:$0xff]
    %v562 = vld [vmem:[#allocation2 + $0xf90] sm:$0xff]
    %v563 = vld [vmem:[#allocation2 + $0xf98] sm:$0xff]
    %v564 = vld [vmem:[#allocation2 + $0xfa0] sm:$0xff]
    %v565 = vld [vmem:[#allocation2 + $0xfa8] sm:$0xff]
    %v566 = vld [vmem:[#allocation2 + $0xfb0] sm:$0xff]
    %v567 = vld [vmem:[#allocation2 + $0xfb8] sm:$0xff]
    %v568 = vld [vmem:[#allocation2 + $0xfc0] sm:$0xff]
    %v569 = vld [vmem:[#allocation2 + $0xfc8] sm:$0xff]
    %v570 = vld [vmem:[#allocation2 + $0xfd0] sm:$0xff]
    %v571 = vld [vmem:[#allocation2 + $0xfd8] sm:$0xff]
    %v572 = vld [vmem:[#allocation2 + $0xfe0] sm:$0xff]
    %v573 = vld [vmem:[#allocation2 + $0xfe8] sm:$0xff]
    %v574 = vld [vmem:[#allocation2 + $0xff0] sm:$0xff]
    %v575 = vld [vmem:[#allocation2 + $0xff8] sm:$0xff]
    %v576 = vld [vmem:[#allocation2 + $0x1000] sm:$0xff]
    %v577 = vld [vmem:[#allocation2 + $0x1008] sm:$0xff]
    %v578 = vld [vmem:[#allocation2 + $0x1010] sm:$0xff]
    %v579 = vld [vmem:[#allocation2 + $0x1018] sm:$0xff]
    %v580 = vld [vmem:[#allocation2 + $0x1020] sm:$0xff]
    %v581 = vld [vmem:[#allocation2 + $0x1028] sm:$0xff]
    %v582 = vld [vmem:[#allocation2 + $0x1030] sm:$0xff]
    %v583 = vld [vmem:[#allocation2 + $0x1038] sm:$0xff]
    %v584 = vld [vmem:[#allocation2 + $0x1040] sm:$0xff]
    %v585 = vld [vmem:[#allocation2 + $0x1048] sm:$0xff]
    %v586 = vld [vmem:[#allocation2 + $0x1050] sm:$0xff]
    %v587 = vld [vmem:[#allocation2 + $0x1058] sm:$0xff]
    %v588 = vld [vmem:[#allocation2 + $0x1060] sm:$0xff]
    %v589 = vld [vmem:[#allocation2 + $0x1068] sm:$0xff]
    %v590 = vld [vmem:[#allocation2 + $0x1070] sm:$0xff]
    %v591 = vld [vmem:[#allocation2 + $0x1078] sm:$0xff]
    %v592 = vld [vmem:[#allocation2 + $0x1080] sm:$0xff]
    %v593 = vld [vmem:[#allocation2 + $0x1088] sm:$0xff]
    %v594 = vld [vmem:[#allocation2 + $0x1090] sm:$0xff]
    %v595 = vld [vmem:[#allocation2 + $0x1098] sm:$0xff]
    %v596 = vld [vmem:[#allocation2 + $0x10a0] sm:$0xff]
    %v597 = vld [vmem:[#allocation2 + $0x10a8] sm:$0xff]
    %v598 = vld [vmem:[#allocation2 + $0x10b0] sm:$0xff]
    %v599 = vld [vmem:[#allocation2 + $0x10b8] sm:$0xff]
    %v600 = vld [vmem:[#allocation2 + $0x10c0] sm:$0xff]
    %v601 = vld [vmem:[#allocation2 + $0x10c8] sm:$0xff]
    %v602 = vld [vmem:[#allocation2 + $0x10d0] sm:$0xff]
    %v603 = vld [vmem:[#allocation2 + $0x10d8] sm:$0xff]
    %v604 = vld [vmem:[#allocation2 + $0x10e0] sm:$0xff]
    %v605 = vld [vmem:[#allocation2 + $0x10e8] sm:$0xff]
    %v606 = vld [vmem:[#allocation2 + $0x10f0] sm:$0xff]
    %v607 = vld [vmem:[#allocation2 + $0x10f8] sm:$0xff]
    %v608 = vld [vmem:[#allocation2 + $0x1100] sm:$0xff]
    %v609 = vld [vmem:[#allocation2 + $0x1108] sm:$0xff]
    %v610 = vld [vmem:[#allocation2 + $0x1110] sm:$0xff]
    %v611 = vld [vmem:[#allocation2 + $0x1118] sm:$0xff]
    %v612 = vld [vmem:[#allocation2 + $0x1120] sm:$0xff]
    %v613 = vld [vmem:[#allocation2 + $0x1128] sm:$0xff]
    %v614 = vld [vmem:[#allocation2 + $0x1130] sm:$0xff]
    %v615 = vld [vmem:[#allocation2 + $0x1138] sm:$0xff]
    %v616 = vld [vmem:[#allocation2 + $0x1140] sm:$0xff]
    %v617 = vld [vmem:[#allocation2 + $0x1148] sm:$0xff]
    %v618 = vld [vmem:[#allocation2 + $0x1150] sm:$0xff]
    %v619 = vld [vmem:[#allocation2 + $0x1158] sm:$0xff]
    %v620 = vld [vmem:[#allocation2 + $0x1160] sm:$0xff]
    %v621 = vld [vmem:[#allocation2 + $0x1168] sm:$0xff]
    %v622 = vld [vmem:[#allocation2 + $0x1170] sm:$0xff]
    %v623 = vld [vmem:[#allocation2 + $0x1178] sm:$0xff]
    %v624 = vld [vmem:[#allocation2 + $0x1180] sm:$0xff]
    %v625 = vld [vmem:[#allocation2 + $0x1188] sm:$0xff]
    %v626 = vld [vmem:[#allocation2 + $0x1190] sm:$0xff]
    %v627 = vld [vmem:[#allocation2 + $0x1198] sm:$0xff]
    %v628 = vld [vmem:[#allocation2 + $0x11a0] sm:$0xff]
    %v629 = vld [vmem:[#allocation2 + $0x11a8] sm:$0xff]
    %v630 = vld [vmem:[#allocation2 + $0x11b0] sm:$0xff]
    %v631 = vld [vmem:[#allocation2 + $0x11b8] sm:$0xff]
    %v632 = vld [vmem:[#allocation2 + $0x11c0] sm:$0xff]
    %v633 = vld [vmem:[#allocation2 + $0x11c8] sm:$0xff]
    %v634 = vld [vmem:[#allocation2 + $0x11d0] sm:$0xff]
    %v635 = vld [vmem:[#allocation2 + $0x11d8] sm:$0xff]
    %v636 = vld [vmem:[#allocation2 + $0x11e0] sm:$0xff]
    %v637 = vld [vmem:[#allocation2 + $0x11e8] sm:$0xff]
    %v638 = vld [vmem:[#allocation2 + $0x11f0] sm:$0xff]
    %v639 = vld [vmem:[#allocation2 + $0x11f8] sm:$0xff]
    %v640 = vpack.c.bf16 %v70, %v64
    %v641 = vpack.c.bf16 %v71, %v65
    %v642 = vpack.c.bf16 %v72, %v66
    %v643 = vpack.c.bf16 %v73, %v67
    %v644 = vpack.c.bf16 %v74, %v68
    %v645 = vpack.c.bf16 %v75, %v69
    %v646 = vpack.c.bf16 %v82, %v76
    %v647 = vpack.c.bf16 %v83, %v77
    %v648 = vpack.c.bf16 %v84, %v78
    %v649 = vpack.c.bf16 %v85, %v79
    %v650 = vpack.c.bf16 %v86, %v80
    %v651 = vpack.c.bf16 %v87, %v81
    %v652 = vpack.c.bf16 %v94, %v88
    %v653 = vpack.c.bf16 %v95, %v89
    %v654 = vpack.c.bf16 %v96, %v90
    %v655 = vpack.c.bf16 %v97, %v91
    %v656 = vpack.c.bf16 %v98, %v92
    %v657 = vpack.c.bf16 %v99, %v93
    %v658 = vpack.c.bf16 %v106, %v100
    %v659 = vpack.c.bf16 %v107, %v101
    %v660 = vpack.c.bf16 %v108, %v102
    %v661 = vpack.c.bf16 %v109, %v103
    %v662 = vpack.c.bf16 %v110, %v104
    %v663 = vpack.c.bf16 %v111, %v105
    %v664 = vpack.c.bf16 %v118, %v112
    %v665 = vpack.c.bf16 %v119, %v113
    %v666 = vpack.c.bf16 %v120, %v114
    %v667 = vpack.c.bf16 %v121, %v115
    %v668 = vpack.c.bf16 %v122, %v116
    %v669 = vpack.c.bf16 %v123, %v117
    %v670 = vpack.c.bf16 %v130, %v124
    %v671 = vpack.c.bf16 %v131, %v125
    %v672 = vpack.c.bf16 %v132, %v126
    %v673 = vpack.c.bf16 %v133, %v127
    %v674 = vpack.c.bf16 %v134, %v128
    %v675 = vpack.c.bf16 %v135, %v129
    %v676 = vpack.c.bf16 %v142, %v136
    %v677 = vpack.c.bf16 %v143, %v137
    %v678 = vpack.c.bf16 %v144, %v138
    %v679 = vpack.c.bf16 %v145, %v139
    %v680 = vpack.c.bf16 %v146, %v140
    %v681 = vpack.c.bf16 %v147, %v141
    %v682 = vpack.c.bf16 %v154, %v148
    %v683 = vpack.c.bf16 %v155, %v149
    %v684 = vpack.c.bf16 %v156, %v150
    %v685 = vpack.c.bf16 %v157, %v151
    %v686 = vpack.c.bf16 %v158, %v152
    %v687 = vpack.c.bf16 %v159, %v153
    %v688 = vpack.c.bf16 %v166, %v160
    %v689 = vpack.c.bf16 %v167, %v161
    %v690 = vpack.c.bf16 %v168, %v162
    %v691 = vpack.c.bf16 %v169, %v163
    %v692 = vpack.c.bf16 %v170, %v164
    %v693 = vpack.c.bf16 %v171, %v165
    %v694 = vpack.c.bf16 %v178, %v172
    %v695 = vpack.c.bf16 %v179, %v173
    %v696 = vpack.c.bf16 %v180, %v174
    %v697 = vpack.c.bf16 %v181, %v175
    %v698 = vpack.c.bf16 %v182, %v176
    %v699 = vpack.c.bf16 %v183, %v177
    %v700 = vpack.c.bf16 %v190, %v184
    %v701 = vpack.c.bf16 %v191, %v185
    %v702 = vpack.c.bf16 %v192, %v186
    %v703 = vpack.c.bf16 %v193, %v187
    %v704 = vpack.c.bf16 %v194, %v188
    %v705 = vpack.c.bf16 %v195, %v189
    %v706 = vpack.c.bf16 %v202, %v196
    %v707 = vpack.c.bf16 %v203, %v197
    %v708 = vpack.c.bf16 %v204, %v198
    %v709 = vpack.c.bf16 %v205, %v199
    %v710 = vpack.c.bf16 %v206, %v200
    %v711 = vpack.c.bf16 %v207, %v201
    %v712 = vpack.c.bf16 %v214, %v208
    %v713 = vpack.c.bf16 %v215, %v209
    %v714 = vpack.c.bf16 %v216, %v210
    %v715 = vpack.c.bf16 %v217, %v211
    %v716 = vpack.c.bf16 %v218, %v212
    %v717 = vpack.c.bf16 %v219, %v213
    %v718 = vpack.c.bf16 %v226, %v220
    %v719 = vpack.c.bf16 %v227, %v221
    %v720 = vpack.c.bf16 %v228, %v222
    %v721 = vpack.c.bf16 %v229, %v223
    %v722 = vpack.c.bf16 %v230, %v224
    %v723 = vpack.c.bf16 %v231, %v225
    %v724 = vpack.c.bf16 %v238, %v232
    %v725 = vpack.c.bf16 %v239, %v233
    %v726 = vpack.c.bf16 %v240, %v234
    %v727 = vpack.c.bf16 %v241, %v235
    %v728 = vpack.c.bf16 %v242, %v236
    %v729 = vpack.c.bf16 %v243, %v237
    %v730 = vpack.c.bf16 %v250, %v244
    %v731 = vpack.c.bf16 %v251, %v245
    %v732 = vpack.c.bf16 %v252, %v246
    %v733 = vpack.c.bf16 %v253, %v247
    %v734 = vpack.c.bf16 %v254, %v248
    %v735 = vpack.c.bf16 %v255, %v249
    %v736 = vpack.c.bf16 %v262, %v256
    %v737 = vpack.c.bf16 %v263, %v257
    %v738 = vpack.c.bf16 %v264, %v258
    %v739 = vpack.c.bf16 %v265, %v259
    %v740 = vpack.c.bf16 %v266, %v260
    %v741 = vpack.c.bf16 %v267, %v261
    %v742 = vpack.c.bf16 %v274, %v268
    %v743 = vpack.c.bf16 %v275, %v269
    %v744 = vpack.c.bf16 %v276, %v270
    %v745 = vpack.c.bf16 %v277, %v271
    %v746 = vpack.c.bf16 %v278, %v272
    %v747 = vpack.c.bf16 %v279, %v273
    %v748 = vpack.c.bf16 %v286, %v280
    %v749 = vpack.c.bf16 %v287, %v281
    %v750 = vpack.c.bf16 %v288, %v282
    %v751 = vpack.c.bf16 %v289, %v283
    %v752 = vpack.c.bf16 %v290, %v284
    %v753 = vpack.c.bf16 %v291, %v285
    %v754 = vpack.c.bf16 %v298, %v292
    %v755 = vpack.c.bf16 %v299, %v293
    %v756 = vpack.c.bf16 %v300, %v294
    %v757 = vpack.c.bf16 %v301, %v295
    %v758 = vpack.c.bf16 %v302, %v296
    %v759 = vpack.c.bf16 %v303, %v297
    %v760 = vpack.c.bf16 %v310, %v304
    %v761 = vpack.c.bf16 %v311, %v305
    %v762 = vpack.c.bf16 %v312, %v306
    %v763 = vpack.c.bf16 %v313, %v307
    %v764 = vpack.c.bf16 %v314, %v308
    %v765 = vpack.c.bf16 %v315, %v309
    %v766 = vpack.c.bf16 %v322, %v316
    %v767 = vpack.c.bf16 %v323, %v317
    %v768 = vpack.c.bf16 %v324, %v318
    %v769 = vpack.c.bf16 %v325, %v319
    %v770 = vpack.c.bf16 %v326, %v320
    %v771 = vpack.c.bf16 %v327, %v321
    %v772 = vpack.c.bf16 %v334, %v328
    %v773 = vpack.c.bf16 %v335, %v329
    %v774 = vpack.c.bf16 %v336, %v330
    %v775 = vpack.c.bf16 %v337, %v331
    %v776 = vpack.c.bf16 %v338, %v332
    %v777 = vpack.c.bf16 %v339, %v333
    %v778 = vpack.c.bf16 %v346, %v340
    %v779 = vpack.c.bf16 %v347, %v341
    %v780 = vpack.c.bf16 %v348, %v342
    %v781 = vpack.c.bf16 %v349, %v343
    %v782 = vpack.c.bf16 %v350, %v344
    %v783 = vpack.c.bf16 %v351, %v345
    %v784 = vpack.c.bf16 %v358, %v352
    %v785 = vpack.c.bf16 %v359, %v353
    %v786 = vpack.c.bf16 %v360, %v354
    %v787 = vpack.c.bf16 %v361, %v355
    %v788 = vpack.c.bf16 %v362, %v356
    %v789 = vpack.c.bf16 %v363, %v357
    %v790 = vpack.c.bf16 %v370, %v364
    %v791 = vpack.c.bf16 %v371, %v365
    %v792 = vpack.c.bf16 %v372, %v366
    %v793 = vpack.c.bf16 %v373, %v367
    %v794 = vpack.c.bf16 %v374, %v368
    %v795 = vpack.c.bf16 %v375, %v369
    %v796 = vpack.c.bf16 %v382, %v376
    %v797 = vpack.c.bf16 %v383, %v377
    %v798 = vpack.c.bf16 %v384, %v378
    %v799 = vpack.c.bf16 %v385, %v379
    %v800 = vpack.c.bf16 %v386, %v380
    %v801 = vpack.c.bf16 %v387, %v381
    %v802 = vpack.c.bf16 %v394, %v388
    %v803 = vpack.c.bf16 %v395, %v389
    %v804 = vpack.c.bf16 %v396, %v390
    %v805 = vpack.c.bf16 %v397, %v391
    %v806 = vpack.c.bf16 %v398, %v392
    %v807 = vpack.c.bf16 %v399, %v393
    %v808 = vpack.c.bf16 %v406, %v400
    %v809 = vpack.c.bf16 %v407, %v401
    %v810 = vpack.c.bf16 %v408, %v402
    %v811 = vpack.c.bf16 %v409, %v403
    %v812 = vpack.c.bf16 %v410, %v404
    %v813 = vpack.c.bf16 %v411, %v405
    %v814 = vpack.c.bf16 %v418, %v412
    %v815 = vpack.c.bf16 %v419, %v413
    %v816 = vpack.c.bf16 %v420, %v414
    %v817 = vpack.c.bf16 %v421, %v415
    %v818 = vpack.c.bf16 %v422, %v416
    %v819 = vpack.c.bf16 %v423, %v417
    %v820 = vpack.c.bf16 %v430, %v424
    %v821 = vpack.c.bf16 %v431, %v425
    %v822 = vpack.c.bf16 %v432, %v426
    %v823 = vpack.c.bf16 %v433, %v427
    %v824 = vpack.c.bf16 %v434, %v428
    %v825 = vpack.c.bf16 %v435, %v429
    %v826 = vpack.c.bf16 %v442, %v436
    %v827 = vpack.c.bf16 %v443, %v437
    %v828 = vpack.c.bf16 %v444, %v438
    %v829 = vpack.c.bf16 %v445, %v439
    %v830 = vpack.c.bf16 %v446, %v440
    %v831 = vpack.c.bf16 %v447, %v441
    %v832 = vpack.c.bf16 %v454, %v448
    %v833 = vpack.c.bf16 %v455, %v449
    %v834 = vpack.c.bf16 %v456, %v450
    %v835 = vpack.c.bf16 %v457, %v451
    %v836 = vpack.c.bf16 %v458, %v452
    %v837 = vpack.c.bf16 %v459, %v453
    %v838 = vpack.c.bf16 %v466, %v460
    %v839 = vpack.c.bf16 %v467, %v461
    %v840 = vpack.c.bf16 %v468, %v462
    %v841 = vpack.c.bf16 %v469, %v463
    %v842 = vpack.c.bf16 %v470, %v464
    %v843 = vpack.c.bf16 %v471, %v465
    %v844 = vpack.c.bf16 %v478, %v472
    %v845 = vpack.c.bf16 %v479, %v473
    %v846 = vpack.c.bf16 %v480, %v474
    %v847 = vpack.c.bf16 %v481, %v475
    %v848 = vpack.c.bf16 %v482, %v476
    %v849 = vpack.c.bf16 %v483, %v477
    %v850 = vpack.c.bf16 %v490, %v484
    %v851 = vpack.c.bf16 %v491, %v485
    %v852 = vpack.c.bf16 %v492, %v486
    %v853 = vpack.c.bf16 %v493, %v487
    %v854 = vpack.c.bf16 %v494, %v488
    %v855 = vpack.c.bf16 %v495, %v489
    %v856 = vpack.c.bf16 %v502, %v496
    %v857 = vpack.c.bf16 %v503, %v497
    %v858 = vpack.c.bf16 %v504, %v498
    %v859 = vpack.c.bf16 %v505, %v499
    %v860 = vpack.c.bf16 %v506, %v500
    %v861 = vpack.c.bf16 %v507, %v501
    %v862 = vpack.c.bf16 %v514, %v508
    %v863 = vpack.c.bf16 %v515, %v509
    %v864 = vpack.c.bf16 %v516, %v510
    %v865 = vpack.c.bf16 %v517, %v511
    %v866 = vpack.c.bf16 %v518, %v512
    %v867 = vpack.c.bf16 %v519, %v513
    %v868 = vpack.c.bf16 %v526, %v520
    %v869 = vpack.c.bf16 %v527, %v521
    %v870 = vpack.c.bf16 %v528, %v522
    %v871 = vpack.c.bf16 %v529, %v523
    %v872 = vpack.c.bf16 %v530, %v524
    %v873 = vpack.c.bf16 %v531, %v525
    %v874 = vpack.c.bf16 %v538, %v532
    %v875 = vpack.c.bf16 %v539, %v533
    %v876 = vpack.c.bf16 %v540, %v534
    %v877 = vpack.c.bf16 %v541, %v535
    %v878 = vpack.c.bf16 %v542, %v536
    %v879 = vpack.c.bf16 %v543, %v537
    %v880 = vpack.c.bf16 %v550, %v544
    %v881 = vpack.c.bf16 %v551, %v545
    %v882 = vpack.c.bf16 %v552, %v546
    %v883 = vpack.c.bf16 %v553, %v547
    %v884 = vpack.c.bf16 %v554, %v548
    %v885 = vpack.c.bf16 %v555, %v549
    %v886 = vpack.c.bf16 %v562, %v556
    %v887 = vpack.c.bf16 %v563, %v557
    %v888 = vpack.c.bf16 %v564, %v558
    %v889 = vpack.c.bf16 %v565, %v559
    %v890 = vpack.c.bf16 %v566, %v560
    %v891 = vpack.c.bf16 %v567, %v561
    %v892 = vpack.c.bf16 %v574, %v568
    %v893 = vpack.c.bf16 %v575, %v569
    %v894 = vpack.c.bf16 %v576, %v570
    %v895 = vpack.c.bf16 %v577, %v571
    %v896 = vpack.c.bf16 %v578, %v572
    %v897 = vpack.c.bf16 %v579, %v573
    %v898 = vpack.c.bf16 %v586, %v580
    %v899 = vpack.c.bf16 %v587, %v581
    %v900 = vpack.c.bf16 %v588, %v582
    %v901 = vpack.c.bf16 %v589, %v583
    %v902 = vpack.c.bf16 %v590, %v584
    %v903 = vpack.c.bf16 %v591, %v585
    %v904 = vpack.c.bf16 %v598, %v592
    %v905 = vpack.c.bf16 %v599, %v593
    %v906 = vpack.c.bf16 %v600, %v594
    %v907 = vpack.c.bf16 %v601, %v595
    %v908 = vpack.c.bf16 %v602, %v596
    %v909 = vpack.c.bf16 %v603, %v597
    %v910 = vpack.c.bf16 %v610, %v604
    %v911 = vpack.c.bf16 %v611, %v605
    %v912 = vpack.c.bf16 %v612, %v606
    %v913 = vpack.c.bf16 %v613, %v607
    %v914 = vpack.c.bf16 %v614, %v608
    %v915 = vpack.c.bf16 %v615, %v609
    %v916 = vpack.c.bf16 %v622, %v616
    %v917 = vpack.c.bf16 %v623, %v617
    %v918 = vpack.c.bf16 %v624, %v618
    %v919 = vpack.c.bf16 %v625, %v619
    %v920 = vpack.c.bf16 %v626, %v620
    %v921 = vpack.c.bf16 %v627, %v621
    %v922 = vpack.c.bf16 %v634, %v628
    %v923 = vpack.c.bf16 %v635, %v629
    %v924 = vpack.c.bf16 %v636, %v630
    %v925 = vpack.c.bf16 %v637, %v631
    %v926 = vpack.c.bf16 %v638, %v632
    %v927 = vpack.c.bf16 %v639, %v633
    %v928 = vld [vmem:[%s1] sm:$0xff]
    %v929 = vld [vmem:[%s1 + $0x8] sm:$0xff]
    %v930 = vld [vmem:[%s1 + $0x10] sm:$0xff]
    %v931 = vld [vmem:[%s1 + $0x18] sm:$0xff]
    %v932 = vld [vmem:[%s1 + $0x20] sm:$0xff]
    %v933 = vld [vmem:[%s1 + $0x28] sm:$0xff]
    %v934 = vld [vmem:[%s1 + $0x30] sm:$0xff]
    %v935 = vld [vmem:[%s1 + $0x38] sm:$0xff]
    %v936 = vld [vmem:[%s1 + $0x40] sm:$0xff]
    %v937 = vld [vmem:[%s1 + $0x48] sm:$0xff]
    %v938 = vld [vmem:[%s1 + $0x50] sm:$0xff]
    %v939 = vld [vmem:[%s1 + $0x58] sm:$0xff]
    %v940 = vld [vmem:[%s1 + $0x60] sm:$0xff]
    %v941 = vld [vmem:[%s1 + $0x68] sm:$0xff]
    %v942 = vld [vmem:[%s1 + $0x70] sm:$0xff]
    %v943 = vld [vmem:[%s1 + $0x78] sm:$0xff]
    %v944 = vld [vmem:[%s1 + $0x80] sm:$0xff]
    %v945 = vld [vmem:[%s1 + $0x88] sm:$0xff]
    %v946 = vld [vmem:[%s1 + $0x90] sm:$0xff]
    %v947 = vld [vmem:[%s1 + $0x98] sm:$0xff]
    %v948 = vld [vmem:[%s1 + $0xa0] sm:$0xff]
    %v949 = vld [vmem:[%s1 + $0xa8] sm:$0xff]
    %v950 = vld [vmem:[%s1 + $0xb0] sm:$0xff]
    %v951 = vld [vmem:[%s1 + $0xb8] sm:$0xff]
    %v952 = vld [vmem:[%s1 + $0xc0] sm:$0xff]
    %v953 = vld [vmem:[%s1 + $0xc8] sm:$0xff]
    %v954 = vld [vmem:[%s1 + $0xd0] sm:$0xff]
    %v955 = vld [vmem:[%s1 + $0xd8] sm:$0xff]
    %v956 = vld [vmem:[%s1 + $0xe0] sm:$0xff]
    %v957 = vld [vmem:[%s1 + $0xe8] sm:$0xff]
    %v958 = vld [vmem:[%s1 + $0xf0] sm:$0xff]
    %v959 = vld [vmem:[%s1 + $0xf8] sm:$0xff]
    %v960 = vld [vmem:[%s1 + $0x100] sm:$0xff]
    %v961 = vld [vmem:[%s1 + $0x108] sm:$0xff]
    %v962 = vld [vmem:[%s1 + $0x110] sm:$0xff]
    %v963 = vld [vmem:[%s1 + $0x118] sm:$0xff]
    %v964 = vld [vmem:[%s1 + $0x120] sm:$0xff]
    %v965 = vld [vmem:[%s1 + $0x128] sm:$0xff]
    %v966 = vld [vmem:[%s1 + $0x130] sm:$0xff]
    %v967 = vld [vmem:[%s1 + $0x138] sm:$0xff]
    %v968 = vld [vmem:[%s1 + $0x140] sm:$0xff]
    %v969 = vld [vmem:[%s1 + $0x148] sm:$0xff]
    %v970 = vld [vmem:[%s1 + $0x150] sm:$0xff]
    %v971 = vld [vmem:[%s1 + $0x158] sm:$0xff]
    %v972 = vld [vmem:[%s1 + $0x160] sm:$0xff]
    %v973 = vld [vmem:[%s1 + $0x168] sm:$0xff]
    %v974 = vld [vmem:[%s1 + $0x170] sm:$0xff]
    %v975 = vld [vmem:[%s1 + $0x178] sm:$0xff]
    %v976 = vld [vmem:[%s1 + $0x180] sm:$0xff]
    %v977 = vld [vmem:[%s1 + $0x188] sm:$0xff]
    %v978 = vld [vmem:[%s1 + $0x190] sm:$0xff]
    %v979 = vld [vmem:[%s1 + $0x198] sm:$0xff]
    %v980 = vld [vmem:[%s1 + $0x1a0] sm:$0xff]
    %v981 = vld [vmem:[%s1 + $0x1a8] sm:$0xff]
    %v982 = vld [vmem:[%s1 + $0x1b0] sm:$0xff]
    %v983 = vld [vmem:[%s1 + $0x1b8] sm:$0xff]
    %v984 = vld [vmem:[%s1 + $0x1c0] sm:$0xff]
    %v985 = vld [vmem:[%s1 + $0x1c8] sm:$0xff]
    %v986 = vld [vmem:[%s1 + $0x1d0] sm:$0xff]
    %v987 = vld [vmem:[%s1 + $0x1d8] sm:$0xff]
    %v988 = vld [vmem:[%s1 + $0x1e0] sm:$0xff]
    %v989 = vld [vmem:[%s1 + $0x1e8] sm:$0xff]
    %v990 = vld [vmem:[%s1 + $0x1f0] sm:$0xff]
    %v991 = vld [vmem:[%s1 + $0x1f8] sm:$0xff]
    %v992 = vld [vmem:[%s1 + $0x200] sm:$0xff]
    %v993 = vld [vmem:[%s1 + $0x208] sm:$0xff]
    %v994 = vld [vmem:[%s1 + $0x210] sm:$0xff]
    %v995 = vld [vmem:[%s1 + $0x218] sm:$0xff]
    %v996 = vld [vmem:[%s1 + $0x220] sm:$0xff]
    %v997 = vld [vmem:[%s1 + $0x228] sm:$0xff]
    %v998 = vld [vmem:[%s1 + $0x230] sm:$0xff]
    %v999 = vld [vmem:[%s1 + $0x238] sm:$0xff]
    %v1000 = vld [vmem:[%s1 + $0x240] sm:$0xff]
    %v1001 = vld [vmem:[%s1 + $0x248] sm:$0xff]
    %v1002 = vld [vmem:[%s1 + $0x250] sm:$0xff]
    %v1003 = vld [vmem:[%s1 + $0x258] sm:$0xff]
    %v1004 = vld [vmem:[%s1 + $0x260] sm:$0xff]
    %v1005 = vld [vmem:[%s1 + $0x268] sm:$0xff]
    %v1006 = vld [vmem:[%s1 + $0x270] sm:$0xff]
    %v1007 = vld [vmem:[%s1 + $0x278] sm:$0xff]
    %v1008 = vld [vmem:[%s1 + $0x280] sm:$0xff]
    %v1009 = vld [vmem:[%s1 + $0x288] sm:$0xff]
    %v1010 = vld [vmem:[%s1 + $0x290] sm:$0xff]
    %v1011 = vld [vmem:[%s1 + $0x298] sm:$0xff]
    %v1012 = vld [vmem:[%s1 + $0x2a0] sm:$0xff]
    %v1013 = vld [vmem:[%s1 + $0x2a8] sm:$0xff]
    %v1014 = vld [vmem:[%s1 + $0x2b0] sm:$0xff]
    %v1015 = vld [vmem:[%s1 + $0x2b8] sm:$0xff]
    %v1016 = vld [vmem:[%s1 + $0x2c0] sm:$0xff]
    %v1017 = vld [vmem:[%s1 + $0x2c8] sm:$0xff]
    %v1018 = vld [vmem:[%s1 + $0x2d0] sm:$0xff]
    %v1019 = vld [vmem:[%s1 + $0x2d8] sm:$0xff]
    %v1020 = vld [vmem:[%s1 + $0x2e0] sm:$0xff]
    %v1021 = vld [vmem:[%s1 + $0x2e8] sm:$0xff]
    %v1022 = vld [vmem:[%s1 + $0x2f0] sm:$0xff]
    %v1023 = vld [vmem:[%s1 + $0x2f8] sm:$0xff]
    %v1024 = vld [vmem:[#allocation4] sm:$0x3]
    %v1026 = vlaneseq
    %v1027 = vshrl.u32 %v1026, 7
    %v1028 = vsub.s32 0, %v1027
    %v1029 = vrot.slane %v1024, %v1028
    %v1030 = vlaneseq
    %v1031 = vshrl.u32 %v1030, 7
    %v1032 = vsub.s32 1, %v1031
    %v1033 = vrot.slane %v1024, %v1032
    %v1132 = vunpack.c.l.b16 %v928
    %v1133 = vunpack.c.h.b16 %v928
    %v1134 = vunpack.c.l.b16 %v929
    %v1135 = vunpack.c.h.b16 %v929
    %v1136 = vunpack.c.l.b16 %v930
    %v1137 = vunpack.c.h.b16 %v930
    %v1138 = vunpack.c.l.b16 %v931
    %v1139 = vunpack.c.h.b16 %v931
    %v1140 = vunpack.c.l.b16 %v932
    %v1141 = vunpack.c.h.b16 %v932
    %v1142 = vunpack.c.l.b16 %v933
    %v1143 = vunpack.c.h.b16 %v933
    %v1144 = vunpack.c.l.b16 %v934
    %v1145 = vunpack.c.h.b16 %v934
    %v1146 = vunpack.c.l.b16 %v935
    %v1147 = vunpack.c.h.b16 %v935
    %v1148 = vunpack.c.l.b16 %v936
    %v1149 = vunpack.c.h.b16 %v936
    %v1150 = vunpack.c.l.b16 %v937
    %v1151 = vunpack.c.h.b16 %v937
    %v1152 = vunpack.c.l.b16 %v938
    %v1153 = vunpack.c.h.b16 %v938
    %v1154 = vunpack.c.l.b16 %v939
    %v1155 = vunpack.c.h.b16 %v939
    %v1156 = vunpack.c.l.b16 %v940
    %v1157 = vunpack.c.h.b16 %v940
    %v1158 = vunpack.c.l.b16 %v941
    %v1159 = vunpack.c.h.b16 %v941
    %v1160 = vunpack.c.l.b16 %v942
    %v1161 = vunpack.c.h.b16 %v942
    %v1162 = vunpack.c.l.b16 %v943
    %v1163 = vunpack.c.h.b16 %v943
    %v1164 = vunpack.c.l.b16 %v944
    %v1165 = vunpack.c.h.b16 %v944
    %v1166 = vunpack.c.l.b16 %v945
    %v1167 = vunpack.c.h.b16 %v945
    %v1168 = vunpack.c.l.b16 %v946
    %v1169 = vunpack.c.h.b16 %v946
    %v1170 = vunpack.c.l.b16 %v947
    %v1171 = vunpack.c.h.b16 %v947
    %v1172 = vunpack.c.l.b16 %v948
    %v1173 = vunpack.c.h.b16 %v948
    %v1174 = vunpack.c.l.b16 %v949
    %v1175 = vunpack.c.h.b16 %v949
    %v1176 = vunpack.c.l.b16 %v950
    %v1177 = vunpack.c.h.b16 %v950
    %v1178 = vunpack.c.l.b16 %v951
    %v1179 = vunpack.c.h.b16 %v951
    %v1180 = vunpack.c.l.b16 %v952
    %v1181 = vunpack.c.h.b16 %v952
    %v1182 = vunpack.c.l.b16 %v953
    %v1183 = vunpack.c.h.b16 %v953
    %v1184 = vunpack.c.l.b16 %v954
    %v1185 = vunpack.c.h.b16 %v954
    %v1186 = vunpack.c.l.b16 %v955
    %v1187 = vunpack.c.h.b16 %v955
    %v1188 = vunpack.c.l.b16 %v956
    %v1189 = vunpack.c.h.b16 %v956
    %v1190 = vunpack.c.l.b16 %v957
    %v1191 = vunpack.c.h.b16 %v957
    %v1192 = vunpack.c.l.b16 %v958
    %v1193 = vunpack.c.h.b16 %v958
    %v1194 = vunpack.c.l.b16 %v959
    %v1195 = vunpack.c.h.b16 %v959
    %v1196 = vunpack.c.l.b16 %v960
    %v1197 = vunpack.c.h.b16 %v960
    %v1198 = vunpack.c.l.b16 %v961
    %v1199 = vunpack.c.h.b16 %v961
    %v1200 = vunpack.c.l.b16 %v962
    %v1201 = vunpack.c.h.b16 %v962
    %v1202 = vunpack.c.l.b16 %v963
    %v1203 = vunpack.c.h.b16 %v963
    %v1204 = vunpack.c.l.b16 %v964
    %v1205 = vunpack.c.h.b16 %v964
    %v1206 = vunpack.c.l.b16 %v965
    %v1207 = vunpack.c.h.b16 %v965
    %v1208 = vunpack.c.l.b16 %v966
    %v1209 = vunpack.c.h.b16 %v966
    %v1210 = vunpack.c.l.b16 %v967
    %v1211 = vunpack.c.h.b16 %v967
    %v1212 = vunpack.c.l.b16 %v968
    %v1213 = vunpack.c.h.b16 %v968
    %v1214 = vunpack.c.l.b16 %v969
    %v1215 = vunpack.c.h.b16 %v969
    %v1216 = vunpack.c.l.b16 %v970
    %v1217 = vunpack.c.h.b16 %v970
    %v1218 = vunpack.c.l.b16 %v971
    %v1219 = vunpack.c.h.b16 %v971
    %v1220 = vunpack.c.l.b16 %v972
    %v1221 = vunpack.c.h.b16 %v972
    %v1222 = vunpack.c.l.b16 %v973
    %v1223 = vunpack.c.h.b16 %v973
    %v1224 = vunpack.c.l.b16 %v974
    %v1225 = vunpack.c.h.b16 %v974
    %v1226 = vunpack.c.l.b16 %v975
    %v1227 = vunpack.c.h.b16 %v975
    %v1228 = vunpack.c.l.b16 %v976
    %v1229 = vunpack.c.h.b16 %v976
    %v1230 = vunpack.c.l.b16 %v977
    %v1231 = vunpack.c.h.b16 %v977
    %v1232 = vunpack.c.l.b16 %v978
    %v1233 = vunpack.c.h.b16 %v978
    %v1234 = vunpack.c.l.b16 %v979
    %v1235 = vunpack.c.h.b16 %v979
    %v1236 = vunpack.c.l.b16 %v980
    %v1237 = vunpack.c.h.b16 %v980
    %v1238 = vunpack.c.l.b16 %v981
    %v1239 = vunpack.c.h.b16 %v981
    %v1240 = vunpack.c.l.b16 %v982
    %v1241 = vunpack.c.h.b16 %v982
    %v1242 = vunpack.c.l.b16 %v983
    %v1243 = vunpack.c.h.b16 %v983
    %v1244 = vunpack.c.l.b16 %v984
    %v1245 = vunpack.c.h.b16 %v984
    %v1246 = vunpack.c.l.b16 %v985
    %v1247 = vunpack.c.h.b16 %v985
    %v1248 = vunpack.c.l.b16 %v986
    %v1249 = vunpack.c.h.b16 %v986
    %v1250 = vunpack.c.l.b16 %v987
    %v1251 = vunpack.c.h.b16 %v987
    %v1252 = vunpack.c.l.b16 %v988
    %v1253 = vunpack.c.h.b16 %v988
    %v1254 = vunpack.c.l.b16 %v989
    %v1255 = vunpack.c.h.b16 %v989
    %v1256 = vunpack.c.l.b16 %v990
    %v1257 = vunpack.c.h.b16 %v990
    %v1258 = vunpack.c.l.b16 %v991
    %v1259 = vunpack.c.h.b16 %v991
    %v1260 = vunpack.c.l.b16 %v992
    %v1261 = vunpack.c.h.b16 %v992
    %v1262 = vunpack.c.l.b16 %v993
    %v1263 = vunpack.c.h.b16 %v993
    %v1264 = vunpack.c.l.b16 %v994
    %v1265 = vunpack.c.h.b16 %v994
    %v1266 = vunpack.c.l.b16 %v995
    %v1267 = vunpack.c.h.b16 %v995
    %v1268 = vunpack.c.l.b16 %v996
    %v1269 = vunpack.c.h.b16 %v996
    %v1270 = vunpack.c.l.b16 %v997
    %v1271 = vunpack.c.h.b16 %v997
    %v1272 = vunpack.c.l.b16 %v998
    %v1273 = vunpack.c.h.b16 %v998
    %v1274 = vunpack.c.l.b16 %v999
    %v1275 = vunpack.c.h.b16 %v999
    %v1276 = vunpack.c.l.b16 %v1000
    %v1277 = vunpack.c.h.b16 %v1000
    %v1278 = vunpack.c.l.b16 %v1001
    %v1279 = vunpack.c.h.b16 %v1001
    %v1280 = vunpack.c.l.b16 %v1002
    %v1281 = vunpack.c.h.b16 %v1002
    %v1282 = vunpack.c.l.b16 %v1003
    %v1283 = vunpack.c.h.b16 %v1003
    %v1284 = vunpack.c.l.b16 %v1004
    %v1285 = vunpack.c.h.b16 %v1004
    %v1286 = vunpack.c.l.b16 %v1005
    %v1287 = vunpack.c.h.b16 %v1005
    %v1288 = vunpack.c.l.b16 %v1006
    %v1289 = vunpack.c.h.b16 %v1006
    %v1290 = vunpack.c.l.b16 %v1007
    %v1291 = vunpack.c.h.b16 %v1007
    %v1292 = vunpack.c.l.b16 %v1008
    %v1293 = vunpack.c.h.b16 %v1008
    %v1294 = vunpack.c.l.b16 %v1009
    %v1295 = vunpack.c.h.b16 %v1009
    %v1296 = vunpack.c.l.b16 %v1010
    %v1297 = vunpack.c.h.b16 %v1010
    %v1298 = vunpack.c.l.b16 %v1011
    %v1299 = vunpack.c.h.b16 %v1011
    %v1300 = vunpack.c.l.b16 %v1012
    %v1301 = vunpack.c.h.b16 %v1012
    %v1302 = vunpack.c.l.b16 %v1013
    %v1303 = vunpack.c.h.b16 %v1013
    %v1304 = vunpack.c.l.b16 %v1014
    %v1305 = vunpack.c.h.b16 %v1014
    %v1306 = vunpack.c.l.b16 %v1015
    %v1307 = vunpack.c.h.b16 %v1015
    %v1308 = vunpack.c.l.b16 %v1016
    %v1309 = vunpack.c.h.b16 %v1016
    %v1310 = vunpack.c.l.b16 %v1017
    %v1311 = vunpack.c.h.b16 %v1017
    %v1312 = vunpack.c.l.b16 %v1018
    %v1313 = vunpack.c.h.b16 %v1018
    %v1314 = vunpack.c.l.b16 %v1019
    %v1315 = vunpack.c.h.b16 %v1019
    %v1316 = vunpack.c.l.b16 %v1020
    %v1317 = vunpack.c.h.b16 %v1020
    %v1318 = vunpack.c.l.b16 %v1021
    %v1319 = vunpack.c.h.b16 %v1021
    %v1320 = vunpack.c.l.b16 %v1022
    %v1321 = vunpack.c.h.b16 %v1022
    %v1322 = vunpack.c.l.b16 %v1023
    %v1323 = vunpack.c.h.b16 %v1023
    %v1324 = vpack.c.b16 %v1134, %v1132
    %v1325 = vpack.c.b16 %v1135, %v1133
    %v1326 = vpack.c.b16 %v1138, %v1136
    %v1327 = vpack.c.b16 %v1139, %v1137
    %v1328 = vpack.c.b16 %v1142, %v1140
    %v1329 = vpack.c.b16 %v1143, %v1141
    %v1330 = vpack.c.b16 %v1146, %v1144
    %v1331 = vpack.c.b16 %v1147, %v1145
    %v1332 = vpack.c.b16 %v1150, %v1148
    %v1333 = vpack.c.b16 %v1151, %v1149
    %v1334 = vpack.c.b16 %v1154, %v1152
    %v1335 = vpack.c.b16 %v1155, %v1153
    %v1336 = vpack.c.b16 %v1158, %v1156
    %v1337 = vpack.c.b16 %v1159, %v1157
    %v1338 = vpack.c.b16 %v1162, %v1160
    %v1339 = vpack.c.b16 %v1163, %v1161
    %v1340 = vpack.c.b16 %v1166, %v1164
    %v1341 = vpack.c.b16 %v1167, %v1165
    %v1342 = vpack.c.b16 %v1170, %v1168
    %v1343 = vpack.c.b16 %v1171, %v1169
    %v1344 = vpack.c.b16 %v1174, %v1172
    %v1345 = vpack.c.b16 %v1175, %v1173
    %v1346 = vpack.c.b16 %v1178, %v1176
    %v1347 = vpack.c.b16 %v1179, %v1177
    %v1348 = vpack.c.b16 %v1182, %v1180
    %v1349 = vpack.c.b16 %v1183, %v1181
    %v1350 = vpack.c.b16 %v1186, %v1184
    %v1351 = vpack.c.b16 %v1187, %v1185
    %v1352 = vpack.c.b16 %v1190, %v1188
    %v1353 = vpack.c.b16 %v1191, %v1189
    %v1354 = vpack.c.b16 %v1194, %v1192
    %v1355 = vpack.c.b16 %v1195, %v1193
    %v1356 = vpack.c.b16 %v1198, %v1196
    %v1357 = vpack.c.b16 %v1199, %v1197
    %v1358 = vpack.c.b16 %v1202, %v1200
    %v1359 = vpack.c.b16 %v1203, %v1201
    %v1360 = vpack.c.b16 %v1206, %v1204
    %v1361 = vpack.c.b16 %v1207, %v1205
    %v1362 = vpack.c.b16 %v1210, %v1208
    %v1363 = vpack.c.b16 %v1211, %v1209
    %v1364 = vpack.c.b16 %v1214, %v1212
    %v1365 = vpack.c.b16 %v1215, %v1213
    %v1366 = vpack.c.b16 %v1218, %v1216
    %v1367 = vpack.c.b16 %v1219, %v1217
    %v1368 = vpack.c.b16 %v1222, %v1220
    %v1369 = vpack.c.b16 %v1223, %v1221
    %v1370 = vpack.c.b16 %v1226, %v1224
    %v1371 = vpack.c.b16 %v1227, %v1225
    %v1372 = vpack.c.b16 %v1230, %v1228
    %v1373 = vpack.c.b16 %v1231, %v1229
    %v1374 = vpack.c.b16 %v1234, %v1232
    %v1375 = vpack.c.b16 %v1235, %v1233
    %v1376 = vpack.c.b16 %v1238, %v1236
    %v1377 = vpack.c.b16 %v1239, %v1237
    %v1378 = vpack.c.b16 %v1242, %v1240
    %v1379 = vpack.c.b16 %v1243, %v1241
    %v1380 = vpack.c.b16 %v1246, %v1244
    %v1381 = vpack.c.b16 %v1247, %v1245
    %v1382 = vpack.c.b16 %v1250, %v1248
    %v1383 = vpack.c.b16 %v1251, %v1249
    %v1384 = vpack.c.b16 %v1254, %v1252
    %v1385 = vpack.c.b16 %v1255, %v1253
    %v1386 = vpack.c.b16 %v1258, %v1256
    %v1387 = vpack.c.b16 %v1259, %v1257
    %v1388 = vpack.c.b16 %v1262, %v1260
    %v1389 = vpack.c.b16 %v1263, %v1261
    %v1390 = vpack.c.b16 %v1266, %v1264
    %v1391 = vpack.c.b16 %v1267, %v1265
    %v1392 = vpack.c.b16 %v1270, %v1268
    %v1393 = vpack.c.b16 %v1271, %v1269
    %v1394 = vpack.c.b16 %v1274, %v1272
    %v1395 = vpack.c.b16 %v1275, %v1273
    %v1396 = vpack.c.b16 %v1278, %v1276
    %v1397 = vpack.c.b16 %v1279, %v1277
    %v1398 = vpack.c.b16 %v1282, %v1280
    %v1399 = vpack.c.b16 %v1283, %v1281
    %v1400 = vpack.c.b16 %v1286, %v1284
    %v1401 = vpack.c.b16 %v1287, %v1285
    %v1402 = vpack.c.b16 %v1290, %v1288
    %v1403 = vpack.c.b16 %v1291, %v1289
    %v1404 = vpack.c.b16 %v1294, %v1292
    %v1405 = vpack.c.b16 %v1295, %v1293
    %v1406 = vpack.c.b16 %v1298, %v1296
    %v1407 = vpack.c.b16 %v1299, %v1297
    %v1408 = vpack.c.b16 %v1302, %v1300
    %v1409 = vpack.c.b16 %v1303, %v1301
    %v1410 = vpack.c.b16 %v1306, %v1304
    %v1411 = vpack.c.b16 %v1307, %v1305
    %v1412 = vpack.c.b16 %v1310, %v1308
    %v1413 = vpack.c.b16 %v1311, %v1309
    %v1414 = vpack.c.b16 %v1314, %v1312
    %v1415 = vpack.c.b16 %v1315, %v1313
    %v1416 = vpack.c.b16 %v1318, %v1316
    %v1417 = vpack.c.b16 %v1319, %v1317
    %v1418 = vpack.c.b16 %v1322, %v1320
    %v1419 = vpack.c.b16 %v1323, %v1321
    %1516 = vmatprep.subr.bf16.mxu0 %v1325
    %1517 = vmatpush1.bf16.msra.mxu0 %v1324
    %1518 = vmatprep.subr.bf16.mxu0 %v1327
    %1519 = vmatpush1.bf16.msra.mxu0 %v1326
    %1520 = vmatprep.subr.bf16.mxu0 %v1329
    %1521 = vmatpush1.bf16.msra.mxu0 %v1328
    %1522 = vmatprep.subr.bf16.mxu0 %v1331
    %1523 = vmatpush1.bf16.msra.mxu0 %v1330
    %1524 = vmatprep.subr.bf16.mxu0 %v1333
    %1525 = vmatpush1.bf16.msra.mxu0 %v1332
    %1526 = vmatprep.subr.bf16.mxu0 %v1335
    %1527 = vmatpush1.bf16.msra.mxu0 %v1334
    %1528 = vmatprep.subr.bf16.mxu0 %v1337
    %1529 = vmatpush1.bf16.msra.mxu0 %v1336
    %1530 = vmatprep.subr.bf16.mxu0 %v1339
    %1531 = vmatpush1.bf16.msra.mxu0 %v1338
    %1532 = vmatprep.subr.bf16.mxu0 %v1341
    %1533 = vmatpush1.bf16.msra.mxu0 %v1340
    %1534 = vmatprep.subr.bf16.mxu0 %v1343
    %1535 = vmatpush1.bf16.msra.mxu0 %v1342
    %1536 = vmatprep.subr.bf16.mxu0 %v1345
    %1537 = vmatpush1.bf16.msra.mxu0 %v1344
    %1538 = vmatprep.subr.bf16.mxu0 %v1347
    %1539 = vmatpush1.bf16.msra.mxu0 %v1346
    %1540 = vmatprep.subr.bf16.mxu0 %v1349
    %1541 = vmatpush1.bf16.msra.mxu0 %v1348
    %1542 = vmatprep.subr.bf16.mxu0 %v1351
    %1543 = vmatpush1.bf16.msra.mxu0 %v1350
    %1544 = vmatprep.subr.bf16.mxu0 %v1353
    %1545 = vmatpush1.bf16.msra.mxu0 %v1352
    %1546 = vmatprep.subr.bf16.mxu0 %v1355
    %1547 = vmatpush1.bf16.msra.mxu0 %v1354
    %1548 = vmatprep.mubr.bf16.mxu0 %v641
    %1549 = vmatmul.mubr.bf16.gmra.mrb[0].mxu0 %v640
    %v1550 = vpop.f32.mrb[0].mxu0
    %v1551 = vadd.f32 %v1029, %v1550
    %v1552 = vpop.f32.mrb[0].mxu0
    %v1553 = vadd.f32 %v1033, %v1552
    %v1554 = vpop.f32.mrb[0].mxu0
    %v1555 = vadd.f32 %v1029, %v1554
    %v1556 = vpop.f32.mrb[0].mxu0
    %v1557 = vadd.f32 %v1033, %v1556
    %1558 = vmatprep.mubr.bf16.mxu0 %v647
    %1559 = vmatmul.mubr.bf16.gmra.mrb[0].mxu0 %v646
    %v1560 = vpop.f32.mrb[0].mxu0
    %v1561 = vadd.f32 %v1029, %v1560
    %v1562 = vpop.f32.mrb[0].mxu0
    %v1563 = vadd.f32 %v1033, %v1562
    %v1564 = vpop.f32.mrb[0].mxu0
    %v1565 = vadd.f32 %v1029, %v1564
    %v1566 = vpop.f32.mrb[0].mxu0
    %v1567 = vadd.f32 %v1033, %v1566
    %1568 = vmatprep.mubr.bf16.mxu0 %v653
    %1569 = vmatmul.mubr.bf16.gmra.mrb[0].mxu0 %v652
    %v1570 = vpop.f32.mrb[0].mxu0
    %v1571 = vadd.f32 %v1029, %v1570
    %v1572 = vpop.f32.mrb[0].mxu0
    %v1573 = vadd.f32 %v1033, %v1572
    %v1574 = vpop.f32.mrb[0].mxu0
    %v1575 = vadd.f32 %v1029, %v1574
    %v1576 = vpop.f32.mrb[0].mxu0
    %v1577 = vadd.f32 %v1033, %v1576
    %1578 = vmatprep.mubr.bf16.mxu0 %v659
    %1579 = vmatmul.mubr.bf16.gmra.mrb[0].mxu0 %v658
    %v1580 = vpop.f32.mrb[0].mxu0
    %v1581 = vadd.f32 %v1029, %v1580
    %v1582 = vpop.f32.mrb[0].mxu0
    %v1583 = vadd.f32 %v1033, %v1582
    %v1584 = vpop.f32.mrb[0].mxu0
    %v1585 = vadd.f32 %v1029, %v1584
    %v1586 = vpop.f32.mrb[0].mxu0
    %v1587 = vadd.f32 %v1033, %v1586
    %1588 = vmatprep.mubr.bf16.mxu0 %v665
    %1589 = vmatmul.mubr.bf16.gmra.mrb[0].mxu0 %v664
    %v1590 = vpop.f32.mrb[0].mxu0
    %v1591 = vadd.f32 %v1029, %v1590
    %v1592 = vpop.f32.mrb[0].mxu0
    %v1593 = vadd.f32 %v1033, %v1592
    %v1594 = vpop.f32.mrb[0].mxu0
    %v1595 = vadd.f32 %v1029, %v1594
    %v1596 = vpop.f32.mrb[0].mxu0
    %v1597 = vadd.f32 %v1033, %v1596
    %1598 = vmatprep.mubr.bf16.mxu0 %v671
    %1599 = vmatmul.mubr.bf16.gmra.mrb[0].mxu0 %v670
    %v1600 = vpop.f32.mrb[0].mxu0
    %v1601 = vadd.f32 %v1029, %v1600
    %v1602 = vpop.f32.mrb[0].mxu0
    %v1603 = vadd.f32 %v1033, %v1602
    %v1604 = vpop.f32.mrb[0].mxu0
    %v1605 = vadd.f32 %v1029, %v1604
    %v1606 = vpop.f32.mrb[0].mxu0
    %v1607 = vadd.f32 %v1033, %v1606
    %1608 = vmatprep.mubr.bf16.mxu0 %v677
    %1609 = vmatmul.mubr.bf16.gmra.mrb[0].mxu0 %v676
    %v1610 = vpop.f32.mrb[0].mxu0
    %v1611 = vadd.f32 %v1029, %v1610
    %v1612 = vpop.f32.mrb[0].mxu0
    %v1613 = vadd.f32 %v1033, %v1612
    %v1614 = vpop.f32.mrb[0].mxu0
    %v1615 = vadd.f32 %v1029, %v1614
    %v1616 = vpop.f32.mrb[0].mxu0
    %v1617 = vadd.f32 %v1033, %v1616
    %1618 = vmatprep.mubr.bf16.mxu0 %v683
    %1619 = vmatmul.mubr.bf16.gmra.mrb[0].mxu0 %v682
    %v1620 = vpop.f32.mrb[0].mxu0
    %v1621 = vadd.f32 %v1029, %v1620
    %v1622 = vpop.f32.mrb[0].mxu0
    %v1623 = vadd.f32 %v1033, %v1622
    %v1624 = vpop.f32.mrb[0].mxu0
    %v1625 = vadd.f32 %v1029, %v1624
    %v1626 = vpop.f32.mrb[0].mxu0
    %v1627 = vadd.f32 %v1033, %v1626
    %1628 = vmatprep.mubr.bf16.mxu0 %v689
    %1629 = vmatmul.mubr.bf16.gmra.mrb[0].mxu0 %v688
    %v1630 = vpop.f32.mrb[0].mxu0
    %v1631 = vadd.f32 %v1029, %v1630
    %v1632 = vpop.f32.mrb[0].mxu0
    %v1633 = vadd.f32 %v1033, %v1632
    %v1634 = vpop.f32.mrb[0].mxu0
    %v1635 = vadd.f32 %v1029, %v1634
    %v1636 = vpop.f32.mrb[0].mxu0
    %v1637 = vadd.f32 %v1033, %v1636
    %1638 = vmatprep.mubr.bf16.mxu0 %v695
    %1639 = vmatmul.mubr.bf16.gmra.mrb[0].mxu0 %v694
    %v1640 = vpop.f32.mrb[0].mxu0
    %v1641 = vadd.f32 %v1029, %v1640
    %v1642 = vpop.f32.mrb[0].mxu0
    %v1643 = vadd.f32 %v1033, %v1642
    %v1644 = vpop.f32.mrb[0].mxu0
    %v1645 = vadd.f32 %v1029, %v1644
    %v1646 = vpop.f32.mrb[0].mxu0
    %v1647 = vadd.f32 %v1033, %v1646
    %1648 = vmatprep.mubr.bf16.mxu0 %v701
    %1649 = vmatmul.mubr.bf16.gmra.mrb[0].mxu0 %v700
    %v1650 = vpop.f32.mrb[0].mxu0
    %v1651 = vadd.f32 %v1029, %v1650
    %v1652 = vpop.f32.mrb[0].mxu0
    %v1653 = vadd.f32 %v1033, %v1652
    %v1654 = vpop.f32.mrb[0].mxu0
    %v1655 = vadd.f32 %v1029, %v1654
    %v1656 = vpop.f32.mrb[0].mxu0
    %v1657 = vadd.f32 %v1033, %v1656
    %1658 = vmatprep.mubr.bf16.mxu0 %v707
    %1659 = vmatmul.mubr.bf16.gmra.mrb[0].mxu0 %v706
    %v1660 = vpop.f32.mrb[0].mxu0
    %v1661 = vadd.f32 %v1029, %v1660
    %v1662 = vpop.f32.mrb[0].mxu0
    %v1663 = vadd.f32 %v1033, %v1662
    %v1664 = vpop.f32.mrb[0].mxu0
    %v1665 = vadd.f32 %v1029, %v1664
    %v1666 = vpop.f32.mrb[0].mxu0
    %v1667 = vadd.f32 %v1033, %v1666
    %1668 = vmatprep.mubr.bf16.mxu0 %v713
    %1669 = vmatmul.mubr.bf16.gmra.mrb[0].mxu0 %v712
    %v1670 = vpop.f32.mrb[0].mxu0
    %v1671 = vadd.f32 %v1029, %v1670
    %v1672 = vpop.f32.mrb[0].mxu0
    %v1673 = vadd.f32 %v1033, %v1672
    %v1674 = vpop.f32.mrb[0].mxu0
    %v1675 = vadd.f32 %v1029, %v1674
    %v1676 = vpop.f32.mrb[0].mxu0
    %v1677 = vadd.f32 %v1033, %v1676
    %1678 = vmatprep.mubr.bf16.mxu0 %v719
    %1679 = vmatmul.mubr.bf16.gmra.mrb[0].mxu0 %v718
    %v1680 = vpop.f32.mrb[0].mxu0
    %v1681 = vadd.f32 %v1029, %v1680
    %v1682 = vpop.f32.mrb[0].mxu0
    %v1683 = vadd.f32 %v1033, %v1682
    %v1684 = vpop.f32.mrb[0].mxu0
    %v1685 = vadd.f32 %v1029, %v1684
    %v1686 = vpop.f32.mrb[0].mxu0
    %v1687 = vadd.f32 %v1033, %v1686
    %1688 = vmatprep.mubr.bf16.mxu0 %v725
    %1689 = vmatmul.mubr.bf16.gmra.mrb[0].mxu0 %v724
    %v1690 = vpop.f32.mrb[0].mxu0
    %v1691 = vadd.f32 %v1029, %v1690
    %v1692 = vpop.f32.mrb[0].mxu0
    %v1693 = vadd.f32 %v1033, %v1692
    %v1694 = vpop.f32.mrb[0].mxu0
    %v1695 = vadd.f32 %v1029, %v1694
    %v1696 = vpop.f32.mrb[0].mxu0
    %v1697 = vadd.f32 %v1033, %v1696
    %1698 = vmatprep.mubr.bf16.mxu0 %v731
    %1699 = vmatmul.mubr.bf16.gmra.mrb[0].mxu0 %v730
    %v1700 = vpop.f32.mrb[0].mxu0
    %v1701 = vadd.f32 %v1029, %v1700
    %v1702 = vpop.f32.mrb[0].mxu0
    %v1703 = vadd.f32 %v1033, %v1702
    %v1704 = vpop.f32.mrb[0].mxu0
    %v1705 = vadd.f32 %v1029, %v1704
    %v1706 = vpop.f32.mrb[0].mxu0
    %v1707 = vadd.f32 %v1033, %v1706
    %1708 = vmatprep.mubr.bf16.mxu0 %v737
    %1709 = vmatmul.mubr.bf16.gmra.mrb[0].mxu0 %v736
    %v1710 = vpop.f32.mrb[0].mxu0
    %v1711 = vadd.f32 %v1029, %v1710
    %v1712 = vpop.f32.mrb[0].mxu0
    %v1713 = vadd.f32 %v1033, %v1712
    %v1714 = vpop.f32.mrb[0].mxu0
    %v1715 = vadd.f32 %v1029, %v1714
    %v1716 = vpop.f32.mrb[0].mxu0
    %v1717 = vadd.f32 %v1033, %v1716
    %1718 = vmatprep.mubr.bf16.mxu0 %v743
    %1719 = vmatmul.mubr.bf16.gmra.mrb[0].mxu0 %v742
    %v1720 = vpop.f32.mrb[0].mxu0
    %v1721 = vadd.f32 %v1029, %v1720
    %v1722 = vpop.f32.mrb[0].mxu0
    %v1723 = vadd.f32 %v1033, %v1722
    %v1724 = vpop.f32.mrb[0].mxu0
    %v1725 = vadd.f32 %v1029, %v1724
    %v1726 = vpop.f32.mrb[0].mxu0
    %v1727 = vadd.f32 %v1033, %v1726
    %1728 = vmatprep.mubr.bf16.mxu0 %v749
    %1729 = vmatmul.mubr.bf16.gmra.mrb[0].mxu0 %v748
    %v1730 = vpop.f32.mrb[0].mxu0
    %v1731 = vadd.f32 %v1029, %v1730
    %v1732 = vpop.f32.mrb[0].mxu0
    %v1733 = vadd.f32 %v1033, %v1732
    %v1734 = vpop.f32.mrb[0].mxu0
    %v1735 = vadd.f32 %v1029, %v1734
    %v1736 = vpop.f32.mrb[0].mxu0
    %v1737 = vadd.f32 %v1033, %v1736
    %1738 = vmatprep.mubr.bf16.mxu0 %v755
    %1739 = vmatmul.mubr.bf16.gmra.mrb[0].mxu0 %v754
    %v1740 = vpop.f32.mrb[0].mxu0
    %v1741 = vadd.f32 %v1029, %v1740
    %v1742 = vpop.f32.mrb[0].mxu0
    %v1743 = vadd.f32 %v1033, %v1742
    %v1744 = vpop.f32.mrb[0].mxu0
    %v1745 = vadd.f32 %v1029, %v1744
    %v1746 = vpop.f32.mrb[0].mxu0
    %v1747 = vadd.f32 %v1033, %v1746
    %1748 = vmatprep.mubr.bf16.mxu0 %v761
    %1749 = vmatmul.mubr.bf16.gmra.mrb[0].mxu0 %v760
    %v1750 = vpop.f32.mrb[0].mxu0
    %v1751 = vadd.f32 %v1029, %v1750
    %v1752 = vpop.f32.mrb[0].mxu0
    %v1753 = vadd.f32 %v1033, %v1752
    %v1754 = vpop.f32.mrb[0].mxu0
    %v1755 = vadd.f32 %v1029, %v1754
    %v1756 = vpop.f32.mrb[0].mxu0
    %v1757 = vadd.f32 %v1033, %v1756
    %1758 = vmatprep.mubr.bf16.mxu0 %v767
    %1759 = vmatmul.mubr.bf16.gmra.mrb[0].mxu0 %v766
    %v1760 = vpop.f32.mrb[0].mxu0
    %v1761 = vadd.f32 %v1029, %v1760
    %v1762 = vpop.f32.mrb[0].mxu0
    %v1763 = vadd.f32 %v1033, %v1762
    %v1764 = vpop.f32.mrb[0].mxu0
    %v1765 = vadd.f32 %v1029, %v1764
    %v1766 = vpop.f32.mrb[0].mxu0
    %v1767 = vadd.f32 %v1033, %v1766
    %1768 = vmatprep.mubr.bf16.mxu0 %v773
    %1769 = vmatmul.mubr.bf16.gmra.mrb[0].mxu0 %v772
    %v1770 = vpop.f32.mrb[0].mxu0
    %v1771 = vadd.f32 %v1029, %v1770
    %v1772 = vpop.f32.mrb[0].mxu0
    %v1773 = vadd.f32 %v1033, %v1772
    %v1774 = vpop.f32.mrb[0].mxu0
    %v1775 = vadd.f32 %v1029, %v1774
    %v1776 = vpop.f32.mrb[0].mxu0
    %v1777 = vadd.f32 %v1033, %v1776
    %1778 = vmatprep.mubr.bf16.mxu0 %v779
    %1779 = vmatmul.mubr.bf16.gmra.mrb[0].mxu0 %v778
    %v1780 = vpop.f32.mrb[0].mxu0
    %v1781 = vadd.f32 %v1029, %v1780
    %v1782 = vpop.f32.mrb[0].mxu0
    %v1783 = vadd.f32 %v1033, %v1782
    %v1784 = vpop.f32.mrb[0].mxu0
    %v1785 = vadd.f32 %v1029, %v1784
    %v1786 = vpop.f32.mrb[0].mxu0
    %v1787 = vadd.f32 %v1033, %v1786
    %1788 = vmatprep.mubr.bf16.mxu0 %v785
    %1789 = vmatmul.mubr.bf16.gmra.mrb[0].mxu0 %v784
    %v1790 = vpop.f32.mrb[0].mxu0
    %v1791 = vadd.f32 %v1029, %v1790
    %v1792 = vpop.f32.mrb[0].mxu0
    %v1793 = vadd.f32 %v1033, %v1792
    %v1794 = vpop.f32.mrb[0].mxu0
    %v1795 = vadd.f32 %v1029, %v1794
    %v1796 = vpop.f32.mrb[0].mxu0
    %v1797 = vadd.f32 %v1033, %v1796
    %1798 = vmatprep.mubr.bf16.mxu0 %v791
    %1799 = vmatmul.mubr.bf16.gmra.mrb[0].mxu0 %v790
    %v1800 = vpop.f32.mrb[0].mxu0
    %v1801 = vadd.f32 %v1029, %v1800
    %v1802 = vpop.f32.mrb[0].mxu0
    %v1803 = vadd.f32 %v1033, %v1802
    %v1804 = vpop.f32.mrb[0].mxu0
    %v1805 = vadd.f32 %v1029, %v1804
    %v1806 = vpop.f32.mrb[0].mxu0
    %v1807 = vadd.f32 %v1033, %v1806
    %1808 = vmatprep.mubr.bf16.mxu0 %v797
    %1809 = vmatmul.mubr.bf16.gmra.mrb[0].mxu0 %v796
    %v1810 = vpop.f32.mrb[0].mxu0
    %v1811 = vadd.f32 %v1029, %v1810
    %v1812 = vpop.f32.mrb[0].mxu0
    %v1813 = vadd.f32 %v1033, %v1812
    %v1814 = vpop.f32.mrb[0].mxu0
    %v1815 = vadd.f32 %v1029, %v1814
    %v1816 = vpop.f32.mrb[0].mxu0
    %v1817 = vadd.f32 %v1033, %v1816
    %1818 = vmatprep.mubr.bf16.mxu0 %v803
    %1819 = vmatmul.mubr.bf16.gmra.mrb[0].mxu0 %v802
    %v1820 = vpop.f32.mrb[0].mxu0
    %v1821 = vadd.f32 %v1029, %v1820
    %v1822 = vpop.f32.mrb[0].mxu0
    %v1823 = vadd.f32 %v1033, %v1822
    %v1824 = vpop.f32.mrb[0].mxu0
    %v1825 = vadd.f32 %v1029, %v1824
    %v1826 = vpop.f32.mrb[0].mxu0
    %v1827 = vadd.f32 %v1033, %v1826
    %1828 = vmatprep.mubr.bf16.mxu0 %v809
    %1829 = vmatmul.mubr.bf16.gmra.mrb[0].mxu0 %v808
    %v1830 = vpop.f32.mrb[0].mxu0
    %v1831 = vadd.f32 %v1029, %v1830
    %v1832 = vpop.f32.mrb[0].mxu0
    %v1833 = vadd.f32 %v1033, %v1832
    %v1834 = vpop.f32.mrb[0].mxu0
    %v1835 = vadd.f32 %v1029, %v1834
    %v1836 = vpop.f32.mrb[0].mxu0
    %v1837 = vadd.f32 %v1033, %v1836
    %1838 = vmatprep.mubr.bf16.mxu0 %v815
    %1839 = vmatmul.mubr.bf16.gmra.mrb[0].mxu0 %v814
    %v1840 = vpop.f32.mrb[0].mxu0
    %v1841 = vadd.f32 %v1029, %v1840
    %v1842 = vpop.f32.mrb[0].mxu0
    %v1843 = vadd.f32 %v1033, %v1842
    %v1844 = vpop.f32.mrb[0].mxu0
    %v1845 = vadd.f32 %v1029, %v1844
    %v1846 = vpop.f32.mrb[0].mxu0
    %v1847 = vadd.f32 %v1033, %v1846
    %1848 = vmatprep.mubr.bf16.mxu0 %v821
    %1849 = vmatmul.mubr.bf16.gmra.mrb[0].mxu0 %v820
    %v1850 = vpop.f32.mrb[0].mxu0
    %v1851 = vadd.f32 %v1029, %v1850
    %v1852 = vpop.f32.mrb[0].mxu0
    %v1853 = vadd.f32 %v1033, %v1852
    %v1854 = vpop.f32.mrb[0].mxu0
    %v1855 = vadd.f32 %v1029, %v1854
    %v1856 = vpop.f32.mrb[0].mxu0
    %v1857 = vadd.f32 %v1033, %v1856
    %1858 = vmatprep.mubr.bf16.mxu0 %v827
    %1859 = vmatmul.mubr.bf16.gmra.mrb[0].mxu0 %v826
    %v1860 = vpop.f32.mrb[0].mxu0
    %v1861 = vadd.f32 %v1029, %v1860
    %v1862 = vpop.f32.mrb[0].mxu0
    %v1863 = vadd.f32 %v1033, %v1862
    %v1864 = vpop.f32.mrb[0].mxu0
    %v1865 = vadd.f32 %v1029, %v1864
    %v1866 = vpop.f32.mrb[0].mxu0
    %v1867 = vadd.f32 %v1033, %v1866
    %1868 = vmatprep.mubr.bf16.mxu0 %v833
    %1869 = vmatmul.mubr.bf16.gmra.mrb[0].mxu0 %v832
    %v1870 = vpop.f32.mrb[0].mxu0
    %v1871 = vadd.f32 %v1029, %v1870
    %v1872 = vpop.f32.mrb[0].mxu0
    %v1873 = vadd.f32 %v1033, %v1872
    %v1874 = vpop.f32.mrb[0].mxu0
    %v1875 = vadd.f32 %v1029, %v1874
    %v1876 = vpop.f32.mrb[0].mxu0
    %v1877 = vadd.f32 %v1033, %v1876
    %1878 = vmatprep.mubr.bf16.mxu0 %v839
    %1879 = vmatmul.mubr.bf16.gmra.mrb[0].mxu0 %v838
    %v1880 = vpop.f32.mrb[0].mxu0
    %v1881 = vadd.f32 %v1029, %v1880
    %v1882 = vpop.f32.mrb[0].mxu0
    %v1883 = vadd.f32 %v1033, %v1882
    %v1884 = vpop.f32.mrb[0].mxu0
    %v1885 = vadd.f32 %v1029, %v1884
    %v1886 = vpop.f32.mrb[0].mxu0
    %v1887 = vadd.f32 %v1033, %v1886
    %1888 = vmatprep.mubr.bf16.mxu0 %v845
    %1889 = vmatmul.mubr.bf16.gmra.mrb[0].mxu0 %v844
    %v1890 = vpop.f32.mrb[0].mxu0
    %v1891 = vadd.f32 %v1029, %v1890
    %v1892 = vpop.f32.mrb[0].mxu0
    %v1893 = vadd.f32 %v1033, %v1892
    %v1894 = vpop.f32.mrb[0].mxu0
    %v1895 = vadd.f32 %v1029, %v1894
    %v1896 = vpop.f32.mrb[0].mxu0
    %v1897 = vadd.f32 %v1033, %v1896
    %1898 = vmatprep.mubr.bf16.mxu0 %v851
    %1899 = vmatmul.mubr.bf16.gmra.mrb[0].mxu0 %v850
    %v1900 = vpop.f32.mrb[0].mxu0
    %v1901 = vadd.f32 %v1029, %v1900
    %v1902 = vpop.f32.mrb[0].mxu0
    %v1903 = vadd.f32 %v1033, %v1902
    %v1904 = vpop.f32.mrb[0].mxu0
    %v1905 = vadd.f32 %v1029, %v1904
    %v1906 = vpop.f32.mrb[0].mxu0
    %v1907 = vadd.f32 %v1033, %v1906
    %1908 = vmatprep.mubr.bf16.mxu0 %v857
    %1909 = vmatmul.mubr.bf16.gmra.mrb[0].mxu0 %v856
    %v1910 = vpop.f32.mrb[0].mxu0
    %v1911 = vadd.f32 %v1029, %v1910
    %v1912 = vpop.f32.mrb[0].mxu0
    %v1913 = vadd.f32 %v1033, %v1912
    %v1914 = vpop.f32.mrb[0].mxu0
    %v1915 = vadd.f32 %v1029, %v1914
    %v1916 = vpop.f32.mrb[0].mxu0
    %v1917 = vadd.f32 %v1033, %v1916
    %1918 = vmatprep.mubr.bf16.mxu0 %v863
    %1919 = vmatmul.mubr.bf16.gmra.mrb[0].mxu0 %v862
    %v1920 = vpop.f32.mrb[0].mxu0
    %v1921 = vadd.f32 %v1029, %v1920
    %v1922 = vpop.f32.mrb[0].mxu0
    %v1923 = vadd.f32 %v1033, %v1922
    %v1924 = vpop.f32.mrb[0].mxu0
    %v1925 = vadd.f32 %v1029, %v1924
    %v1926 = vpop.f32.mrb[0].mxu0
    %v1927 = vadd.f32 %v1033, %v1926
    %1928 = vmatprep.mubr.bf16.mxu0 %v869
    %1929 = vmatmul.mubr.bf16.gmra.mrb[0].mxu0 %v868
    %v1930 = vpop.f32.mrb[0].mxu0
    %v1931 = vadd.f32 %v1029, %v1930
    %v1932 = vpop.f32.mrb[0].mxu0
    %v1933 = vadd.f32 %v1033, %v1932
    %v1934 = vpop.f32.mrb[0].mxu0
    %v1935 = vadd.f32 %v1029, %v1934
    %v1936 = vpop.f32.mrb[0].mxu0
    %v1937 = vadd.f32 %v1033, %v1936
    %1938 = vmatprep.mubr.bf16.mxu0 %v875
    %1939 = vmatmul.mubr.bf16.gmra.mrb[0].mxu0 %v874
    %v1940 = vpop.f32.mrb[0].mxu0
    %v1941 = vadd.f32 %v1029, %v1940
    %v1942 = vpop.f32.mrb[0].mxu0
    %v1943 = vadd.f32 %v1033, %v1942
    %v1944 = vpop.f32.mrb[0].mxu0
    %v1945 = vadd.f32 %v1029, %v1944
    %v1946 = vpop.f32.mrb[0].mxu0
    %v1947 = vadd.f32 %v1033, %v1946
    %1948 = vmatprep.mubr.bf16.mxu0 %v881
    %1949 = vmatmul.mubr.bf16.gmra.mrb[0].mxu0 %v880
    %v1950 = vpop.f32.mrb[0].mxu0
    %v1951 = vadd.f32 %v1029, %v1950
    %v1952 = vpop.f32.mrb[0].mxu0
    %v1953 = vadd.f32 %v1033, %v1952
    %v1954 = vpop.f32.mrb[0].mxu0
    %v1955 = vadd.f32 %v1029, %v1954
    %v1956 = vpop.f32.mrb[0].mxu0
    %v1957 = vadd.f32 %v1033, %v1956
    %1958 = vmatprep.mubr.bf16.mxu0 %v887
    %1959 = vmatmul.mubr.bf16.gmra.mrb[0].mxu0 %v886
    %v1960 = vpop.f32.mrb[0].mxu0
    %v1961 = vadd.f32 %v1029, %v1960
    %v1962 = vpop.f32.mrb[0].mxu0
    %v1963 = vadd.f32 %v1033, %v1962
    %v1964 = vpop.f32.mrb[0].mxu0
    %v1965 = vadd.f32 %v1029, %v1964
    %v1966 = vpop.f32.mrb[0].mxu0
    %v1967 = vadd.f32 %v1033, %v1966
    %1968 = vmatprep.mubr.bf16.mxu0 %v893
    %1969 = vmatmul.mubr.bf16.gmra.mrb[0].mxu0 %v892
    %v1970 = vpop.f32.mrb[0].mxu0
    %v1971 = vadd.f32 %v1029, %v1970
    %v1972 = vpop.f32.mrb[0].mxu0
    %v1973 = vadd.f32 %v1033, %v1972
    %v1974 = vpop.f32.mrb[0].mxu0
    %v1975 = vadd.f32 %v1029, %v1974
    %v1976 = vpop.f32.mrb[0].mxu0
    %v1977 = vadd.f32 %v1033, %v1976
    %1978 = vmatprep.mubr.bf16.mxu0 %v899
    %1979 = vmatmul.mubr.bf16.gmra.mrb[0].mxu0 %v898
    %v1980 = vpop.f32.mrb[0].mxu0
    %v1981 = vadd.f32 %v1029, %v1980
    %v1982 = vpop.f32.mrb[0].mxu0
    %v1983 = vadd.f32 %v1033, %v1982
    %v1984 = vpop.f32.mrb[0].mxu0
    %v1985 = vadd.f32 %v1029, %v1984
    %v1986 = vpop.f32.mrb[0].mxu0
    %v1987 = vadd.f32 %v1033, %v1986
    %1988 = vmatprep.mubr.bf16.mxu0 %v905
    %1989 = vmatmul.mubr.bf16.gmra.mrb[0].mxu0 %v904
    %v1990 = vpop.f32.mrb[0].mxu0
    %v1991 = vadd.f32 %v1029, %v1990
    %v1992 = vpop.f32.mrb[0].mxu0
    %v1993 = vadd.f32 %v1033, %v1992
    %v1994 = vpop.f32.mrb[0].mxu0
    %v1995 = vadd.f32 %v1029, %v1994
    %v1996 = vpop.f32.mrb[0].mxu0
    %v1997 = vadd.f32 %v1033, %v1996
    %1998 = vmatprep.mubr.bf16.mxu0 %v911
    %1999 = vmatmul.mubr.bf16.gmra.mrb[0].mxu0 %v910
    %v2000 = vpop.f32.mrb[0].mxu0
    %v2001 = vadd.f32 %v1029, %v2000
    %v2002 = vpop.f32.mrb[0].mxu0
    %v2003 = vadd.f32 %v1033, %v2002
    %v2004 = vpop.f32.mrb[0].mxu0
    %v2005 = vadd.f32 %v1029, %v2004
    %v2006 = vpop.f32.mrb[0].mxu0
    %v2007 = vadd.f32 %v1033, %v2006
    %2008 = vmatprep.mubr.bf16.mxu0 %v917
    %2009 = vmatmul.mubr.bf16.gmra.mrb[0].mxu0 %v916
    %v2010 = vpop.f32.mrb[0].mxu0
    %v2011 = vadd.f32 %v1029, %v2010
    %v2012 = vpop.f32.mrb[0].mxu0
    %v2013 = vadd.f32 %v1033, %v2012
    %v2014 = vpop.f32.mrb[0].mxu0
    %v2015 = vadd.f32 %v1029, %v2014
    %v2016 = vpop.f32.mrb[0].mxu0
    %v2017 = vadd.f32 %v1033, %v2016
    %2018 = vmatprep.mubr.bf16.mxu0 %v923
    %2019 = vmatmul.mubr.bf16.gmra.mrb[0].mxu0 %v922
    %v2020 = vpop.f32.mrb[0].mxu0
    %v2021 = vadd.f32 %v1029, %v2020
    %v2022 = vpop.f32.mrb[0].mxu0
    %v2023 = vadd.f32 %v1033, %v2022
    %v2024 = vpop.f32.mrb[0].mxu0
    %v2025 = vadd.f32 %v1029, %v2024
    %v2026 = vpop.f32.mrb[0].mxu0
    %v2027 = vadd.f32 %v1033, %v2026
    %2028 = vdwg.mxu0
    %2029 = vmatprep.subr.bf16.mxu0 %v1357
    %2030 = vmatpush1.bf16.msra.mxu0 %v1356
    %2031 = vmatprep.subr.bf16.mxu0 %v1359
    %2032 = vmatpush1.bf16.msra.mxu0 %v1358
    %2033 = vmatprep.subr.bf16.mxu0 %v1361
    %2034 = vmatpush1.bf16.msra.mxu0 %v1360
    %2035 = vmatprep.subr.bf16.mxu0 %v1363
    %2036 = vmatpush1.bf16.msra.mxu0 %v1362
    %2037 = vmatprep.subr.bf16.mxu0 %v1365
    %2038 = vmatpush1.bf16.msra.mxu0 %v1364
    %2039 = vmatprep.subr.bf16.mxu0 %v1367
    %2040 = vmatpush1.bf16.msra.mxu0 %v1366
    %2041 = vmatprep.subr.bf16.mxu0 %v1369
    %2042 = vmatpush1.bf16.msra.mxu0 %v1368
    %2043 = vmatprep.subr.bf16.mxu0 %v1371
    %2044 = vmatpush1.bf16.msra.mxu0 %v1370
    %2045 = vmatprep.subr.bf16.mxu0 %v1373
    %2046 = vmatpush1.bf16.msra.mxu0 %v1372
    %2047 = vmatprep.subr.bf16.mxu0 %v1375
    %2048 = vmatpush1.bf16.msra.mxu0 %v1374
    %2049 = vmatprep.subr.bf16.mxu0 %v1377
    %2050 = vmatpush1.bf16.msra.mxu0 %v1376
    %2051 = vmatprep.subr.bf16.mxu0 %v1379
    %2052 = vmatpush1.bf16.msra.mxu0 %v1378
    %2053 = vmatprep.subr.bf16.mxu0 %v1381
    %2054 = vmatpush1.bf16.msra.mxu0 %v1380
    %2055 = vmatprep.subr.bf16.mxu0 %v1383
    %2056 = vmatpush1.bf16.msra.mxu0 %v1382
    %2057 = vmatprep.subr.bf16.mxu0 %v1385
    %2058 = vmatpush1.bf16.msra.mxu0 %v1384
    %2059 = vmatprep.subr.bf16.mxu0 %v1387
    %2060 = vmatpush1.bf16.msra.mxu0 %v1386
    %2061 = vmatprep.mubr.bf16.mxu0 %v643
    %2062 = vmatmul.mubr.bf16.gmra.mrb[0].mxu0 %v642
    %v2063 = vpop.f32.mrb[0].mxu0
    %v2064 = vadd.f32 %v1551, %v2063
    %v2065 = vpop.f32.mrb[0].mxu0
    %v2066 = vadd.f32 %v1553, %v2065
    %v2067 = vpop.f32.mrb[0].mxu0
    %v2068 = vadd.f32 %v1555, %v2067
    %v2069 = vpop.f32.mrb[0].mxu0
    %v2070 = vadd.f32 %v1557, %v2069
    %2071 = vmatprep.mubr.bf16.mxu0 %v649
    %2072 = vmatmul.mubr.bf16.gmra.mrb[0].mxu0 %v648
    %v2073 = vpop.f32.mrb[0].mxu0
    %v2074 = vadd.f32 %v1561, %v2073
    %v2075 = vpop.f32.mrb[0].mxu0
    %v2076 = vadd.f32 %v1563, %v2075
    %v2077 = vpop.f32.mrb[0].mxu0
    %v2078 = vadd.f32 %v1565, %v2077
    %v2079 = vpop.f32.mrb[0].mxu0
    %v2080 = vadd.f32 %v1567, %v2079
    %2081 = vmatprep.mubr.bf16.mxu0 %v655
    %2082 = vmatmul.mubr.bf16.gmra.mrb[0].mxu0 %v654
    %v2083 = vpop.f32.mrb[0].mxu0
    %v2084 = vadd.f32 %v1571, %v2083
    %v2085 = vpop.f32.mrb[0].mxu0
    %v2086 = vadd.f32 %v1573, %v2085
    %v2087 = vpop.f32.mrb[0].mxu0
    %v2088 = vadd.f32 %v1575, %v2087
    %v2089 = vpop.f32.mrb[0].mxu0
    %v2090 = vadd.f32 %v1577, %v2089
    %2091 = vmatprep.mubr.bf16.mxu0 %v661
    %2092 = vmatmul.mubr.bf16.gmra.mrb[0].mxu0 %v660
    %v2093 = vpop.f32.mrb[0].mxu0
    %v2094 = vadd.f32 %v1581, %v2093
    %v2095 = vpop.f32.mrb[0].mxu0
    %v2096 = vadd.f32 %v1583, %v2095
    %v2097 = vpop.f32.mrb[0].mxu0
    %v2098 = vadd.f32 %v1585, %v2097
    %v2099 = vpop.f32.mrb[0].mxu0
    %v2100 = vadd.f32 %v1587, %v2099
    %2101 = vmatprep.mubr.bf16.mxu0 %v667
    %2102 = vmatmul.mubr.bf16.gmra.mrb[0].mxu0 %v666
    %v2103 = vpop.f32.mrb[0].mxu0
    %v2104 = vadd.f32 %v1591, %v2103
    %v2105 = vpop.f32.mrb[0].mxu0
    %v2106 = vadd.f32 %v1593, %v2105
    %v2107 = vpop.f32.mrb[0].mxu0
    %v2108 = vadd.f32 %v1595, %v2107
    %v2109 = vpop.f32.mrb[0].mxu0
    %v2110 = vadd.f32 %v1597, %v2109
    %2111 = vmatprep.mubr.bf16.mxu0 %v673
    %2112 = vmatmul.mubr.bf16.gmra.mrb[0].mxu0 %v672
    %v2113 = vpop.f32.mrb[0].mxu0
    %v2114 = vadd.f32 %v1601, %v2113
    %v2115 = vpop.f32.mrb[0].mxu0
    %v2116 = vadd.f32 %v1603, %v2115
    %v2117 = vpop.f32.mrb[0].mxu0
    %v2118 = vadd.f32 %v1605, %v2117
    %v2119 = vpop.f32.mrb[0].mxu0
    %v2120 = vadd.f32 %v1607, %v2119
    %2121 = vmatprep.mubr.bf16.mxu0 %v679
    %2122 = vmatmul.mubr.bf16.gmra.mrb[0].mxu0 %v678
    %v2123 = vpop.f32.mrb[0].mxu0
    %v2124 = vadd.f32 %v1611, %v2123
    %v2125 = vpop.f32.mrb[0].mxu0
    %v2126 = vadd.f32 %v1613, %v2125
    %v2127 = vpop.f32.mrb[0].mxu0
    %v2128 = vadd.f32 %v1615, %v2127
    %v2129 = vpop.f32.mrb[0].mxu0
    %v2130 = vadd.f32 %v1617, %v2129
    %2131 = vmatprep.mubr.bf16.mxu0 %v685
    %2132 = vmatmul.mubr.bf16.gmra.mrb[0].mxu0 %v684
    %v2133 = vpop.f32.mrb[0].mxu0
    %v2134 = vadd.f32 %v1621, %v2133
    %v2135 = vpop.f32.mrb[0].mxu0
    %v2136 = vadd.f32 %v1623, %v2135
    %v2137 = vpop.f32.mrb[0].mxu0
    %v2138 = vadd.f32 %v1625, %v2137
    %v2139 = vpop.f32.mrb[0].mxu0
    %v2140 = vadd.f32 %v1627, %v2139
    %2141 = vmatprep.mubr.bf16.mxu0 %v691
    %2142 = vmatmul.mubr.bf16.gmra.mrb[0].mxu0 %v690
    %v2143 = vpop.f32.mrb[0].mxu0
    %v2144 = vadd.f32 %v1631, %v2143
    %v2145 = vpop.f32.mrb[0].mxu0
    %v2146 = vadd.f32 %v1633, %v2145
    %v2147 = vpop.f32.mrb[0].mxu0
    %v2148 = vadd.f32 %v1635, %v2147
    %v2149 = vpop.f32.mrb[0].mxu0
    %v2150 = vadd.f32 %v1637, %v2149
    %2151 = vmatprep.mubr.bf16.mxu0 %v697
    %2152 = vmatmul.mubr.bf16.gmra.mrb[0].mxu0 %v696
    %v2153 = vpop.f32.mrb[0].mxu0
    %v2154 = vadd.f32 %v1641, %v2153
    %v2155 = vpop.f32.mrb[0].mxu0
    %v2156 = vadd.f32 %v1643, %v2155
    %v2157 = vpop.f32.mrb[0].mxu0
    %v2158 = vadd.f32 %v1645, %v2157
    %v2159 = vpop.f32.mrb[0].mxu0
    %v2160 = vadd.f32 %v1647, %v2159
    %2161 = vmatprep.mubr.bf16.mxu0 %v703
    %2162 = vmatmul.mubr.bf16.gmra.mrb[0].mxu0 %v702
    %v2163 = vpop.f32.mrb[0].mxu0
    %v2164 = vadd.f32 %v1651, %v2163
    %v2165 = vpop.f32.mrb[0].mxu0
    %v2166 = vadd.f32 %v1653, %v2165
    %v2167 = vpop.f32.mrb[0].mxu0
    %v2168 = vadd.f32 %v1655, %v2167
    %v2169 = vpop.f32.mrb[0].mxu0
    %v2170 = vadd.f32 %v1657, %v2169
    %2171 = vmatprep.mubr.bf16.mxu0 %v709
    %2172 = vmatmul.mubr.bf16.gmra.mrb[0].mxu0 %v708
    %v2173 = vpop.f32.mrb[0].mxu0
    %v2174 = vadd.f32 %v1661, %v2173
    %v2175 = vpop.f32.mrb[0].mxu0
    %v2176 = vadd.f32 %v1663, %v2175
    %v2177 = vpop.f32.mrb[0].mxu0
    %v2178 = vadd.f32 %v1665, %v2177
    %v2179 = vpop.f32.mrb[0].mxu0
    %v2180 = vadd.f32 %v1667, %v2179
    %2181 = vmatprep.mubr.bf16.mxu0 %v715
    %2182 = vmatmul.mubr.bf16.gmra.mrb[0].mxu0 %v714
    %v2183 = vpop.f32.mrb[0].mxu0
    %v2184 = vadd.f32 %v1671, %v2183
    %v2185 = vpop.f32.mrb[0].mxu0
    %v2186 = vadd.f32 %v1673, %v2185
    %v2187 = vpop.f32.mrb[0].mxu0
    %v2188 = vadd.f32 %v1675, %v2187
    %v2189 = vpop.f32.mrb[0].mxu0
    %v2190 = vadd.f32 %v1677, %v2189
    %2191 = vmatprep.mubr.bf16.mxu0 %v721
    %2192 = vmatmul.mubr.bf16.gmra.mrb[0].mxu0 %v720
    %v2193 = vpop.f32.mrb[0].mxu0
    %v2194 = vadd.f32 %v1681, %v2193
    %v2195 = vpop.f32.mrb[0].mxu0
    %v2196 = vadd.f32 %v1683, %v2195
    %v2197 = vpop.f32.mrb[0].mxu0
    %v2198 = vadd.f32 %v1685, %v2197
    %v2199 = vpop.f32.mrb[0].mxu0
    %v2200 = vadd.f32 %v1687, %v2199
    %2201 = vmatprep.mubr.bf16.mxu0 %v727
    %2202 = vmatmul.mubr.bf16.gmra.mrb[0].mxu0 %v726
    %v2203 = vpop.f32.mrb[0].mxu0
    %v2204 = vadd.f32 %v1691, %v2203
    %v2205 = vpop.f32.mrb[0].mxu0
    %v2206 = vadd.f32 %v1693, %v2205
    %v2207 = vpop.f32.mrb[0].mxu0
    %v2208 = vadd.f32 %v1695, %v2207
    %v2209 = vpop.f32.mrb[0].mxu0
    %v2210 = vadd.f32 %v1697, %v2209
    %2211 = vmatprep.mubr.bf16.mxu0 %v733
    %2212 = vmatmul.mubr.bf16.gmra.mrb[0].mxu0 %v732
    %v2213 = vpop.f32.mrb[0].mxu0
    %v2214 = vadd.f32 %v1701, %v2213
    %v2215 = vpop.f32.mrb[0].mxu0
    %v2216 = vadd.f32 %v1703, %v2215
    %v2217 = vpop.f32.mrb[0].mxu0
    %v2218 = vadd.f32 %v1705, %v2217
    %v2219 = vpop.f32.mrb[0].mxu0
    %v2220 = vadd.f32 %v1707, %v2219
    %2221 = vmatprep.mubr.bf16.mxu0 %v739
    %2222 = vmatmul.mubr.bf16.gmra.mrb[0].mxu0 %v738
    %v2223 = vpop.f32.mrb[0].mxu0
    %v2224 = vadd.f32 %v1711, %v2223
    %v2225 = vpop.f32.mrb[0].mxu0
    %v2226 = vadd.f32 %v1713, %v2225
    %v2227 = vpop.f32.mrb[0].mxu0
    %v2228 = vadd.f32 %v1715, %v2227
    %v2229 = vpop.f32.mrb[0].mxu0
    %v2230 = vadd.f32 %v1717, %v2229
    %2231 = vmatprep.mubr.bf16.mxu0 %v745
    %2232 = vmatmul.mubr.bf16.gmra.mrb[0].mxu0 %v744
    %v2233 = vpop.f32.mrb[0].mxu0
    %v2234 = vadd.f32 %v1721, %v2233
    %v2235 = vpop.f32.mrb[0].mxu0
    %v2236 = vadd.f32 %v1723, %v2235
    %v2237 = vpop.f32.mrb[0].mxu0
    %v2238 = vadd.f32 %v1725, %v2237
    %v2239 = vpop.f32.mrb[0].mxu0
    %v2240 = vadd.f32 %v1727, %v2239
    %2241 = vmatprep.mubr.bf16.mxu0 %v751
    %2242 = vmatmul.mubr.bf16.gmra.mrb[0].mxu0 %v750
    %v2243 = vpop.f32.mrb[0].mxu0
    %v2244 = vadd.f32 %v1731, %v2243
    %v2245 = vpop.f32.mrb[0].mxu0
    %v2246 = vadd.f32 %v1733, %v2245
    %v2247 = vpop.f32.mrb[0].mxu0
    %v2248 = vadd.f32 %v1735, %v2247
    %v2249 = vpop.f32.mrb[0].mxu0
    %v2250 = vadd.f32 %v1737, %v2249
    %2251 = vmatprep.mubr.bf16.mxu0 %v757
    %2252 = vmatmul.mubr.bf16.gmra.mrb[0].mxu0 %v756
    %v2253 = vpop.f32.mrb[0].mxu0
    %v2254 = vadd.f32 %v1741, %v2253
    %v2255 = vpop.f32.mrb[0].mxu0
    %v2256 = vadd.f32 %v1743, %v2255
    %v2257 = vpop.f32.mrb[0].mxu0
    %v2258 = vadd.f32 %v1745, %v2257
    %v2259 = vpop.f32.mrb[0].mxu0
    %v2260 = vadd.f32 %v1747, %v2259
    %2261 = vmatprep.mubr.bf16.mxu0 %v763
    %2262 = vmatmul.mubr.bf16.gmra.mrb[0].mxu0 %v762
    %v2263 = vpop.f32.mrb[0].mxu0
    %v2264 = vadd.f32 %v1751, %v2263
    %v2265 = vpop.f32.mrb[0].mxu0
    %v2266 = vadd.f32 %v1753, %v2265
    %v2267 = vpop.f32.mrb[0].mxu0
    %v2268 = vadd.f32 %v1755, %v2267
    %v2269 = vpop.f32.mrb[0].mxu0
    %v2270 = vadd.f32 %v1757, %v2269
    %2271 = vmatprep.mubr.bf16.mxu0 %v769
    %2272 = vmatmul.mubr.bf16.gmra.mrb[0].mxu0 %v768
    %v2273 = vpop.f32.mrb[0].mxu0
    %v2274 = vadd.f32 %v1761, %v2273
    %v2275 = vpop.f32.mrb[0].mxu0
    %v2276 = vadd.f32 %v1763, %v2275
    %v2277 = vpop.f32.mrb[0].mxu0
    %v2278 = vadd.f32 %v1765, %v2277
    %v2279 = vpop.f32.mrb[0].mxu0
    %v2280 = vadd.f32 %v1767, %v2279
    %2281 = vmatprep.mubr.bf16.mxu0 %v775
    %2282 = vmatmul.mubr.bf16.gmra.mrb[0].mxu0 %v774
    %v2283 = vpop.f32.mrb[0].mxu0
    %v2284 = vadd.f32 %v1771, %v2283
    %v2285 = vpop.f32.mrb[0].mxu0
    %v2286 = vadd.f32 %v1773, %v2285
    %v2287 = vpop.f32.mrb[0].mxu0
    %v2288 = vadd.f32 %v1775, %v2287
    %v2289 = vpop.f32.mrb[0].mxu0
    %v2290 = vadd.f32 %v1777, %v2289
    %2291 = vmatprep.mubr.bf16.mxu0 %v781
    %2292 = vmatmul.mubr.bf16.gmra.mrb[0].mxu0 %v780
    %v2293 = vpop.f32.mrb[0].mxu0
    %v2294 = vadd.f32 %v1781, %v2293
    %v2295 = vpop.f32.mrb[0].mxu0
    %v2296 = vadd.f32 %v1783, %v2295
    %v2297 = vpop.f32.mrb[0].mxu0
    %v2298 = vadd.f32 %v1785, %v2297
    %v2299 = vpop.f32.mrb[0].mxu0
    %v2300 = vadd.f32 %v1787, %v2299
    %2301 = vmatprep.mubr.bf16.mxu0 %v787
    %2302 = vmatmul.mubr.bf16.gmra.mrb[0].mxu0 %v786
    %v2303 = vpop.f32.mrb[0].mxu0
    %v2304 = vadd.f32 %v1791, %v2303
    %v2305 = vpop.f32.mrb[0].mxu0
    %v2306 = vadd.f32 %v1793, %v2305
    %v2307 = vpop.f32.mrb[0].mxu0
    %v2308 = vadd.f32 %v1795, %v2307
    %v2309 = vpop.f32.mrb[0].mxu0
    %v2310 = vadd.f32 %v1797, %v2309
    %2311 = vmatprep.mubr.bf16.mxu0 %v793
    %2312 = vmatmul.mubr.bf16.gmra.mrb[0].mxu0 %v792
    %v2313 = vpop.f32.mrb[0].mxu0
    %v2314 = vadd.f32 %v1801, %v2313
    %v2315 = vpop.f32.mrb[0].mxu0
    %v2316 = vadd.f32 %v1803, %v2315
    %v2317 = vpop.f32.mrb[0].mxu0
    %v2318 = vadd.f32 %v1805, %v2317
    %v2319 = vpop.f32.mrb[0].mxu0
    %v2320 = vadd.f32 %v1807, %v2319
    %2321 = vmatprep.mubr.bf16.mxu0 %v799
    %2322 = vmatmul.mubr.bf16.gmra.mrb[0].mxu0 %v798
    %v2323 = vpop.f32.mrb[0].mxu0
    %v2324 = vadd.f32 %v1811, %v2323
    %v2325 = vpop.f32.mrb[0].mxu0
    %v2326 = vadd.f32 %v1813, %v2325
    %v2327 = vpop.f32.mrb[0].mxu0
    %v2328 = vadd.f32 %v1815, %v2327
    %v2329 = vpop.f32.mrb[0].mxu0
    %v2330 = vadd.f32 %v1817, %v2329
    %2331 = vmatprep.mubr.bf16.mxu0 %v805
    %2332 = vmatmul.mubr.bf16.gmra.mrb[0].mxu0 %v804
    %v2333 = vpop.f32.mrb[0].mxu0
    %v2334 = vadd.f32 %v1821, %v2333
    %v2335 = vpop.f32.mrb[0].mxu0
    %v2336 = vadd.f32 %v1823, %v2335
    %v2337 = vpop.f32.mrb[0].mxu0
    %v2338 = vadd.f32 %v1825, %v2337
    %v2339 = vpop.f32.mrb[0].mxu0
    %v2340 = vadd.f32 %v1827, %v2339
    %2341 = vmatprep.mubr.bf16.mxu0 %v811
    %2342 = vmatmul.mubr.bf16.gmra.mrb[0].mxu0 %v810
    %v2343 = vpop.f32.mrb[0].mxu0
    %v2344 = vadd.f32 %v1831, %v2343
    %v2345 = vpop.f32.mrb[0].mxu0
    %v2346 = vadd.f32 %v1833, %v2345
    %v2347 = vpop.f32.mrb[0].mxu0
    %v2348 = vadd.f32 %v1835, %v2347
    %v2349 = vpop.f32.mrb[0].mxu0
    %v2350 = vadd.f32 %v1837, %v2349
    %2351 = vmatprep.mubr.bf16.mxu0 %v817
    %2352 = vmatmul.mubr.bf16.gmra.mrb[0].mxu0 %v816
    %v2353 = vpop.f32.mrb[0].mxu0
    %v2354 = vadd.f32 %v1841, %v2353
    %v2355 = vpop.f32.mrb[0].mxu0
    %v2356 = vadd.f32 %v1843, %v2355
    %v2357 = vpop.f32.mrb[0].mxu0
    %v2358 = vadd.f32 %v1845, %v2357
    %v2359 = vpop.f32.mrb[0].mxu0
    %v2360 = vadd.f32 %v1847, %v2359
    %2361 = vmatprep.mubr.bf16.mxu0 %v823
    %2362 = vmatmul.mubr.bf16.gmra.mrb[0].mxu0 %v822
    %v2363 = vpop.f32.mrb[0].mxu0
    %v2364 = vadd.f32 %v1851, %v2363
    %v2365 = vpop.f32.mrb[0].mxu0
    %v2366 = vadd.f32 %v1853, %v2365
    %v2367 = vpop.f32.mrb[0].mxu0
    %v2368 = vadd.f32 %v1855, %v2367
    %v2369 = vpop.f32.mrb[0].mxu0
    %v2370 = vadd.f32 %v1857, %v2369
    %2371 = vmatprep.mubr.bf16.mxu0 %v829
    %2372 = vmatmul.mubr.bf16.gmra.mrb[0].mxu0 %v828
    %v2373 = vpop.f32.mrb[0].mxu0
    %v2374 = vadd.f32 %v1861, %v2373
    %v2375 = vpop.f32.mrb[0].mxu0
    %v2376 = vadd.f32 %v1863, %v2375
    %v2377 = vpop.f32.mrb[0].mxu0
    %v2378 = vadd.f32 %v1865, %v2377
    %v2379 = vpop.f32.mrb[0].mxu0
    %v2380 = vadd.f32 %v1867, %v2379
    %2381 = vmatprep.mubr.bf16.mxu0 %v835
    %2382 = vmatmul.mubr.bf16.gmra.mrb[0].mxu0 %v834
    %v2383 = vpop.f32.mrb[0].mxu0
    %v2384 = vadd.f32 %v1871, %v2383
    %v2385 = vpop.f32.mrb[0].mxu0
    %v2386 = vadd.f32 %v1873, %v2385
    %v2387 = vpop.f32.mrb[0].mxu0
    %v2388 = vadd.f32 %v1875, %v2387
    %v2389 = vpop.f32.mrb[0].mxu0
    %v2390 = vadd.f32 %v1877, %v2389
    %2391 = vmatprep.mubr.bf16.mxu0 %v841
    %2392 = vmatmul.mubr.bf16.gmra.mrb[0].mxu0 %v840
    %v2393 = vpop.f32.mrb[0].mxu0
    %v2394 = vadd.f32 %v1881, %v2393
    %v2395 = vpop.f32.mrb[0].mxu0
    %v2396 = vadd.f32 %v1883, %v2395
    %v2397 = vpop.f32.mrb[0].mxu0
    %v2398 = vadd.f32 %v1885, %v2397
    %v2399 = vpop.f32.mrb[0].mxu0
    %v2400 = vadd.f32 %v1887, %v2399
    %2401 = vmatprep.mubr.bf16.mxu0 %v847
    %2402 = vmatmul.mubr.bf16.gmra.mrb[0].mxu0 %v846
    %v2403 = vpop.f32.mrb[0].mxu0
    %v2404 = vadd.f32 %v1891, %v2403
    %v2405 = vpop.f32.mrb[0].mxu0
    %v2406 = vadd.f32 %v1893, %v2405
    %v2407 = vpop.f32.mrb[0].mxu0
    %v2408 = vadd.f32 %v1895, %v2407
    %v2409 = vpop.f32.mrb[0].mxu0
    %v2410 = vadd.f32 %v1897, %v2409
    %2411 = vmatprep.mubr.bf16.mxu0 %v853
    %2412 = vmatmul.mubr.bf16.gmra.mrb[0].mxu0 %v852
    %v2413 = vpop.f32.mrb[0].mxu0
    %v2414 = vadd.f32 %v1901, %v2413
    %v2415 = vpop.f32.mrb[0].mxu0
    %v2416 = vadd.f32 %v1903, %v2415
    %v2417 = vpop.f32.mrb[0].mxu0
    %v2418 = vadd.f32 %v1905, %v2417
    %v2419 = vpop.f32.mrb[0].mxu0
    %v2420 = vadd.f32 %v1907, %v2419
    %2421 = vmatprep.mubr.bf16.mxu0 %v859
    %2422 = vmatmul.mubr.bf16.gmra.mrb[0].mxu0 %v858
    %v2423 = vpop.f32.mrb[0].mxu0
    %v2424 = vadd.f32 %v1911, %v2423
    %v2425 = vpop.f32.mrb[0].mxu0
    %v2426 = vadd.f32 %v1913, %v2425
    %v2427 = vpop.f32.mrb[0].mxu0
    %v2428 = vadd.f32 %v1915, %v2427
    %v2429 = vpop.f32.mrb[0].mxu0
    %v2430 = vadd.f32 %v1917, %v2429
    %2431 = vmatprep.mubr.bf16.mxu0 %v865
    %2432 = vmatmul.mubr.bf16.gmra.mrb[0].mxu0 %v864
    %v2433 = vpop.f32.mrb[0].mxu0
    %v2434 = vadd.f32 %v1921, %v2433
    %v2435 = vpop.f32.mrb[0].mxu0
    %v2436 = vadd.f32 %v1923, %v2435
    %v2437 = vpop.f32.mrb[0].mxu0
    %v2438 = vadd.f32 %v1925, %v2437
    %v2439 = vpop.f32.mrb[0].mxu0
    %v2440 = vadd.f32 %v1927, %v2439
    %2441 = vmatprep.mubr.bf16.mxu0 %v871
    %2442 = vmatmul.mubr.bf16.gmra.mrb[0].mxu0 %v870
    %v2443 = vpop.f32.mrb[0].mxu0
    %v2444 = vadd.f32 %v1931, %v2443
    %v2445 = vpop.f32.mrb[0].mxu0
    %v2446 = vadd.f32 %v1933, %v2445
    %v2447 = vpop.f32.mrb[0].mxu0
    %v2448 = vadd.f32 %v1935, %v2447
    %v2449 = vpop.f32.mrb[0].mxu0
    %v2450 = vadd.f32 %v1937, %v2449
    %2451 = vmatprep.mubr.bf16.mxu0 %v877
    %2452 = vmatmul.mubr.bf16.gmra.mrb[0].mxu0 %v876
    %v2453 = vpop.f32.mrb[0].mxu0
    %v2454 = vadd.f32 %v1941, %v2453
    %v2455 = vpop.f32.mrb[0].mxu0
    %v2456 = vadd.f32 %v1943, %v2455
    %v2457 = vpop.f32.mrb[0].mxu0
    %v2458 = vadd.f32 %v1945, %v2457
    %v2459 = vpop.f32.mrb[0].mxu0
    %v2460 = vadd.f32 %v1947, %v2459
    %2461 = vmatprep.mubr.bf16.mxu0 %v883
    %2462 = vmatmul.mubr.bf16.gmra.mrb[0].mxu0 %v882
    %v2463 = vpop.f32.mrb[0].mxu0
    %v2464 = vadd.f32 %v1951, %v2463
    %v2465 = vpop.f32.mrb[0].mxu0
    %v2466 = vadd.f32 %v1953, %v2465
    %v2467 = vpop.f32.mrb[0].mxu0
    %v2468 = vadd.f32 %v1955, %v2467
    %v2469 = vpop.f32.mrb[0].mxu0
    %v2470 = vadd.f32 %v1957, %v2469
    %2471 = vmatprep.mubr.bf16.mxu0 %v889
    %2472 = vmatmul.mubr.bf16.gmra.mrb[0].mxu0 %v888
    %v2473 = vpop.f32.mrb[0].mxu0
    %v2474 = vadd.f32 %v1961, %v2473
    %v2475 = vpop.f32.mrb[0].mxu0
    %v2476 = vadd.f32 %v1963, %v2475
    %v2477 = vpop.f32.mrb[0].mxu0
    %v2478 = vadd.f32 %v1965, %v2477
    %v2479 = vpop.f32.mrb[0].mxu0
    %v2480 = vadd.f32 %v1967, %v2479
    %2481 = vmatprep.mubr.bf16.mxu0 %v895
    %2482 = vmatmul.mubr.bf16.gmra.mrb[0].mxu0 %v894
    %v2483 = vpop.f32.mrb[0].mxu0
    %v2484 = vadd.f32 %v1971, %v2483
    %v2485 = vpop.f32.mrb[0].mxu0
    %v2486 = vadd.f32 %v1973, %v2485
    %v2487 = vpop.f32.mrb[0].mxu0
    %v2488 = vadd.f32 %v1975, %v2487
    %v2489 = vpop.f32.mrb[0].mxu0
    %v2490 = vadd.f32 %v1977, %v2489
    %2491 = vmatprep.mubr.bf16.mxu0 %v901
    %2492 = vmatmul.mubr.bf16.gmra.mrb[0].mxu0 %v900
    %v2493 = vpop.f32.mrb[0].mxu0
    %v2494 = vadd.f32 %v1981, %v2493
    %v2495 = vpop.f32.mrb[0].mxu0
    %v2496 = vadd.f32 %v1983, %v2495
    %v2497 = vpop.f32.mrb[0].mxu0
    %v2498 = vadd.f32 %v1985, %v2497
    %v2499 = vpop.f32.mrb[0].mxu0
    %v2500 = vadd.f32 %v1987, %v2499
    %2501 = vmatprep.mubr.bf16.mxu0 %v907
    %2502 = vmatmul.mubr.bf16.gmra.mrb[0].mxu0 %v906
    %v2503 = vpop.f32.mrb[0].mxu0
    %v2504 = vadd.f32 %v1991, %v2503
    %v2505 = vpop.f32.mrb[0].mxu0
    %v2506 = vadd.f32 %v1993, %v2505
    %v2507 = vpop.f32.mrb[0].mxu0
    %v2508 = vadd.f32 %v1995, %v2507
    %v2509 = vpop.f32.mrb[0].mxu0
    %v2510 = vadd.f32 %v1997, %v2509
    %2511 = vmatprep.mubr.bf16.mxu0 %v913
    %2512 = vmatmul.mubr.bf16.gmra.mrb[0].mxu0 %v912
    %v2513 = vpop.f32.mrb[0].mxu0
    %v2514 = vadd.f32 %v2001, %v2513
    %v2515 = vpop.f32.mrb[0].mxu0
    %v2516 = vadd.f32 %v2003, %v2515
    %v2517 = vpop.f32.mrb[0].mxu0
    %v2518 = vadd.f32 %v2005, %v2517
    %v2519 = vpop.f32.mrb[0].mxu0
    %v2520 = vadd.f32 %v2007, %v2519
    %2521 = vmatprep.mubr.bf16.mxu0 %v919
    %2522 = vmatmul.mubr.bf16.gmra.mrb[0].mxu0 %v918
    %v2523 = vpop.f32.mrb[0].mxu0
    %v2524 = vadd.f32 %v2011, %v2523
    %v2525 = vpop.f32.mrb[0].mxu0
    %v2526 = vadd.f32 %v2013, %v2525
    %v2527 = vpop.f32.mrb[0].mxu0
    %v2528 = vadd.f32 %v2015, %v2527
    %v2529 = vpop.f32.mrb[0].mxu0
    %v2530 = vadd.f32 %v2017, %v2529
    %2531 = vmatprep.mubr.bf16.mxu0 %v925
    %2532 = vmatmul.mubr.bf16.gmra.mrb[0].mxu0 %v924
    %v2533 = vpop.f32.mrb[0].mxu0
    %v2534 = vadd.f32 %v2021, %v2533
    %v2535 = vpop.f32.mrb[0].mxu0
    %v2536 = vadd.f32 %v2023, %v2535
    %v2537 = vpop.f32.mrb[0].mxu0
    %v2538 = vadd.f32 %v2025, %v2537
    %v2539 = vpop.f32.mrb[0].mxu0
    %v2540 = vadd.f32 %v2027, %v2539
    %2541 = vdwg.mxu0
    %2542 = vmatprep.subr.bf16.mxu0 %v1389
    %2543 = vmatpush1.bf16.msra.mxu0 %v1388
    %2544 = vmatprep.subr.bf16.mxu0 %v1391
    %2545 = vmatpush1.bf16.msra.mxu0 %v1390
    %2546 = vmatprep.subr.bf16.mxu0 %v1393
    %2547 = vmatpush1.bf16.msra.mxu0 %v1392
    %2548 = vmatprep.subr.bf16.mxu0 %v1395
    %2549 = vmatpush1.bf16.msra.mxu0 %v1394
    %2550 = vmatprep.subr.bf16.mxu0 %v1397
    %2551 = vmatpush1.bf16.msra.mxu0 %v1396
    %2552 = vmatprep.subr.bf16.mxu0 %v1399
    %2553 = vmatpush1.bf16.msra.mxu0 %v1398
    %2554 = vmatprep.subr.bf16.mxu0 %v1401
    %2555 = vmatpush1.bf16.msra.mxu0 %v1400
    %2556 = vmatprep.subr.bf16.mxu0 %v1403
    %2557 = vmatpush1.bf16.msra.mxu0 %v1402
    %2558 = vmatprep.subr.bf16.mxu0 %v1405
    %2559 = vmatpush1.bf16.msra.mxu0 %v1404
    %2560 = vmatprep.subr.bf16.mxu0 %v1407
    %2561 = vmatpush1.bf16.msra.mxu0 %v1406
    %2562 = vmatprep.subr.bf16.mxu0 %v1409
    %2563 = vmatpush1.bf16.msra.mxu0 %v1408
    %2564 = vmatprep.subr.bf16.mxu0 %v1411
    %2565 = vmatpush1.bf16.msra.mxu0 %v1410
    %2566 = vmatprep.subr.bf16.mxu0 %v1413
    %2567 = vmatpush1.bf16.msra.mxu0 %v1412
    %2568 = vmatprep.subr.bf16.mxu0 %v1415
    %2569 = vmatpush1.bf16.msra.mxu0 %v1414
    %2570 = vmatprep.subr.bf16.mxu0 %v1417
    %2571 = vmatpush1.bf16.msra.mxu0 %v1416
    %2572 = vmatprep.subr.bf16.mxu0 %v1419
    %2573 = vmatpush1.bf16.msra.mxu0 %v1418
    %2574 = vmatprep.mubr.bf16.mxu0 %v645
    %2575 = vmatmul.mubr.bf16.gmra.mrb[0].mxu0 %v644
    %v2576 = vpop.f32.mrb[0].mxu0
    %v2577 = vadd.f32 %v2064, %v2576
    %v2578 = vpop.f32.mrb[0].mxu0
    %v2579 = vadd.f32 %v2066, %v2578
    %v2580 = vpop.f32.mrb[0].mxu0
    %v2581 = vadd.f32 %v2068, %v2580
    %v2582 = vpop.f32.mrb[0].mxu0
    %v2583 = vadd.f32 %v2070, %v2582
    %2584 = vmatprep.mubr.bf16.mxu0 %v651
    %2585 = vmatmul.mubr.bf16.gmra.mrb[0].mxu0 %v650
    %v2586 = vpop.f32.mrb[0].mxu0
    %v2587 = vadd.f32 %v2074, %v2586
    %v2588 = vpop.f32.mrb[0].mxu0
    %v2589 = vadd.f32 %v2076, %v2588
    %v2590 = vpop.f32.mrb[0].mxu0
    %v2591 = vadd.f32 %v2078, %v2590
    %v2592 = vpop.f32.mrb[0].mxu0
    %v2593 = vadd.f32 %v2080, %v2592
    %2594 = vmatprep.mubr.bf16.mxu0 %v657
    %2595 = vmatmul.mubr.bf16.gmra.mrb[0].mxu0 %v656
    %v2596 = vpop.f32.mrb[0].mxu0
    %v2597 = vadd.f32 %v2084, %v2596
    %v2598 = vpop.f32.mrb[0].mxu0
    %v2599 = vadd.f32 %v2086, %v2598
    %v2600 = vpop.f32.mrb[0].mxu0
    %v2601 = vadd.f32 %v2088, %v2600
    %v2602 = vpop.f32.mrb[0].mxu0
    %v2603 = vadd.f32 %v2090, %v2602
    %2604 = vmatprep.mubr.bf16.mxu0 %v663
    %2605 = vmatmul.mubr.bf16.gmra.mrb[0].mxu0 %v662
    %v2606 = vpop.f32.mrb[0].mxu0
    %v2607 = vadd.f32 %v2094, %v2606
    %v2608 = vpop.f32.mrb[0].mxu0
    %v2609 = vadd.f32 %v2096, %v2608
    %v2610 = vpop.f32.mrb[0].mxu0
    %v2611 = vadd.f32 %v2098, %v2610
    %v2612 = vpop.f32.mrb[0].mxu0
    %v2613 = vadd.f32 %v2100, %v2612
    %2614 = vmatprep.mubr.bf16.mxu0 %v669
    %2615 = vmatmul.mubr.bf16.gmra.mrb[0].mxu0 %v668
    %v2616 = vpop.f32.mrb[0].mxu0
    %v2617 = vadd.f32 %v2104, %v2616
    %v2618 = vpop.f32.mrb[0].mxu0
    %v2619 = vadd.f32 %v2106, %v2618
    %v2620 = vpop.f32.mrb[0].mxu0
    %v2621 = vadd.f32 %v2108, %v2620
    %v2622 = vpop.f32.mrb[0].mxu0
    %v2623 = vadd.f32 %v2110, %v2622
    %2624 = vmatprep.mubr.bf16.mxu0 %v675
    %2625 = vmatmul.mubr.bf16.gmra.mrb[0].mxu0 %v674
    %v2626 = vpop.f32.mrb[0].mxu0
    %v2627 = vadd.f32 %v2114, %v2626
    %v2628 = vpop.f32.mrb[0].mxu0
    %v2629 = vadd.f32 %v2116, %v2628
    %v2630 = vpop.f32.mrb[0].mxu0
    %v2631 = vadd.f32 %v2118, %v2630
    %v2632 = vpop.f32.mrb[0].mxu0
    %v2633 = vadd.f32 %v2120, %v2632
    %2634 = vmatprep.mubr.bf16.mxu0 %v681
    %2635 = vmatmul.mubr.bf16.gmra.mrb[0].mxu0 %v680
    %v2636 = vpop.f32.mrb[0].mxu0
    %v2637 = vadd.f32 %v2124, %v2636
    %v2638 = vpop.f32.mrb[0].mxu0
    %v2639 = vadd.f32 %v2126, %v2638
    %v2640 = vpop.f32.mrb[0].mxu0
    %v2641 = vadd.f32 %v2128, %v2640
    %v2642 = vpop.f32.mrb[0].mxu0
    %v2643 = vadd.f32 %v2130, %v2642
    %2644 = vmatprep.mubr.bf16.mxu0 %v687
    %2645 = vmatmul.mubr.bf16.gmra.mrb[0].mxu0 %v686
    %v2646 = vpop.f32.mrb[0].mxu0
    %v2647 = vadd.f32 %v2134, %v2646
    %v2648 = vpop.f32.mrb[0].mxu0
    %v2649 = vadd.f32 %v2136, %v2648
    %v2650 = vpop.f32.mrb[0].mxu0
    %v2651 = vadd.f32 %v2138, %v2650
    %v2652 = vpop.f32.mrb[0].mxu0
    %v2653 = vadd.f32 %v2140, %v2652
    %2654 = vmatprep.mubr.bf16.mxu0 %v693
    %2655 = vmatmul.mubr.bf16.gmra.mrb[0].mxu0 %v692
    %v2656 = vpop.f32.mrb[0].mxu0
    %v2657 = vadd.f32 %v2144, %v2656
    %v2658 = vpop.f32.mrb[0].mxu0
    %v2659 = vadd.f32 %v2146, %v2658
    %v2660 = vpop.f32.mrb[0].mxu0
    %v2661 = vadd.f32 %v2148, %v2660
    %v2662 = vpop.f32.mrb[0].mxu0
    %v2663 = vadd.f32 %v2150, %v2662
    %2664 = vmatprep.mubr.bf16.mxu0 %v699
    %2665 = vmatmul.mubr.bf16.gmra.mrb[0].mxu0 %v698
    %v2666 = vpop.f32.mrb[0].mxu0
    %v2667 = vadd.f32 %v2154, %v2666
    %v2668 = vpop.f32.mrb[0].mxu0
    %v2669 = vadd.f32 %v2156, %v2668
    %v2670 = vpop.f32.mrb[0].mxu0
    %v2671 = vadd.f32 %v2158, %v2670
    %v2672 = vpop.f32.mrb[0].mxu0
    %v2673 = vadd.f32 %v2160, %v2672
    %2674 = vmatprep.mubr.bf16.mxu0 %v705
    %2675 = vmatmul.mubr.bf16.gmra.mrb[0].mxu0 %v704
    %v2676 = vpop.f32.mrb[0].mxu0
    %v2677 = vadd.f32 %v2164, %v2676
    %v2678 = vpop.f32.mrb[0].mxu0
    %v2679 = vadd.f32 %v2166, %v2678
    %v2680 = vpop.f32.mrb[0].mxu0
    %v2681 = vadd.f32 %v2168, %v2680
    %v2682 = vpop.f32.mrb[0].mxu0
    %v2683 = vadd.f32 %v2170, %v2682
    %2684 = vmatprep.mubr.bf16.mxu0 %v711
    %2685 = vmatmul.mubr.bf16.gmra.mrb[0].mxu0 %v710
    %v2686 = vpop.f32.mrb[0].mxu0
    %v2687 = vadd.f32 %v2174, %v2686
    %v2688 = vpop.f32.mrb[0].mxu0
    %v2689 = vadd.f32 %v2176, %v2688
    %v2690 = vpop.f32.mrb[0].mxu0
    %v2691 = vadd.f32 %v2178, %v2690
    %v2692 = vpop.f32.mrb[0].mxu0
    %v2693 = vadd.f32 %v2180, %v2692
    %2694 = vmatprep.mubr.bf16.mxu0 %v717
    %2695 = vmatmul.mubr.bf16.gmra.mrb[0].mxu0 %v716
    %v2696 = vpop.f32.mrb[0].mxu0
    %v2697 = vadd.f32 %v2184, %v2696
    %v2698 = vpop.f32.mrb[0].mxu0
    %v2699 = vadd.f32 %v2186, %v2698
    %v2700 = vpop.f32.mrb[0].mxu0
    %v2701 = vadd.f32 %v2188, %v2700
    %v2702 = vpop.f32.mrb[0].mxu0
    %v2703 = vadd.f32 %v2190, %v2702
    %2704 = vmatprep.mubr.bf16.mxu0 %v723
    %2705 = vmatmul.mubr.bf16.gmra.mrb[0].mxu0 %v722
    %v2706 = vpop.f32.mrb[0].mxu0
    %v2707 = vadd.f32 %v2194, %v2706
    %v2708 = vpop.f32.mrb[0].mxu0
    %v2709 = vadd.f32 %v2196, %v2708
    %v2710 = vpop.f32.mrb[0].mxu0
    %v2711 = vadd.f32 %v2198, %v2710
    %v2712 = vpop.f32.mrb[0].mxu0
    %v2713 = vadd.f32 %v2200, %v2712
    %2714 = vmatprep.mubr.bf16.mxu0 %v729
    %2715 = vmatmul.mubr.bf16.gmra.mrb[0].mxu0 %v728
    %v2716 = vpop.f32.mrb[0].mxu0
    %v2717 = vadd.f32 %v2204, %v2716
    %v2718 = vpop.f32.mrb[0].mxu0
    %v2719 = vadd.f32 %v2206, %v2718
    %v2720 = vpop.f32.mrb[0].mxu0
    %v2721 = vadd.f32 %v2208, %v2720
    %v2722 = vpop.f32.mrb[0].mxu0
    %v2723 = vadd.f32 %v2210, %v2722
    %2724 = vmatprep.mubr.bf16.mxu0 %v735
    %2725 = vmatmul.mubr.bf16.gmra.mrb[0].mxu0 %v734
    %v2726 = vpop.f32.mrb[0].mxu0
    %v2727 = vadd.f32 %v2214, %v2726
    %v2728 = vpop.f32.mrb[0].mxu0
    %v2729 = vadd.f32 %v2216, %v2728
    %v2730 = vpop.f32.mrb[0].mxu0
    %v2731 = vadd.f32 %v2218, %v2730
    %v2732 = vpop.f32.mrb[0].mxu0
    %v2733 = vadd.f32 %v2220, %v2732
    %2734 = vmatprep.mubr.bf16.mxu0 %v741
    %2735 = vmatmul.mubr.bf16.gmra.mrb[0].mxu0 %v740
    %v2736 = vpop.f32.mrb[0].mxu0
    %v2737 = vadd.f32 %v2224, %v2736
    %v2738 = vpop.f32.mrb[0].mxu0
    %v2739 = vadd.f32 %v2226, %v2738
    %v2740 = vpop.f32.mrb[0].mxu0
    %v2741 = vadd.f32 %v2228, %v2740
    %v2742 = vpop.f32.mrb[0].mxu0
    %v2743 = vadd.f32 %v2230, %v2742
    %2744 = vmatprep.mubr.bf16.mxu0 %v747
    %2745 = vmatmul.mubr.bf16.gmra.mrb[0].mxu0 %v746
    %v2746 = vpop.f32.mrb[0].mxu0
    %v2747 = vadd.f32 %v2234, %v2746
    %v2748 = vpop.f32.mrb[0].mxu0
    %v2749 = vadd.f32 %v2236, %v2748
    %v2750 = vpop.f32.mrb[0].mxu0
    %v2751 = vadd.f32 %v2238, %v2750
    %v2752 = vpop.f32.mrb[0].mxu0
    %v2753 = vadd.f32 %v2240, %v2752
    %2754 = vmatprep.mubr.bf16.mxu0 %v753
    %2755 = vmatmul.mubr.bf16.gmra.mrb[0].mxu0 %v752
    %v2756 = vpop.f32.mrb[0].mxu0
    %v2757 = vadd.f32 %v2244, %v2756
    %v2758 = vpop.f32.mrb[0].mxu0
    %v2759 = vadd.f32 %v2246, %v2758
    %v2760 = vpop.f32.mrb[0].mxu0
    %v2761 = vadd.f32 %v2248, %v2760
    %v2762 = vpop.f32.mrb[0].mxu0
    %v2763 = vadd.f32 %v2250, %v2762
    %2764 = vmatprep.mubr.bf16.mxu0 %v759
    %2765 = vmatmul.mubr.bf16.gmra.mrb[0].mxu0 %v758
    %v2766 = vpop.f32.mrb[0].mxu0
    %v2767 = vadd.f32 %v2254, %v2766
    %v2768 = vpop.f32.mrb[0].mxu0
    %v2769 = vadd.f32 %v2256, %v2768
    %v2770 = vpop.f32.mrb[0].mxu0
    %v2771 = vadd.f32 %v2258, %v2770
    %v2772 = vpop.f32.mrb[0].mxu0
    %v2773 = vadd.f32 %v2260, %v2772
    %2774 = vmatprep.mubr.bf16.mxu0 %v765
    %2775 = vmatmul.mubr.bf16.gmra.mrb[0].mxu0 %v764
    %v2776 = vpop.f32.mrb[0].mxu0
    %v2777 = vadd.f32 %v2264, %v2776
    %v2778 = vpop.f32.mrb[0].mxu0
    %v2779 = vadd.f32 %v2266, %v2778
    %v2780 = vpop.f32.mrb[0].mxu0
    %v2781 = vadd.f32 %v2268, %v2780
    %v2782 = vpop.f32.mrb[0].mxu0
    %v2783 = vadd.f32 %v2270, %v2782
    %2784 = vmatprep.mubr.bf16.mxu0 %v771
    %2785 = vmatmul.mubr.bf16.gmra.mrb[0].mxu0 %v770
    %v2786 = vpop.f32.mrb[0].mxu0
    %v2787 = vadd.f32 %v2274, %v2786
    %v2788 = vpop.f32.mrb[0].mxu0
    %v2789 = vadd.f32 %v2276, %v2788
    %v2790 = vpop.f32.mrb[0].mxu0
    %v2791 = vadd.f32 %v2278, %v2790
    %v2792 = vpop.f32.mrb[0].mxu0
    %v2793 = vadd.f32 %v2280, %v2792
    %2794 = vmatprep.mubr.bf16.mxu0 %v777
    %2795 = vmatmul.mubr.bf16.gmra.mrb[0].mxu0 %v776
    %v2796 = vpop.f32.mrb[0].mxu0
    %v2797 = vadd.f32 %v2284, %v2796
    %v2798 = vpop.f32.mrb[0].mxu0
    %v2799 = vadd.f32 %v2286, %v2798
    %v2800 = vpop.f32.mrb[0].mxu0
    %v2801 = vadd.f32 %v2288, %v2800
    %v2802 = vpop.f32.mrb[0].mxu0
    %v2803 = vadd.f32 %v2290, %v2802
    %2804 = vmatprep.mubr.bf16.mxu0 %v783
    %2805 = vmatmul.mubr.bf16.gmra.mrb[0].mxu0 %v782
    %v2806 = vpop.f32.mrb[0].mxu0
    %v2807 = vadd.f32 %v2294, %v2806
    %v2808 = vpop.f32.mrb[0].mxu0
    %v2809 = vadd.f32 %v2296, %v2808
    %v2810 = vpop.f32.mrb[0].mxu0
    %v2811 = vadd.f32 %v2298, %v2810
    %v2812 = vpop.f32.mrb[0].mxu0
    %v2813 = vadd.f32 %v2300, %v2812
    %2814 = vmatprep.mubr.bf16.mxu0 %v789
    %2815 = vmatmul.mubr.bf16.gmra.mrb[0].mxu0 %v788
    %v2816 = vpop.f32.mrb[0].mxu0
    %v2817 = vadd.f32 %v2304, %v2816
    %v2818 = vpop.f32.mrb[0].mxu0
    %v2819 = vadd.f32 %v2306, %v2818
    %v2820 = vpop.f32.mrb[0].mxu0
    %v2821 = vadd.f32 %v2308, %v2820
    %v2822 = vpop.f32.mrb[0].mxu0
    %v2823 = vadd.f32 %v2310, %v2822
    %2824 = vmatprep.mubr.bf16.mxu0 %v795
    %2825 = vmatmul.mubr.bf16.gmra.mrb[0].mxu0 %v794
    %v2826 = vpop.f32.mrb[0].mxu0
    %v2827 = vadd.f32 %v2314, %v2826
    %v2828 = vpop.f32.mrb[0].mxu0
    %v2829 = vadd.f32 %v2316, %v2828
    %v2830 = vpop.f32.mrb[0].mxu0
    %v2831 = vadd.f32 %v2318, %v2830
    %v2832 = vpop.f32.mrb[0].mxu0
    %v2833 = vadd.f32 %v2320, %v2832
    %2834 = vmatprep.mubr.bf16.mxu0 %v801
    %2835 = vmatmul.mubr.bf16.gmra.mrb[0].mxu0 %v800
    %v2836 = vpop.f32.mrb[0].mxu0
    %v2837 = vadd.f32 %v2324, %v2836
    %v2838 = vpop.f32.mrb[0].mxu0
    %v2839 = vadd.f32 %v2326, %v2838
    %v2840 = vpop.f32.mrb[0].mxu0
    %v2841 = vadd.f32 %v2328, %v2840
    %v2842 = vpop.f32.mrb[0].mxu0
    %v2843 = vadd.f32 %v2330, %v2842
    %2844 = vmatprep.mubr.bf16.mxu0 %v807
    %2845 = vmatmul.mubr.bf16.gmra.mrb[0].mxu0 %v806
    %v2846 = vpop.f32.mrb[0].mxu0
    %v2847 = vadd.f32 %v2334, %v2846
    %v2848 = vpop.f32.mrb[0].mxu0
    %v2849 = vadd.f32 %v2336, %v2848
    %v2850 = vpop.f32.mrb[0].mxu0
    %v2851 = vadd.f32 %v2338, %v2850
    %v2852 = vpop.f32.mrb[0].mxu0
    %v2853 = vadd.f32 %v2340, %v2852
    %2854 = vmatprep.mubr.bf16.mxu0 %v813
    %2855 = vmatmul.mubr.bf16.gmra.mrb[0].mxu0 %v812
    %v2856 = vpop.f32.mrb[0].mxu0
    %v2857 = vadd.f32 %v2344, %v2856
    %v2858 = vpop.f32.mrb[0].mxu0
    %v2859 = vadd.f32 %v2346, %v2858
    %v2860 = vpop.f32.mrb[0].mxu0
    %v2861 = vadd.f32 %v2348, %v2860
    %v2862 = vpop.f32.mrb[0].mxu0
    %v2863 = vadd.f32 %v2350, %v2862
    %2864 = vmatprep.mubr.bf16.mxu0 %v819
    %2865 = vmatmul.mubr.bf16.gmra.mrb[0].mxu0 %v818
    %v2866 = vpop.f32.mrb[0].mxu0
    %v2867 = vadd.f32 %v2354, %v2866
    %v2868 = vpop.f32.mrb[0].mxu0
    %v2869 = vadd.f32 %v2356, %v2868
    %v2870 = vpop.f32.mrb[0].mxu0
    %v2871 = vadd.f32 %v2358, %v2870
    %v2872 = vpop.f32.mrb[0].mxu0
    %v2873 = vadd.f32 %v2360, %v2872
    %2874 = vmatprep.mubr.bf16.mxu0 %v825
    %2875 = vmatmul.mubr.bf16.gmra.mrb[0].mxu0 %v824
    %v2876 = vpop.f32.mrb[0].mxu0
    %v2877 = vadd.f32 %v2364, %v2876
    %v2878 = vpop.f32.mrb[0].mxu0
    %v2879 = vadd.f32 %v2366, %v2878
    %v2880 = vpop.f32.mrb[0].mxu0
    %v2881 = vadd.f32 %v2368, %v2880
    %v2882 = vpop.f32.mrb[0].mxu0
    %v2883 = vadd.f32 %v2370, %v2882
    %2884 = vmatprep.mubr.bf16.mxu0 %v831
    %2885 = vmatmul.mubr.bf16.gmra.mrb[0].mxu0 %v830
    %v2886 = vpop.f32.mrb[0].mxu0
    %v2887 = vadd.f32 %v2374, %v2886
    %v2888 = vpop.f32.mrb[0].mxu0
    %v2889 = vadd.f32 %v2376, %v2888
    %v2890 = vpop.f32.mrb[0].mxu0
    %v2891 = vadd.f32 %v2378, %v2890
    %v2892 = vpop.f32.mrb[0].mxu0
    %v2893 = vadd.f32 %v2380, %v2892
    %2894 = vmatprep.mubr.bf16.mxu0 %v837
    %2895 = vmatmul.mubr.bf16.gmra.mrb[0].mxu0 %v836
    %v2896 = vpop.f32.mrb[0].mxu0
    %v2897 = vadd.f32 %v2384, %v2896
    %v2898 = vpop.f32.mrb[0].mxu0
    %v2899 = vadd.f32 %v2386, %v2898
    %v2900 = vpop.f32.mrb[0].mxu0
    %v2901 = vadd.f32 %v2388, %v2900
    %v2902 = vpop.f32.mrb[0].mxu0
    %v2903 = vadd.f32 %v2390, %v2902
    %2904 = vmatprep.mubr.bf16.mxu0 %v843
    %2905 = vmatmul.mubr.bf16.gmra.mrb[0].mxu0 %v842
    %v2906 = vpop.f32.mrb[0].mxu0
    %v2907 = vadd.f32 %v2394, %v2906
    %v2908 = vpop.f32.mrb[0].mxu0
    %v2909 = vadd.f32 %v2396, %v2908
    %v2910 = vpop.f32.mrb[0].mxu0
    %v2911 = vadd.f32 %v2398, %v2910
    %v2912 = vpop.f32.mrb[0].mxu0
    %v2913 = vadd.f32 %v2400, %v2912
    %2914 = vmatprep.mubr.bf16.mxu0 %v849
    %2915 = vmatmul.mubr.bf16.gmra.mrb[0].mxu0 %v848
    %v2916 = vpop.f32.mrb[0].mxu0
    %v2917 = vadd.f32 %v2404, %v2916
    %v2918 = vpop.f32.mrb[0].mxu0
    %v2919 = vadd.f32 %v2406, %v2918
    %v2920 = vpop.f32.mrb[0].mxu0
    %v2921 = vadd.f32 %v2408, %v2920
    %v2922 = vpop.f32.mrb[0].mxu0
    %v2923 = vadd.f32 %v2410, %v2922
    %2924 = vmatprep.mubr.bf16.mxu0 %v855
    %2925 = vmatmul.mubr.bf16.gmra.mrb[0].mxu0 %v854
    %v2926 = vpop.f32.mrb[0].mxu0
    %v2927 = vadd.f32 %v2414, %v2926
    %v2928 = vpop.f32.mrb[0].mxu0
    %v2929 = vadd.f32 %v2416, %v2928
    %v2930 = vpop.f32.mrb[0].mxu0
    %v2931 = vadd.f32 %v2418, %v2930
    %v2932 = vpop.f32.mrb[0].mxu0
    %v2933 = vadd.f32 %v2420, %v2932
    %2934 = vmatprep.mubr.bf16.mxu0 %v861
    %2935 = vmatmul.mubr.bf16.gmra.mrb[0].mxu0 %v860
    %v2936 = vpop.f32.mrb[0].mxu0
    %v2937 = vadd.f32 %v2424, %v2936
    %v2938 = vpop.f32.mrb[0].mxu0
    %v2939 = vadd.f32 %v2426, %v2938
    %v2940 = vpop.f32.mrb[0].mxu0
    %v2941 = vadd.f32 %v2428, %v2940
    %v2942 = vpop.f32.mrb[0].mxu0
    %v2943 = vadd.f32 %v2430, %v2942
    %2944 = vmatprep.mubr.bf16.mxu0 %v867
    %2945 = vmatmul.mubr.bf16.gmra.mrb[0].mxu0 %v866
    %v2946 = vpop.f32.mrb[0].mxu0
    %v2947 = vadd.f32 %v2434, %v2946
    %v2948 = vpop.f32.mrb[0].mxu0
    %v2949 = vadd.f32 %v2436, %v2948
    %v2950 = vpop.f32.mrb[0].mxu0
    %v2951 = vadd.f32 %v2438, %v2950
    %v2952 = vpop.f32.mrb[0].mxu0
    %v2953 = vadd.f32 %v2440, %v2952
    %2954 = vmatprep.mubr.bf16.mxu0 %v873
    %2955 = vmatmul.mubr.bf16.gmra.mrb[0].mxu0 %v872
    %v2956 = vpop.f32.mrb[0].mxu0
    %v2957 = vadd.f32 %v2444, %v2956
    %v2958 = vpop.f32.mrb[0].mxu0
    %v2959 = vadd.f32 %v2446, %v2958
    %v2960 = vpop.f32.mrb[0].mxu0
    %v2961 = vadd.f32 %v2448, %v2960
    %v2962 = vpop.f32.mrb[0].mxu0
    %v2963 = vadd.f32 %v2450, %v2962
    %2964 = vmatprep.mubr.bf16.mxu0 %v879
    %2965 = vmatmul.mubr.bf16.gmra.mrb[0].mxu0 %v878
    %v2966 = vpop.f32.mrb[0].mxu0
    %v2967 = vadd.f32 %v2454, %v2966
    %v2968 = vpop.f32.mrb[0].mxu0
    %v2969 = vadd.f32 %v2456, %v2968
    %v2970 = vpop.f32.mrb[0].mxu0
    %v2971 = vadd.f32 %v2458, %v2970
    %v2972 = vpop.f32.mrb[0].mxu0
    %v2973 = vadd.f32 %v2460, %v2972
    %2974 = vmatprep.mubr.bf16.mxu0 %v885
    %2975 = vmatmul.mubr.bf16.gmra.mrb[0].mxu0 %v884
    %v2976 = vpop.f32.mrb[0].mxu0
    %v2977 = vadd.f32 %v2464, %v2976
    %v2978 = vpop.f32.mrb[0].mxu0
    %v2979 = vadd.f32 %v2466, %v2978
    %v2980 = vpop.f32.mrb[0].mxu0
    %v2981 = vadd.f32 %v2468, %v2980
    %v2982 = vpop.f32.mrb[0].mxu0
    %v2983 = vadd.f32 %v2470, %v2982
    %2984 = vmatprep.mubr.bf16.mxu0 %v891
    %2985 = vmatmul.mubr.bf16.gmra.mrb[0].mxu0 %v890
    %v2986 = vpop.f32.mrb[0].mxu0
    %v2987 = vadd.f32 %v2474, %v2986
    %v2988 = vpop.f32.mrb[0].mxu0
    %v2989 = vadd.f32 %v2476, %v2988
    %v2990 = vpop.f32.mrb[0].mxu0
    %v2991 = vadd.f32 %v2478, %v2990
    %v2992 = vpop.f32.mrb[0].mxu0
    %v2993 = vadd.f32 %v2480, %v2992
    %2994 = vmatprep.mubr.bf16.mxu0 %v897
    %2995 = vmatmul.mubr.bf16.gmra.mrb[0].mxu0 %v896
    %v2996 = vpop.f32.mrb[0].mxu0
    %v2997 = vadd.f32 %v2484, %v2996
    %v2998 = vpop.f32.mrb[0].mxu0
    %v2999 = vadd.f32 %v2486, %v2998
    %v3000 = vpop.f32.mrb[0].mxu0
    %v3001 = vadd.f32 %v2488, %v3000
    %v3002 = vpop.f32.mrb[0].mxu0
    %v3003 = vadd.f32 %v2490, %v3002
    %3004 = vmatprep.mubr.bf16.mxu0 %v903
    %3005 = vmatmul.mubr.bf16.gmra.mrb[0].mxu0 %v902
    %v3006 = vpop.f32.mrb[0].mxu0
    %v3007 = vadd.f32 %v2494, %v3006
    %v3008 = vpop.f32.mrb[0].mxu0
    %v3009 = vadd.f32 %v2496, %v3008
    %v3010 = vpop.f32.mrb[0].mxu0
    %v3011 = vadd.f32 %v2498, %v3010
    %v3012 = vpop.f32.mrb[0].mxu0
    %v3013 = vadd.f32 %v2500, %v3012
    %3014 = vmatprep.mubr.bf16.mxu0 %v909
    %3015 = vmatmul.mubr.bf16.gmra.mrb[0].mxu0 %v908
    %v3016 = vpop.f32.mrb[0].mxu0
    %v3017 = vadd.f32 %v2504, %v3016
    %v3018 = vpop.f32.mrb[0].mxu0
    %v3019 = vadd.f32 %v2506, %v3018
    %v3020 = vpop.f32.mrb[0].mxu0
    %v3021 = vadd.f32 %v2508, %v3020
    %v3022 = vpop.f32.mrb[0].mxu0
    %v3023 = vadd.f32 %v2510, %v3022
    %3024 = vmatprep.mubr.bf16.mxu0 %v915
    %3025 = vmatmul.mubr.bf16.gmra.mrb[0].mxu0 %v914
    %v3026 = vpop.f32.mrb[0].mxu0
    %v3027 = vadd.f32 %v2514, %v3026
    %v3028 = vpop.f32.mrb[0].mxu0
    %v3029 = vadd.f32 %v2516, %v3028
    %v3030 = vpop.f32.mrb[0].mxu0
    %v3031 = vadd.f32 %v2518, %v3030
    %v3032 = vpop.f32.mrb[0].mxu0
    %v3033 = vadd.f32 %v2520, %v3032
    %3034 = vmatprep.mubr.bf16.mxu0 %v921
    %3035 = vmatmul.mubr.bf16.gmra.mrb[0].mxu0 %v920
    %v3036 = vpop.f32.mrb[0].mxu0
    %v3037 = vadd.f32 %v2524, %v3036
    %v3038 = vpop.f32.mrb[0].mxu0
    %v3039 = vadd.f32 %v2526, %v3038
    %v3040 = vpop.f32.mrb[0].mxu0
    %v3041 = vadd.f32 %v2528, %v3040
    %v3042 = vpop.f32.mrb[0].mxu0
    %v3043 = vadd.f32 %v2530, %v3042
    %3044 = vmatprep.mubr.bf16.mxu0 %v927
    %3045 = vmatmul.mubr.bf16.gmra.mrb[0].mxu0 %v926
    %v3046 = vpop.f32.mrb[0].mxu0
    %v3047 = vadd.f32 %v2534, %v3046
    %v3048 = vpop.f32.mrb[0].mxu0
    %v3049 = vadd.f32 %v2536, %v3048
    %v3050 = vpop.f32.mrb[0].mxu0
    %v3051 = vadd.f32 %v2538, %v3050
    %v3052 = vpop.f32.mrb[0].mxu0
    %v3053 = vadd.f32 %v2540, %v3052
    %3054 = vdwg.mxu0
    %v3055 = vmax.f32 %v2577, 0.0
    %v3056 = vmax.f32 %v2579, 0.0
    %v3057 = vmax.f32 %v2581, 0.0
    %v3058 = vmax.f32 %v2583, 0.0
    %v3059 = vmax.f32 %v2587, 0.0
    %v3060 = vmax.f32 %v2589, 0.0
    %v3061 = vmax.f32 %v2591, 0.0
    %v3062 = vmax.f32 %v2593, 0.0
    %v3063 = vmax.f32 %v2597, 0.0
    %v3064 = vmax.f32 %v2599, 0.0
    %v3065 = vmax.f32 %v2601, 0.0
    %v3066 = vmax.f32 %v2603, 0.0
    %v3067 = vmax.f32 %v2607, 0.0
    %v3068 = vmax.f32 %v2609, 0.0
    %v3069 = vmax.f32 %v2611, 0.0
    %v3070 = vmax.f32 %v2613, 0.0
    %v3071 = vmax.f32 %v2617, 0.0
    %v3072 = vmax.f32 %v2619, 0.0
    %v3073 = vmax.f32 %v2621, 0.0
    %v3074 = vmax.f32 %v2623, 0.0
    %v3075 = vmax.f32 %v2627, 0.0
    %v3076 = vmax.f32 %v2629, 0.0
    %v3077 = vmax.f32 %v2631, 0.0
    %v3078 = vmax.f32 %v2633, 0.0
    %v3079 = vmax.f32 %v2637, 0.0
    %v3080 = vmax.f32 %v2639, 0.0
    %v3081 = vmax.f32 %v2641, 0.0
    %v3082 = vmax.f32 %v2643, 0.0
    %v3083 = vmax.f32 %v2647, 0.0
    %v3084 = vmax.f32 %v2649, 0.0
    %v3085 = vmax.f32 %v2651, 0.0
    %v3086 = vmax.f32 %v2653, 0.0
    %v3087 = vmax.f32 %v2657, 0.0
    %v3088 = vmax.f32 %v2659, 0.0
    %v3089 = vmax.f32 %v2661, 0.0
    %v3090 = vmax.f32 %v2663, 0.0
    %v3091 = vmax.f32 %v2667, 0.0
    %v3092 = vmax.f32 %v2669, 0.0
    %v3093 = vmax.f32 %v2671, 0.0
    %v3094 = vmax.f32 %v2673, 0.0
    %v3095 = vmax.f32 %v2677, 0.0
    %v3096 = vmax.f32 %v2679, 0.0
    %v3097 = vmax.f32 %v2681, 0.0
    %v3098 = vmax.f32 %v2683, 0.0
    %v3099 = vmax.f32 %v2687, 0.0
    %v3100 = vmax.f32 %v2689, 0.0
    %v3101 = vmax.f32 %v2691, 0.0
    %v3102 = vmax.f32 %v2693, 0.0
    %v3103 = vmax.f32 %v2697, 0.0
    %v3104 = vmax.f32 %v2699, 0.0
    %v3105 = vmax.f32 %v2701, 0.0
    %v3106 = vmax.f32 %v2703, 0.0
    %v3107 = vmax.f32 %v2707, 0.0
    %v3108 = vmax.f32 %v2709, 0.0
    %v3109 = vmax.f32 %v2711, 0.0
    %v3110 = vmax.f32 %v2713, 0.0
    %v3111 = vmax.f32 %v2717, 0.0
    %v3112 = vmax.f32 %v2719, 0.0
    %v3113 = vmax.f32 %v2721, 0.0
    %v3114 = vmax.f32 %v2723, 0.0
    %v3115 = vmax.f32 %v2727, 0.0
    %v3116 = vmax.f32 %v2729, 0.0
    %v3117 = vmax.f32 %v2731, 0.0
    %v3118 = vmax.f32 %v2733, 0.0
    %v3119 = vmax.f32 %v2737, 0.0
    %v3120 = vmax.f32 %v2739, 0.0
    %v3121 = vmax.f32 %v2741, 0.0
    %v3122 = vmax.f32 %v2743, 0.0
    %v3123 = vmax.f32 %v2747, 0.0
    %v3124 = vmax.f32 %v2749, 0.0
    %v3125 = vmax.f32 %v2751, 0.0
    %v3126 = vmax.f32 %v2753, 0.0
    %v3127 = vmax.f32 %v2757, 0.0
    %v3128 = vmax.f32 %v2759, 0.0
    %v3129 = vmax.f32 %v2761, 0.0
    %v3130 = vmax.f32 %v2763, 0.0
    %v3131 = vmax.f32 %v2767, 0.0
    %v3132 = vmax.f32 %v2769, 0.0
    %v3133 = vmax.f32 %v2771, 0.0
    %v3134 = vmax.f32 %v2773, 0.0
    %v3135 = vmax.f32 %v2777, 0.0
    %v3136 = vmax.f32 %v2779, 0.0
    %v3137 = vmax.f32 %v2781, 0.0
    %v3138 = vmax.f32 %v2783, 0.0
    %v3139 = vmax.f32 %v2787, 0.0
    %v3140 = vmax.f32 %v2789, 0.0
    %v3141 = vmax.f32 %v2791, 0.0
    %v3142 = vmax.f32 %v2793, 0.0
    %v3143 = vmax.f32 %v2797, 0.0
    %v3144 = vmax.f32 %v2799, 0.0
    %v3145 = vmax.f32 %v2801, 0.0
    %v3146 = vmax.f32 %v2803, 0.0
    %v3147 = vmax.f32 %v2807, 0.0
    %v3148 = vmax.f32 %v2809, 0.0
    %v3149 = vmax.f32 %v2811, 0.0
    %v3150 = vmax.f32 %v2813, 0.0
    %v3151 = vmax.f32 %v2817, 0.0
    %v3152 = vmax.f32 %v2819, 0.0
    %v3153 = vmax.f32 %v2821, 0.0
    %v3154 = vmax.f32 %v2823, 0.0
    %v3155 = vmax.f32 %v2827, 0.0
    %v3156 = vmax.f32 %v2829, 0.0
    %v3157 = vmax.f32 %v2831, 0.0
    %v3158 = vmax.f32 %v2833, 0.0
    %v3159 = vmax.f32 %v2837, 0.0
    %v3160 = vmax.f32 %v2839, 0.0
    %v3161 = vmax.f32 %v2841, 0.0
    %v3162 = vmax.f32 %v2843, 0.0
    %v3163 = vmax.f32 %v2847, 0.0
    %v3164 = vmax.f32 %v2849, 0.0
    %v3165 = vmax.f32 %v2851, 0.0
    %v3166 = vmax.f32 %v2853, 0.0
    %v3167 = vmax.f32 %v2857, 0.0
    %v3168 = vmax.f32 %v2859, 0.0
    %v3169 = vmax.f32 %v2861, 0.0
    %v3170 = vmax.f32 %v2863, 0.0
    %v3171 = vmax.f32 %v2867, 0.0
    %v3172 = vmax.f32 %v2869, 0.0
    %v3173 = vmax.f32 %v2871, 0.0
    %v3174 = vmax.f32 %v2873, 0.0
    %v3175 = vmax.f32 %v2877, 0.0
    %v3176 = vmax.f32 %v2879, 0.0
    %v3177 = vmax.f32 %v2881, 0.0
    %v3178 = vmax.f32 %v2883, 0.0
    %v3179 = vmax.f32 %v2887, 0.0
    %v3180 = vmax.f32 %v2889, 0.0
    %v3181 = vmax.f32 %v2891, 0.0
    %v3182 = vmax.f32 %v2893, 0.0
    %v3183 = vmax.f32 %v2897, 0.0
    %v3184 = vmax.f32 %v2899, 0.0
    %v3185 = vmax.f32 %v2901, 0.0
    %v3186 = vmax.f32 %v2903, 0.0
    %v3187 = vmax.f32 %v2907, 0.0
    %v3188 = vmax.f32 %v2909, 0.0
    %v3189 = vmax.f32 %v2911, 0.0
    %v3190 = vmax.f32 %v2913, 0.0
    %v3191 = vmax.f32 %v2917, 0.0
    %v3192 = vmax.f32 %v2919, 0.0
    %v3193 = vmax.f32 %v2921, 0.0
    %v3194 = vmax.f32 %v2923, 0.0
    %v3195 = vmax.f32 %v2927, 0.0
    %v3196 = vmax.f32 %v2929, 0.0
    %v3197 = vmax.f32 %v2931, 0.0
    %v3198 = vmax.f32 %v2933, 0.0
    %v3199 = vmax.f32 %v2937, 0.0
    %v3200 = vmax.f32 %v2939, 0.0
    %v3201 = vmax.f32 %v2941, 0.0
    %v3202 = vmax.f32 %v2943, 0.0
    %v3203 = vmax.f32 %v2947, 0.0
    %v3204 = vmax.f32 %v2949, 0.0
    %v3205 = vmax.f32 %v2951, 0.0
    %v3206 = vmax.f32 %v2953, 0.0
    %v3207 = vmax.f32 %v2957, 0.0
    %v3208 = vmax.f32 %v2959, 0.0
    %v3209 = vmax.f32 %v2961, 0.0
    %v3210 = vmax.f32 %v2963, 0.0
    %v3211 = vmax.f32 %v2967, 0.0
    %v3212 = vmax.f32 %v2969, 0.0
    %v3213 = vmax.f32 %v2971, 0.0
    %v3214 = vmax.f32 %v2973, 0.0
    %v3215 = vmax.f32 %v2977, 0.0
    %v3216 = vmax.f32 %v2979, 0.0
    %v3217 = vmax.f32 %v2981, 0.0
    %v3218 = vmax.f32 %v2983, 0.0
    %v3219 = vmax.f32 %v2987, 0.0
    %v3220 = vmax.f32 %v2989, 0.0
    %v3221 = vmax.f32 %v2991, 0.0
    %v3222 = vmax.f32 %v2993, 0.0
    %v3223 = vmax.f32 %v2997, 0.0
    %v3224 = vmax.f32 %v2999, 0.0
    %v3225 = vmax.f32 %v3001, 0.0
    %v3226 = vmax.f32 %v3003, 0.0
    %v3227 = vmax.f32 %v3007, 0.0
    %v3228 = vmax.f32 %v3009, 0.0
    %v3229 = vmax.f32 %v3011, 0.0
    %v3230 = vmax.f32 %v3013, 0.0
    %v3231 = vmax.f32 %v3017, 0.0
    %v3232 = vmax.f32 %v3019, 0.0
    %v3233 = vmax.f32 %v3021, 0.0
    %v3234 = vmax.f32 %v3023, 0.0
    %v3235 = vmax.f32 %v3027, 0.0
    %v3236 = vmax.f32 %v3029, 0.0
    %v3237 = vmax.f32 %v3031, 0.0
    %v3238 = vmax.f32 %v3033, 0.0
    %v3239 = vmax.f32 %v3037, 0.0
    %v3240 = vmax.f32 %v3039, 0.0
    %v3241 = vmax.f32 %v3041, 0.0
    %v3242 = vmax.f32 %v3043, 0.0
    %v3243 = vmax.f32 %v3047, 0.0
    %v3244 = vmax.f32 %v3049, 0.0
    %v3245 = vmax.f32 %v3051, 0.0
    %v3246 = vmax.f32 %v3053, 0.0
    %v3247 = vpack.c.bf16 %v3057, %v3055
    %v3248 = vpack.c.bf16 %v3058, %v3056
    %v3249 = vpack.c.bf16 %v3061, %v3059
    %v3250 = vpack.c.bf16 %v3062, %v3060
    %v3251 = vpack.c.bf16 %v3065, %v3063
    %v3252 = vpack.c.bf16 %v3066, %v3064
    %v3253 = vpack.c.bf16 %v3069, %v3067
    %v3254 = vpack.c.bf16 %v3070, %v3068
    %v3255 = vpack.c.bf16 %v3073, %v3071
    %v3256 = vpack.c.bf16 %v3074, %v3072
    %v3257 = vpack.c.bf16 %v3077, %v3075
    %v3258 = vpack.c.bf16 %v3078, %v3076
    %v3259 = vpack.c.bf16 %v3081, %v3079
    %v3260 = vpack.c.bf16 %v3082, %v3080
    %v3261 = vpack.c.bf16 %v3085, %v3083
    %v3262 = vpack.c.bf16 %v3086, %v3084
    %v3263 = vpack.c.bf16 %v3089, %v3087
    %v3264 = vpack.c.bf16 %v3090, %v3088
    %v3265 = vpack.c.bf16 %v3093, %v3091
    %v3266 = vpack.c.bf16 %v3094, %v3092
    %v3267 = vpack.c.bf16 %v3097, %v3095
    %v3268 = vpack.c.bf16 %v3098, %v3096
    %v3269 = vpack.c.bf16 %v3101, %v3099
    %v3270 = vpack.c.bf16 %v3102, %v3100
    %v3271 = vpack.c.bf16 %v3105, %v3103
    %v3272 = vpack.c.bf16 %v3106, %v3104
    %v3273 = vpack.c.bf16 %v3109, %v3107
    %v3274 = vpack.c.bf16 %v3110, %v3108
    %v3275 = vpack.c.bf16 %v3113, %v3111
    %v3276 = vpack.c.bf16 %v3114, %v3112
    %v3277 = vpack.c.bf16 %v3117, %v3115
    %v3278 = vpack.c.bf16 %v3118, %v3116
    %v3279 = vpack.c.bf16 %v3121, %v3119
    %v3280 = vpack.c.bf16 %v3122, %v3120
    %v3281 = vpack.c.bf16 %v3125, %v3123
    %v3282 = vpack.c.bf16 %v3126, %v3124
    %v3283 = vpack.c.bf16 %v3129, %v3127
    %v3284 = vpack.c.bf16 %v3130, %v3128
    %v3285 = vpack.c.bf16 %v3133, %v3131
    %v3286 = vpack.c.bf16 %v3134, %v3132
    %v3287 = vpack.c.bf16 %v3137, %v3135
    %v3288 = vpack.c.bf16 %v3138, %v3136
    %v3289 = vpack.c.bf16 %v3141, %v3139
    %v3290 = vpack.c.bf16 %v3142, %v3140
    %v3291 = vpack.c.bf16 %v3145, %v3143
    %v3292 = vpack.c.bf16 %v3146, %v3144
    %v3293 = vpack.c.bf16 %v3149, %v3147
    %v3294 = vpack.c.bf16 %v3150, %v3148
    %v3295 = vpack.c.bf16 %v3153, %v3151
    %v3296 = vpack.c.bf16 %v3154, %v3152
    %v3297 = vpack.c.bf16 %v3157, %v3155
    %v3298 = vpack.c.bf16 %v3158, %v3156
    %v3299 = vpack.c.bf16 %v3161, %v3159
    %v3300 = vpack.c.bf16 %v3162, %v3160
    %v3301 = vpack.c.bf16 %v3165, %v3163
    %v3302 = vpack.c.bf16 %v3166, %v3164
    %v3303 = vpack.c.bf16 %v3169, %v3167
    %v3304 = vpack.c.bf16 %v3170, %v3168
    %v3305 = vpack.c.bf16 %v3173, %v3171
    %v3306 = vpack.c.bf16 %v3174, %v3172
    %v3307 = vpack.c.bf16 %v3177, %v3175
    %v3308 = vpack.c.bf16 %v3178, %v3176
    %v3309 = vpack.c.bf16 %v3181, %v3179
    %v3310 = vpack.c.bf16 %v3182, %v3180
    %v3311 = vpack.c.bf16 %v3185, %v3183
    %v3312 = vpack.c.bf16 %v3186, %v3184
    %v3313 = vpack.c.bf16 %v3189, %v3187
    %v3314 = vpack.c.bf16 %v3190, %v3188
    %v3315 = vpack.c.bf16 %v3193, %v3191
    %v3316 = vpack.c.bf16 %v3194, %v3192
    %v3317 = vpack.c.bf16 %v3197, %v3195
    %v3318 = vpack.c.bf16 %v3198, %v3196
    %v3319 = vpack.c.bf16 %v3201, %v3199
    %v3320 = vpack.c.bf16 %v3202, %v3200
    %v3321 = vpack.c.bf16 %v3205, %v3203
    %v3322 = vpack.c.bf16 %v3206, %v3204
    %v3323 = vpack.c.bf16 %v3209, %v3207
    %v3324 = vpack.c.bf16 %v3210, %v3208
    %v3325 = vpack.c.bf16 %v3213, %v3211
    %v3326 = vpack.c.bf16 %v3214, %v3212
    %v3327 = vpack.c.bf16 %v3217, %v3215
    %v3328 = vpack.c.bf16 %v3218, %v3216
    %v3329 = vpack.c.bf16 %v3221, %v3219
    %v3330 = vpack.c.bf16 %v3222, %v3220
    %v3331 = vpack.c.bf16 %v3225, %v3223
    %v3332 = vpack.c.bf16 %v3226, %v3224
    %v3333 = vpack.c.bf16 %v3229, %v3227
    %v3334 = vpack.c.bf16 %v3230, %v3228
    %v3335 = vpack.c.bf16 %v3233, %v3231
    %v3336 = vpack.c.bf16 %v3234, %v3232
    %v3337 = vpack.c.bf16 %v3237, %v3235
    %v3338 = vpack.c.bf16 %v3238, %v3236
    %v3339 = vpack.c.bf16 %v3241, %v3239
    %v3340 = vpack.c.bf16 %v3242, %v3240
    %v3341 = vpack.c.bf16 %v3245, %v3243
    %v3342 = vpack.c.bf16 %v3246, %v3244
    %v3343 = vld [vmem:[%s3] sm:$0xf]
    %v3344 = vld [vmem:[%s3 + $0x4] sm:$0xf]
    %v3345 = vld [vmem:[%s3 + $0x8] sm:$0xf]
    %v3346 = vld [vmem:[%s3 + $0xc] sm:$0xf]
    %v3347 = vld [vmem:[%s3 + $0x10] sm:$0xf]
    %v3348 = vld [vmem:[%s3 + $0x14] sm:$0xf]
    %v3349 = vld [vmem:[%s3 + $0x18] sm:$0xf]
    %v3350 = vld [vmem:[%s3 + $0x1c] sm:$0xf]
    %v3351 = vld [vmem:[%s3 + $0x20] sm:$0xf]
    %v3352 = vld [vmem:[%s3 + $0x24] sm:$0xf]
    %v3353 = vld [vmem:[%s3 + $0x28] sm:$0xf]
    %v3354 = vld [vmem:[%s3 + $0x2c] sm:$0xf]
    %v3355 = vld [vmem:[%s3 + $0x30] sm:$0xf]
    %v3356 = vld [vmem:[%s3 + $0x34] sm:$0xf]
    %v3357 = vld [vmem:[%s3 + $0x38] sm:$0xf]
    %v3358 = vld [vmem:[%s3 + $0x3c] sm:$0xf]
    %v3359 = vld [vmem:[%s3 + $0x40] sm:$0xf]
    %v3360 = vld [vmem:[%s3 + $0x44] sm:$0xf]
    %v3361 = vld [vmem:[%s3 + $0x48] sm:$0xf]
    %v3362 = vld [vmem:[%s3 + $0x4c] sm:$0xf]
    %v3363 = vld [vmem:[%s3 + $0x50] sm:$0xf]
    %v3364 = vld [vmem:[%s3 + $0x54] sm:$0xf]
    %v3365 = vld [vmem:[%s3 + $0x58] sm:$0xf]
    %v3366 = vld [vmem:[%s3 + $0x5c] sm:$0xf]
    %v3367 = vld [vmem:[%s3 + $0x60] sm:$0xf]
    %v3368 = vld [vmem:[%s3 + $0x64] sm:$0xf]
    %v3369 = vld [vmem:[%s3 + $0x68] sm:$0xf]
    %v3370 = vld [vmem:[%s3 + $0x6c] sm:$0xf]
    %v3371 = vld [vmem:[%s3 + $0x70] sm:$0xf]
    %v3372 = vld [vmem:[%s3 + $0x74] sm:$0xf]
    %v3373 = vld [vmem:[%s3 + $0x78] sm:$0xf]
    %v3374 = vld [vmem:[%s3 + $0x7c] sm:$0xf]
    %v3375 = vld [vmem:[#allocation6] sm:$0x1]
    %v3377 = vlaneseq
    %v3378 = vshrl.u32 %v3377, 7
    %v3379 = vsub.s32 0, %v3378
    %v3380 = vrot.slane %v3375, %v3379
    %v3414 = vunpack.c.l.b16 %v3343
    %v3415 = vunpack.c.l.b16 %v3344
    %v3416 = vunpack.c.l.b16 %v3345
    %v3417 = vunpack.c.l.b16 %v3346
    %v3418 = vunpack.c.l.b16 %v3347
    %v3419 = vunpack.c.l.b16 %v3348
    %v3420 = vunpack.c.l.b16 %v3349
    %v3421 = vunpack.c.l.b16 %v3350
    %v3422 = vunpack.c.l.b16 %v3351
    %v3423 = vunpack.c.l.b16 %v3352
    %v3424 = vunpack.c.l.b16 %v3353
    %v3425 = vunpack.c.l.b16 %v3354
    %v3426 = vunpack.c.l.b16 %v3355
    %v3427 = vunpack.c.l.b16 %v3356
    %v3428 = vunpack.c.l.b16 %v3357
    %v3429 = vunpack.c.l.b16 %v3358
    %v3430 = vunpack.c.l.b16 %v3359
    %v3431 = vunpack.c.l.b16 %v3360
    %v3432 = vunpack.c.l.b16 %v3361
    %v3433 = vunpack.c.l.b16 %v3362
    %v3434 = vunpack.c.l.b16 %v3363
    %v3435 = vunpack.c.l.b16 %v3364
    %v3436 = vunpack.c.l.b16 %v3365
    %v3437 = vunpack.c.l.b16 %v3366
    %v3438 = vunpack.c.l.b16 %v3367
    %v3439 = vunpack.c.l.b16 %v3368
    %v3440 = vunpack.c.l.b16 %v3369
    %v3441 = vunpack.c.l.b16 %v3370
    %v3442 = vunpack.c.l.b16 %v3371
    %v3443 = vunpack.c.l.b16 %v3372
    %v3444 = vunpack.c.l.b16 %v3373
    %v3445 = vunpack.c.l.b16 %v3374
    %v3446 = vpack.c.b16 %v3415, %v3414
    %v3447 = vpack.c.b16 %v3417, %v3416
    %v3448 = vpack.c.b16 %v3419, %v3418
    %v3449 = vpack.c.b16 %v3421, %v3420
    %v3450 = vpack.c.b16 %v3423, %v3422
    %v3451 = vpack.c.b16 %v3425, %v3424
    %v3452 = vpack.c.b16 %v3427, %v3426
    %v3453 = vpack.c.b16 %v3429, %v3428
    %v3454 = vpack.c.b16 %v3431, %v3430
    %v3455 = vpack.c.b16 %v3433, %v3432
    %v3456 = vpack.c.b16 %v3435, %v3434
    %v3457 = vpack.c.b16 %v3437, %v3436
    %v3458 = vpack.c.b16 %v3439, %v3438
    %v3459 = vpack.c.b16 %v3441, %v3440
    %v3460 = vpack.c.b16 %v3443, %v3442
    %v3461 = vpack.c.b16 %v3445, %v3444
    %3478 = vmatprep.subr.bf16.mxu0 0
    %3479 = vmatpush1.bf16.msra.mxu0 %v3446
    %3480 = vmatprep.subr.bf16.mxu0 0
    %3481 = vmatpush1.bf16.msra.mxu0 %v3447
    %3482 = vmatprep.subr.bf16.mxu0 0
    %3483 = vmatpush1.bf16.msra.mxu0 %v3448
    %3484 = vmatprep.subr.bf16.mxu0 0
    %3485 = vmatpush1.bf16.msra.mxu0 %v3449
    %3486 = vmatprep.subr.bf16.mxu0 0
    %3487 = vmatpush1.bf16.msra.mxu0 %v3450
    %3488 = vmatprep.subr.bf16.mxu0 0
    %3489 = vmatpush1.bf16.msra.mxu0 %v3451
    %3490 = vmatprep.subr.bf16.mxu0 0
    %3491 = vmatpush1.bf16.msra.mxu0 %v3452
    %3492 = vmatprep.subr.bf16.mxu0 0
    %3493 = vmatpush1.bf16.msra.mxu0 %v3453
    %3494 = vmatprep.subr.bf16.mxu0 0
    %3495 = vmatpush1.bf16.msra.mxu0 %v3454
    %3496 = vmatprep.subr.bf16.mxu0 0
    %3497 = vmatpush1.bf16.msra.mxu0 %v3455
    %3498 = vmatprep.subr.bf16.mxu0 0
    %3499 = vmatpush1.bf16.msra.mxu0 %v3456
    %3500 = vmatprep.subr.bf16.mxu0 0
    %3501 = vmatpush1.bf16.msra.mxu0 %v3457
    %3502 = vmatprep.subr.bf16.mxu0 0
    %3503 = vmatpush1.bf16.msra.mxu0 %v3458
    %3504 = vmatprep.subr.bf16.mxu0 0
    %3505 = vmatpush1.bf16.msra.mxu0 %v3459
    %3506 = vmatprep.subr.bf16.mxu0 0
    %3507 = vmatpush1.bf16.msra.mxu0 %v3460
    %3508 = vmatprep.subr.bf16.mxu0 0
    %3509 = vmatpush1.bf16.msra.mxu0 %v3461
    %3510 = vmatprep.mubr.bf16.mxu0 %v3248
    %3511 = vmatmul.mubr.bf16.gmra.mrb[0].mxu0 %v3247
    %v3512 = vpop.f32.mrb[0].mxu0
    %v3513 = vadd.f32 %v3380, %v3512
    %v3514 = vpop.f32.mrb[0].mxu0
    %v3515 = vpop.f32.mrb[0].mxu0
    %v3516 = vadd.f32 %v3380, %v3515
    %v3517 = vpop.f32.mrb[0].mxu0
    %3518 = vmatprep.mubr.bf16.mxu0 %v3250
    %3519 = vmatmul.mubr.bf16.gmra.mrb[0].mxu0 %v3249
    %v3520 = vpop.f32.mrb[0].mxu0
    %v3521 = vadd.f32 %v3380, %v3520
    %v3522 = vpop.f32.mrb[0].mxu0
    %v3523 = vpop.f32.mrb[0].mxu0
    %v3524 = vadd.f32 %v3380, %v3523
    %v3525 = vpop.f32.mrb[0].mxu0
    %3526 = vmatprep.mubr.bf16.mxu0 %v3252
    %3527 = vmatmul.mubr.bf16.gmra.mrb[0].mxu0 %v3251
    %v3528 = vpop.f32.mrb[0].mxu0
    %v3529 = vadd.f32 %v3380, %v3528
    %v3530 = vpop.f32.mrb[0].mxu0
    %v3531 = vpop.f32.mrb[0].mxu0
    %v3532 = vadd.f32 %v3380, %v3531
    %v3533 = vpop.f32.mrb[0].mxu0
    %3534 = vmatprep.mubr.bf16.mxu0 %v3254
    %3535 = vmatmul.mubr.bf16.gmra.mrb[0].mxu0 %v3253
    %v3536 = vpop.f32.mrb[0].mxu0
    %v3537 = vadd.f32 %v3380, %v3536
    %v3538 = vpop.f32.mrb[0].mxu0
    %v3539 = vpop.f32.mrb[0].mxu0
    %v3540 = vadd.f32 %v3380, %v3539
    %v3541 = vpop.f32.mrb[0].mxu0
    %3542 = vmatprep.mubr.bf16.mxu0 %v3256
    %3543 = vmatmul.mubr.bf16.gmra.mrb[0].mxu0 %v3255
    %v3544 = vpop.f32.mrb[0].mxu0
    %v3545 = vadd.f32 %v3380, %v3544
    %v3546 = vpop.f32.mrb[0].mxu0
    %v3547 = vpop.f32.mrb[0].mxu0
    %v3548 = vadd.f32 %v3380, %v3547
    %v3549 = vpop.f32.mrb[0].mxu0
    %3550 = vmatprep.mubr.bf16.mxu0 %v3258
    %3551 = vmatmul.mubr.bf16.gmra.mrb[0].mxu0 %v3257
    %v3552 = vpop.f32.mrb[0].mxu0
    %v3553 = vadd.f32 %v3380, %v3552
    %v3554 = vpop.f32.mrb[0].mxu0
    %v3555 = vpop.f32.mrb[0].mxu0
    %v3556 = vadd.f32 %v3380, %v3555
    %v3557 = vpop.f32.mrb[0].mxu0
    %3558 = vmatprep.mubr.bf16.mxu0 %v3260
    %3559 = vmatmul.mubr.bf16.gmra.mrb[0].mxu0 %v3259
    %v3560 = vpop.f32.mrb[0].mxu0
    %v3561 = vadd.f32 %v3380, %v3560
    %v3562 = vpop.f32.mrb[0].mxu0
    %v3563 = vpop.f32.mrb[0].mxu0
    %v3564 = vadd.f32 %v3380, %v3563
    %v3565 = vpop.f32.mrb[0].mxu0
    %3566 = vmatprep.mubr.bf16.mxu0 %v3262
    %3567 = vmatmul.mubr.bf16.gmra.mrb[0].mxu0 %v3261
    %v3568 = vpop.f32.mrb[0].mxu0
    %v3569 = vadd.f32 %v3380, %v3568
    %v3570 = vpop.f32.mrb[0].mxu0
    %v3571 = vpop.f32.mrb[0].mxu0
    %v3572 = vadd.f32 %v3380, %v3571
    %v3573 = vpop.f32.mrb[0].mxu0
    %3574 = vmatprep.mubr.bf16.mxu0 %v3264
    %3575 = vmatmul.mubr.bf16.gmra.mrb[0].mxu0 %v3263
    %v3576 = vpop.f32.mrb[0].mxu0
    %v3577 = vadd.f32 %v3380, %v3576
    %v3578 = vpop.f32.mrb[0].mxu0
    %v3579 = vpop.f32.mrb[0].mxu0
    %v3580 = vadd.f32 %v3380, %v3579
    %v3581 = vpop.f32.mrb[0].mxu0
    %3582 = vmatprep.mubr.bf16.mxu0 %v3266
    %3583 = vmatmul.mubr.bf16.gmra.mrb[0].mxu0 %v3265
    %v3584 = vpop.f32.mrb[0].mxu0
    %v3585 = vadd.f32 %v3380, %v3584
    %v3586 = vpop.f32.mrb[0].mxu0
    %v3587 = vpop.f32.mrb[0].mxu0
    %v3588 = vadd.f32 %v3380, %v3587
    %v3589 = vpop.f32.mrb[0].mxu0
    %3590 = vmatprep.mubr.bf16.mxu0 %v3268
    %3591 = vmatmul.mubr.bf16.gmra.mrb[0].mxu0 %v3267
    %v3592 = vpop.f32.mrb[0].mxu0
    %v3593 = vadd.f32 %v3380, %v3592
    %v3594 = vpop.f32.mrb[0].mxu0
    %v3595 = vpop.f32.mrb[0].mxu0
    %v3596 = vadd.f32 %v3380, %v3595
    %v3597 = vpop.f32.mrb[0].mxu0
    %3598 = vmatprep.mubr.bf16.mxu0 %v3270
    %3599 = vmatmul.mubr.bf16.gmra.mrb[0].mxu0 %v3269
    %v3600 = vpop.f32.mrb[0].mxu0
    %v3601 = vadd.f32 %v3380, %v3600
    %v3602 = vpop.f32.mrb[0].mxu0
    %v3603 = vpop.f32.mrb[0].mxu0
    %v3604 = vadd.f32 %v3380, %v3603
    %v3605 = vpop.f32.mrb[0].mxu0
    %3606 = vmatprep.mubr.bf16.mxu0 %v3272
    %3607 = vmatmul.mubr.bf16.gmra.mrb[0].mxu0 %v3271
    %v3608 = vpop.f32.mrb[0].mxu0
    %v3609 = vadd.f32 %v3380, %v3608
    %v3610 = vpop.f32.mrb[0].mxu0
    %v3611 = vpop.f32.mrb[0].mxu0
    %v3612 = vadd.f32 %v3380, %v3611
    %v3613 = vpop.f32.mrb[0].mxu0
    %3614 = vmatprep.mubr.bf16.mxu0 %v3274
    %3615 = vmatmul.mubr.bf16.gmra.mrb[0].mxu0 %v3273
    %v3616 = vpop.f32.mrb[0].mxu0
    %v3617 = vadd.f32 %v3380, %v3616
    %v3618 = vpop.f32.mrb[0].mxu0
    %v3619 = vpop.f32.mrb[0].mxu0
    %v3620 = vadd.f32 %v3380, %v3619
    %v3621 = vpop.f32.mrb[0].mxu0
    %3622 = vmatprep.mubr.bf16.mxu0 %v3276
    %3623 = vmatmul.mubr.bf16.gmra.mrb[0].mxu0 %v3275
    %v3624 = vpop.f32.mrb[0].mxu0
    %v3625 = vadd.f32 %v3380, %v3624
    %v3626 = vpop.f32.mrb[0].mxu0
    %v3627 = vpop.f32.mrb[0].mxu0
    %v3628 = vadd.f32 %v3380, %v3627
    %v3629 = vpop.f32.mrb[0].mxu0
    %3630 = vmatprep.mubr.bf16.mxu0 %v3278
    %3631 = vmatmul.mubr.bf16.gmra.mrb[0].mxu0 %v3277
    %v3632 = vpop.f32.mrb[0].mxu0
    %v3633 = vadd.f32 %v3380, %v3632
    %v3634 = vpop.f32.mrb[0].mxu0
    %v3635 = vpop.f32.mrb[0].mxu0
    %v3636 = vadd.f32 %v3380, %v3635
    %v3637 = vpop.f32.mrb[0].mxu0
    %3638 = vmatprep.mubr.bf16.mxu0 %v3280
    %3639 = vmatmul.mubr.bf16.gmra.mrb[0].mxu0 %v3279
    %v3640 = vpop.f32.mrb[0].mxu0
    %v3641 = vadd.f32 %v3380, %v3640
    %v3642 = vpop.f32.mrb[0].mxu0
    %v3643 = vpop.f32.mrb[0].mxu0
    %v3644 = vadd.f32 %v3380, %v3643
    %v3645 = vpop.f32.mrb[0].mxu0
    %3646 = vmatprep.mubr.bf16.mxu0 %v3282
    %3647 = vmatmul.mubr.bf16.gmra.mrb[0].mxu0 %v3281
    %v3648 = vpop.f32.mrb[0].mxu0
    %v3649 = vadd.f32 %v3380, %v3648
    %v3650 = vpop.f32.mrb[0].mxu0
    %v3651 = vpop.f32.mrb[0].mxu0
    %v3652 = vadd.f32 %v3380, %v3651
    %v3653 = vpop.f32.mrb[0].mxu0
    %3654 = vmatprep.mubr.bf16.mxu0 %v3284
    %3655 = vmatmul.mubr.bf16.gmra.mrb[0].mxu0 %v3283
    %v3656 = vpop.f32.mrb[0].mxu0
    %v3657 = vadd.f32 %v3380, %v3656
    %v3658 = vpop.f32.mrb[0].mxu0
    %v3659 = vpop.f32.mrb[0].mxu0
    %v3660 = vadd.f32 %v3380, %v3659
    %v3661 = vpop.f32.mrb[0].mxu0
    %3662 = vmatprep.mubr.bf16.mxu0 %v3286
    %3663 = vmatmul.mubr.bf16.gmra.mrb[0].mxu0 %v3285
    %v3664 = vpop.f32.mrb[0].mxu0
    %v3665 = vadd.f32 %v3380, %v3664
    %v3666 = vpop.f32.mrb[0].mxu0
    %v3667 = vpop.f32.mrb[0].mxu0
    %v3668 = vadd.f32 %v3380, %v3667
    %v3669 = vpop.f32.mrb[0].mxu0
    %3670 = vmatprep.mubr.bf16.mxu0 %v3288
    %3671 = vmatmul.mubr.bf16.gmra.mrb[0].mxu0 %v3287
    %v3672 = vpop.f32.mrb[0].mxu0
    %v3673 = vadd.f32 %v3380, %v3672
    %v3674 = vpop.f32.mrb[0].mxu0
    %v3675 = vpop.f32.mrb[0].mxu0
    %v3676 = vadd.f32 %v3380, %v3675
    %v3677 = vpop.f32.mrb[0].mxu0
    %3678 = vmatprep.mubr.bf16.mxu0 %v3290
    %3679 = vmatmul.mubr.bf16.gmra.mrb[0].mxu0 %v3289
    %v3680 = vpop.f32.mrb[0].mxu0
    %v3681 = vadd.f32 %v3380, %v3680
    %v3682 = vpop.f32.mrb[0].mxu0
    %v3683 = vpop.f32.mrb[0].mxu0
    %v3684 = vadd.f32 %v3380, %v3683
    %v3685 = vpop.f32.mrb[0].mxu0
    %3686 = vmatprep.mubr.bf16.mxu0 %v3292
    %3687 = vmatmul.mubr.bf16.gmra.mrb[0].mxu0 %v3291
    %v3688 = vpop.f32.mrb[0].mxu0
    %v3689 = vadd.f32 %v3380, %v3688
    %v3690 = vpop.f32.mrb[0].mxu0
    %v3691 = vpop.f32.mrb[0].mxu0
    %v3692 = vadd.f32 %v3380, %v3691
    %v3693 = vpop.f32.mrb[0].mxu0
    %3694 = vmatprep.mubr.bf16.mxu0 %v3294
    %3695 = vmatmul.mubr.bf16.gmra.mrb[0].mxu0 %v3293
    %v3696 = vpop.f32.mrb[0].mxu0
    %v3697 = vadd.f32 %v3380, %v3696
    %v3698 = vpop.f32.mrb[0].mxu0
    %v3699 = vpop.f32.mrb[0].mxu0
    %v3700 = vadd.f32 %v3380, %v3699
    %v3701 = vpop.f32.mrb[0].mxu0
    %3702 = vmatprep.mubr.bf16.mxu0 %v3296
    %3703 = vmatmul.mubr.bf16.gmra.mrb[0].mxu0 %v3295
    %v3704 = vpop.f32.mrb[0].mxu0
    %v3705 = vadd.f32 %v3380, %v3704
    %v3706 = vpop.f32.mrb[0].mxu0
    %v3707 = vpop.f32.mrb[0].mxu0
    %v3708 = vadd.f32 %v3380, %v3707
    %v3709 = vpop.f32.mrb[0].mxu0
    %3710 = vmatprep.mubr.bf16.mxu0 %v3298
    %3711 = vmatmul.mubr.bf16.gmra.mrb[0].mxu0 %v3297
    %v3712 = vpop.f32.mrb[0].mxu0
    %v3713 = vadd.f32 %v3380, %v3712
    %v3714 = vpop.f32.mrb[0].mxu0
    %v3715 = vpop.f32.mrb[0].mxu0
    %v3716 = vadd.f32 %v3380, %v3715
    %v3717 = vpop.f32.mrb[0].mxu0
    %3718 = vmatprep.mubr.bf16.mxu0 %v3300
    %3719 = vmatmul.mubr.bf16.gmra.mrb[0].mxu0 %v3299
    %v3720 = vpop.f32.mrb[0].mxu0
    %v3721 = vadd.f32 %v3380, %v3720
    %v3722 = vpop.f32.mrb[0].mxu0
    %v3723 = vpop.f32.mrb[0].mxu0
    %v3724 = vadd.f32 %v3380, %v3723
    %v3725 = vpop.f32.mrb[0].mxu0
    %3726 = vmatprep.mubr.bf16.mxu0 %v3302
    %3727 = vmatmul.mubr.bf16.gmra.mrb[0].mxu0 %v3301
    %v3728 = vpop.f32.mrb[0].mxu0
    %v3729 = vadd.f32 %v3380, %v3728
    %v3730 = vpop.f32.mrb[0].mxu0
    %v3731 = vpop.f32.mrb[0].mxu0
    %v3732 = vadd.f32 %v3380, %v3731
    %v3733 = vpop.f32.mrb[0].mxu0
    %3734 = vmatprep.mubr.bf16.mxu0 %v3304
    %3735 = vmatmul.mubr.bf16.gmra.mrb[0].mxu0 %v3303
    %v3736 = vpop.f32.mrb[0].mxu0
    %v3737 = vadd.f32 %v3380, %v3736
    %v3738 = vpop.f32.mrb[0].mxu0
    %v3739 = vpop.f32.mrb[0].mxu0
    %v3740 = vadd.f32 %v3380, %v3739
    %v3741 = vpop.f32.mrb[0].mxu0
    %3742 = vmatprep.mubr.bf16.mxu0 %v3306
    %3743 = vmatmul.mubr.bf16.gmra.mrb[0].mxu0 %v3305
    %v3744 = vpop.f32.mrb[0].mxu0
    %v3745 = vadd.f32 %v3380, %v3744
    %v3746 = vpop.f32.mrb[0].mxu0
    %v3747 = vpop.f32.mrb[0].mxu0
    %v3748 = vadd.f32 %v3380, %v3747
    %v3749 = vpop.f32.mrb[0].mxu0
    %3750 = vmatprep.mubr.bf16.mxu0 %v3308
    %3751 = vmatmul.mubr.bf16.gmra.mrb[0].mxu0 %v3307
    %v3752 = vpop.f32.mrb[0].mxu0
    %v3753 = vadd.f32 %v3380, %v3752
    %v3754 = vpop.f32.mrb[0].mxu0
    %v3755 = vpop.f32.mrb[0].mxu0
    %v3756 = vadd.f32 %v3380, %v3755
    %v3757 = vpop.f32.mrb[0].mxu0
    %3758 = vmatprep.mubr.bf16.mxu0 %v3310
    %3759 = vmatmul.mubr.bf16.gmra.mrb[0].mxu0 %v3309
    %v3760 = vpop.f32.mrb[0].mxu0
    %v3761 = vadd.f32 %v3380, %v3760
    %v3762 = vpop.f32.mrb[0].mxu0
    %v3763 = vpop.f32.mrb[0].mxu0
    %v3764 = vadd.f32 %v3380, %v3763
    %v3765 = vpop.f32.mrb[0].mxu0
    %3766 = vmatprep.mubr.bf16.mxu0 %v3312
    %3767 = vmatmul.mubr.bf16.gmra.mrb[0].mxu0 %v3311
    %v3768 = vpop.f32.mrb[0].mxu0
    %v3769 = vadd.f32 %v3380, %v3768
    %v3770 = vpop.f32.mrb[0].mxu0
    %v3771 = vpop.f32.mrb[0].mxu0
    %v3772 = vadd.f32 %v3380, %v3771
    %v3773 = vpop.f32.mrb[0].mxu0
    %3774 = vmatprep.mubr.bf16.mxu0 %v3314
    %3775 = vmatmul.mubr.bf16.gmra.mrb[0].mxu0 %v3313
    %v3776 = vpop.f32.mrb[0].mxu0
    %v3777 = vadd.f32 %v3380, %v3776
    %v3778 = vpop.f32.mrb[0].mxu0
    %v3779 = vpop.f32.mrb[0].mxu0
    %v3780 = vadd.f32 %v3380, %v3779
    %v3781 = vpop.f32.mrb[0].mxu0
    %3782 = vmatprep.mubr.bf16.mxu0 %v3316
    %3783 = vmatmul.mubr.bf16.gmra.mrb[0].mxu0 %v3315
    %v3784 = vpop.f32.mrb[0].mxu0
    %v3785 = vadd.f32 %v3380, %v3784
    %v3786 = vpop.f32.mrb[0].mxu0
    %v3787 = vpop.f32.mrb[0].mxu0
    %v3788 = vadd.f32 %v3380, %v3787
    %v3789 = vpop.f32.mrb[0].mxu0
    %3790 = vmatprep.mubr.bf16.mxu0 %v3318
    %3791 = vmatmul.mubr.bf16.gmra.mrb[0].mxu0 %v3317
    %v3792 = vpop.f32.mrb[0].mxu0
    %v3793 = vadd.f32 %v3380, %v3792
    %v3794 = vpop.f32.mrb[0].mxu0
    %v3795 = vpop.f32.mrb[0].mxu0
    %v3796 = vadd.f32 %v3380, %v3795
    %v3797 = vpop.f32.mrb[0].mxu0
    %3798 = vmatprep.mubr.bf16.mxu0 %v3320
    %3799 = vmatmul.mubr.bf16.gmra.mrb[0].mxu0 %v3319
    %v3800 = vpop.f32.mrb[0].mxu0
    %v3801 = vadd.f32 %v3380, %v3800
    %v3802 = vpop.f32.mrb[0].mxu0
    %v3803 = vpop.f32.mrb[0].mxu0
    %v3804 = vadd.f32 %v3380, %v3803
    %v3805 = vpop.f32.mrb[0].mxu0
    %3806 = vmatprep.mubr.bf16.mxu0 %v3322
    %3807 = vmatmul.mubr.bf16.gmra.mrb[0].mxu0 %v3321
    %v3808 = vpop.f32.mrb[0].mxu0
    %v3809 = vadd.f32 %v3380, %v3808
    %v3810 = vpop.f32.mrb[0].mxu0
    %v3811 = vpop.f32.mrb[0].mxu0
    %v3812 = vadd.f32 %v3380, %v3811
    %v3813 = vpop.f32.mrb[0].mxu0
    %3814 = vmatprep.mubr.bf16.mxu0 %v3324
    %3815 = vmatmul.mubr.bf16.gmra.mrb[0].mxu0 %v3323
    %v3816 = vpop.f32.mrb[0].mxu0
    %v3817 = vadd.f32 %v3380, %v3816
    %v3818 = vpop.f32.mrb[0].mxu0
    %v3819 = vpop.f32.mrb[0].mxu0
    %v3820 = vadd.f32 %v3380, %v3819
    %v3821 = vpop.f32.mrb[0].mxu0
    %3822 = vmatprep.mubr.bf16.mxu0 %v3326
    %3823 = vmatmul.mubr.bf16.gmra.mrb[0].mxu0 %v3325
    %v3824 = vpop.f32.mrb[0].mxu0
    %v3825 = vadd.f32 %v3380, %v3824
    %v3826 = vpop.f32.mrb[0].mxu0
    %v3827 = vpop.f32.mrb[0].mxu0
    %v3828 = vadd.f32 %v3380, %v3827
    %v3829 = vpop.f32.mrb[0].mxu0
    %3830 = vmatprep.mubr.bf16.mxu0 %v3328
    %3831 = vmatmul.mubr.bf16.gmra.mrb[0].mxu0 %v3327
    %v3832 = vpop.f32.mrb[0].mxu0
    %v3833 = vadd.f32 %v3380, %v3832
    %v3834 = vpop.f32.mrb[0].mxu0
    %v3835 = vpop.f32.mrb[0].mxu0
    %v3836 = vadd.f32 %v3380, %v3835
    %v3837 = vpop.f32.mrb[0].mxu0
    %3838 = vmatprep.mubr.bf16.mxu0 %v3330
    %3839 = vmatmul.mubr.bf16.gmra.mrb[0].mxu0 %v3329
    %v3840 = vpop.f32.mrb[0].mxu0
    %v3841 = vadd.f32 %v3380, %v3840
    %v3842 = vpop.f32.mrb[0].mxu0
    %v3843 = vpop.f32.mrb[0].mxu0
    %v3844 = vadd.f32 %v3380, %v3843
    %v3845 = vpop.f32.mrb[0].mxu0
    %3846 = vmatprep.mubr.bf16.mxu0 %v3332
    %3847 = vmatmul.mubr.bf16.gmra.mrb[0].mxu0 %v3331
    %v3848 = vpop.f32.mrb[0].mxu0
    %v3849 = vadd.f32 %v3380, %v3848
    %v3850 = vpop.f32.mrb[0].mxu0
    %v3851 = vpop.f32.mrb[0].mxu0
    %v3852 = vadd.f32 %v3380, %v3851
    %v3853 = vpop.f32.mrb[0].mxu0
    %3854 = vmatprep.mubr.bf16.mxu0 %v3334
    %3855 = vmatmul.mubr.bf16.gmra.mrb[0].mxu0 %v3333
    %v3856 = vpop.f32.mrb[0].mxu0
    %v3857 = vadd.f32 %v3380, %v3856
    %v3858 = vpop.f32.mrb[0].mxu0
    %v3859 = vpop.f32.mrb[0].mxu0
    %v3860 = vadd.f32 %v3380, %v3859
    %v3861 = vpop.f32.mrb[0].mxu0
    %3862 = vmatprep.mubr.bf16.mxu0 %v3336
    %3863 = vmatmul.mubr.bf16.gmra.mrb[0].mxu0 %v3335
    %v3864 = vpop.f32.mrb[0].mxu0
    %v3865 = vadd.f32 %v3380, %v3864
    %v3866 = vpop.f32.mrb[0].mxu0
    %v3867 = vpop.f32.mrb[0].mxu0
    %v3868 = vadd.f32 %v3380, %v3867
    %v3869 = vpop.f32.mrb[0].mxu0
    %3870 = vmatprep.mubr.bf16.mxu0 %v3338
    %3871 = vmatmul.mubr.bf16.gmra.mrb[0].mxu0 %v3337
    %v3872 = vpop.f32.mrb[0].mxu0
    %v3873 = vadd.f32 %v3380, %v3872
    %v3874 = vpop.f32.mrb[0].mxu0
    %v3875 = vpop.f32.mrb[0].mxu0
    %v3876 = vadd.f32 %v3380, %v3875
    %v3877 = vpop.f32.mrb[0].mxu0
    %3878 = vmatprep.mubr.bf16.mxu0 %v3340
    %3879 = vmatmul.mubr.bf16.gmra.mrb[0].mxu0 %v3339
    %v3880 = vpop.f32.mrb[0].mxu0
    %v3881 = vadd.f32 %v3380, %v3880
    %v3882 = vpop.f32.mrb[0].mxu0
    %v3883 = vpop.f32.mrb[0].mxu0
    %v3884 = vadd.f32 %v3380, %v3883
    %v3885 = vpop.f32.mrb[0].mxu0
    %3886 = vmatprep.mubr.bf16.mxu0 %v3342
    %3887 = vmatmul.mubr.bf16.gmra.mrb[0].mxu0 %v3341
    %v3888 = vpop.f32.mrb[0].mxu0
    %v3889 = vadd.f32 %v3380, %v3888
    %v3890 = vpop.f32.mrb[0].mxu0
    %v3891 = vpop.f32.mrb[0].mxu0
    %v3892 = vadd.f32 %v3380, %v3891
    %v3893 = vpop.f32.mrb[0].mxu0
    %3894 = vdwg.mxu0
    %v3895 = vmax.f32 %v3513, 0.0
    %v3896 = vmax.f32 %v3516, 0.0
    %v3897 = vmax.f32 %v3521, 0.0
    %v3898 = vmax.f32 %v3524, 0.0
    %v3899 = vmax.f32 %v3529, 0.0
    %v3900 = vmax.f32 %v3532, 0.0
    %v3901 = vmax.f32 %v3537, 0.0
    %v3902 = vmax.f32 %v3540, 0.0
    %v3903 = vmax.f32 %v3545, 0.0
    %v3904 = vmax.f32 %v3548, 0.0
    %v3905 = vmax.f32 %v3553, 0.0
    %v3906 = vmax.f32 %v3556, 0.0
    %v3907 = vmax.f32 %v3561, 0.0
    %v3908 = vmax.f32 %v3564, 0.0
    %v3909 = vmax.f32 %v3569, 0.0
    %v3910 = vmax.f32 %v3572, 0.0
    %v3911 = vmax.f32 %v3577, 0.0
    %v3912 = vmax.f32 %v3580, 0.0
    %v3913 = vmax.f32 %v3585, 0.0
    %v3914 = vmax.f32 %v3588, 0.0
    %v3915 = vmax.f32 %v3593, 0.0
    %v3916 = vmax.f32 %v3596, 0.0
    %v3917 = vmax.f32 %v3601, 0.0
    %v3918 = vmax.f32 %v3604, 0.0
    %v3919 = vmax.f32 %v3609, 0.0
    %v3920 = vmax.f32 %v3612, 0.0
    %v3921 = vmax.f32 %v3617, 0.0
    %v3922 = vmax.f32 %v3620, 0.0
    %v3923 = vmax.f32 %v3625, 0.0
    %v3924 = vmax.f32 %v3628, 0.0
    %v3925 = vmax.f32 %v3633, 0.0
    %v3926 = vmax.f32 %v3636, 0.0
    %v3927 = vmax.f32 %v3641, 0.0
    %v3928 = vmax.f32 %v3644, 0.0
    %v3929 = vmax.f32 %v3649, 0.0
    %v3930 = vmax.f32 %v3652, 0.0
    %v3931 = vmax.f32 %v3657, 0.0
    %v3932 = vmax.f32 %v3660, 0.0
    %v3933 = vmax.f32 %v3665, 0.0
    %v3934 = vmax.f32 %v3668, 0.0
    %v3935 = vmax.f32 %v3673, 0.0
    %v3936 = vmax.f32 %v3676, 0.0
    %v3937 = vmax.f32 %v3681, 0.0
    %v3938 = vmax.f32 %v3684, 0.0
    %v3939 = vmax.f32 %v3689, 0.0
    %v3940 = vmax.f32 %v3692, 0.0
    %v3941 = vmax.f32 %v3697, 0.0
    %v3942 = vmax.f32 %v3700, 0.0
    %v3943 = vmax.f32 %v3705, 0.0
    %v3944 = vmax.f32 %v3708, 0.0
    %v3945 = vmax.f32 %v3713, 0.0
    %v3946 = vmax.f32 %v3716, 0.0
    %v3947 = vmax.f32 %v3721, 0.0
    %v3948 = vmax.f32 %v3724, 0.0
    %v3949 = vmax.f32 %v3729, 0.0
    %v3950 = vmax.f32 %v3732, 0.0
    %v3951 = vmax.f32 %v3737, 0.0
    %v3952 = vmax.f32 %v3740, 0.0
    %v3953 = vmax.f32 %v3745, 0.0
    %v3954 = vmax.f32 %v3748, 0.0
    %v3955 = vmax.f32 %v3753, 0.0
    %v3956 = vmax.f32 %v3756, 0.0
    %v3957 = vmax.f32 %v3761, 0.0
    %v3958 = vmax.f32 %v3764, 0.0
    %v3959 = vmax.f32 %v3769, 0.0
    %v3960 = vmax.f32 %v3772, 0.0
    %v3961 = vmax.f32 %v3777, 0.0
    %v3962 = vmax.f32 %v3780, 0.0
    %v3963 = vmax.f32 %v3785, 0.0
    %v3964 = vmax.f32 %v3788, 0.0
    %v3965 = vmax.f32 %v3793, 0.0
    %v3966 = vmax.f32 %v3796, 0.0
    %v3967 = vmax.f32 %v3801, 0.0
    %v3968 = vmax.f32 %v3804, 0.0
    %v3969 = vmax.f32 %v3809, 0.0
    %v3970 = vmax.f32 %v3812, 0.0
    %v3971 = vmax.f32 %v3817, 0.0
    %v3972 = vmax.f32 %v3820, 0.0
    %v3973 = vmax.f32 %v3825, 0.0
    %v3974 = vmax.f32 %v3828, 0.0
    %v3975 = vmax.f32 %v3833, 0.0
    %v3976 = vmax.f32 %v3836, 0.0
    %v3977 = vmax.f32 %v3841, 0.0
    %v3978 = vmax.f32 %v3844, 0.0
    %v3979 = vmax.f32 %v3849, 0.0
    %v3980 = vmax.f32 %v3852, 0.0
    %v3981 = vmax.f32 %v3857, 0.0
    %v3982 = vmax.f32 %v3860, 0.0
    %v3983 = vmax.f32 %v3865, 0.0
    %v3984 = vmax.f32 %v3868, 0.0
    %v3985 = vmax.f32 %v3873, 0.0
    %v3986 = vmax.f32 %v3876, 0.0
    %v3987 = vmax.f32 %v3881, 0.0
    %v3988 = vmax.f32 %v3884, 0.0
    %v3989 = vmax.f32 %v3889, 0.0
    %v3990 = vmax.f32 %v3892, 0.0
    %v3991 = vpack.c.bf16 %v3896, %v3895
    %v3992 = vpack.c.bf16 %v3898, %v3897
    %v3993 = vpack.c.bf16 %v3900, %v3899
    %v3994 = vpack.c.bf16 %v3902, %v3901
    %v3995 = vpack.c.bf16 %v3904, %v3903
    %v3996 = vpack.c.bf16 %v3906, %v3905
    %v3997 = vpack.c.bf16 %v3908, %v3907
    %v3998 = vpack.c.bf16 %v3910, %v3909
    %v3999 = vpack.c.bf16 %v3912, %v3911
    %v4000 = vpack.c.bf16 %v3914, %v3913
    %v4001 = vpack.c.bf16 %v3916, %v3915
    %v4002 = vpack.c.bf16 %v3918, %v3917
    %v4003 = vpack.c.bf16 %v3920, %v3919
    %v4004 = vpack.c.bf16 %v3922, %v3921
    %v4005 = vpack.c.bf16 %v3924, %v3923
    %v4006 = vpack.c.bf16 %v3926, %v3925
    %v4007 = vpack.c.bf16 %v3928, %v3927
    %v4008 = vpack.c.bf16 %v3930, %v3929
    %v4009 = vpack.c.bf16 %v3932, %v3931
    %v4010 = vpack.c.bf16 %v3934, %v3933
    %v4011 = vpack.c.bf16 %v3936, %v3935
    %v4012 = vpack.c.bf16 %v3938, %v3937
    %v4013 = vpack.c.bf16 %v3940, %v3939
    %v4014 = vpack.c.bf16 %v3942, %v3941
    %v4015 = vpack.c.bf16 %v3944, %v3943
    %v4016 = vpack.c.bf16 %v3946, %v3945
    %v4017 = vpack.c.bf16 %v3948, %v3947
    %v4018 = vpack.c.bf16 %v3950, %v3949
    %v4019 = vpack.c.bf16 %v3952, %v3951
    %v4020 = vpack.c.bf16 %v3954, %v3953
    %v4021 = vpack.c.bf16 %v3956, %v3955
    %v4022 = vpack.c.bf16 %v3958, %v3957
    %v4023 = vpack.c.bf16 %v3960, %v3959
    %v4024 = vpack.c.bf16 %v3962, %v3961
    %v4025 = vpack.c.bf16 %v3964, %v3963
    %v4026 = vpack.c.bf16 %v3966, %v3965
    %v4027 = vpack.c.bf16 %v3968, %v3967
    %v4028 = vpack.c.bf16 %v3970, %v3969
    %v4029 = vpack.c.bf16 %v3972, %v3971
    %v4030 = vpack.c.bf16 %v3974, %v3973
    %v4031 = vpack.c.bf16 %v3976, %v3975
    %v4032 = vpack.c.bf16 %v3978, %v3977
    %v4033 = vpack.c.bf16 %v3980, %v3979
    %v4034 = vpack.c.bf16 %v3982, %v3981
    %v4035 = vpack.c.bf16 %v3984, %v3983
    %v4036 = vpack.c.bf16 %v3986, %v3985
    %v4037 = vpack.c.bf16 %v3988, %v3987
    %v4038 = vpack.c.bf16 %v3990, %v3989
    %v4039 = vld [vmem:[%s5] sm:$0xf]
    %v4040 = vld [vmem:[%s5 + $0x4] sm:$0xf]
    %v4041 = vld [vmem:[%s5 + $0x8] sm:$0xf]
    %v4042 = vld [vmem:[%s5 + $0xc] sm:$0xf]
    %v4043 = vld [vmem:[%s5 + $0x10] sm:$0xf]
    %v4044 = vld [vmem:[%s5 + $0x14] sm:$0xf]
    %v4045 = vld [vmem:[%s5 + $0x18] sm:$0xf]
    %v4046 = vld [vmem:[%s5 + $0x1c] sm:$0xf]
    %v4047 = vld [vmem:[%s5 + $0x20] sm:$0xf]
    %v4048 = vld [vmem:[%s5 + $0x24] sm:$0xf]
    %v4049 = vld [vmem:[%s5 + $0x28] sm:$0xf]
    %v4050 = vld [vmem:[%s5 + $0x2c] sm:$0xf]
    %v4051 = vld [vmem:[%s5 + $0x30] sm:$0xf]
    %v4052 = vld [vmem:[%s5 + $0x34] sm:$0xf]
    %v4053 = vld [vmem:[%s5 + $0x38] sm:$0xf]
    %v4054 = vld [vmem:[%s5 + $0x3c] sm:$0xf]
    %v4055 = vld [vmem:[%s6] sm:$0x1]
    %v4057 = vlaneseq
    %v4058 = vshrl.u32 %v4057, 7
    %v4059 = vsub.s32 0, %v4058
    %v4060 = vrot.slane %v4055, %v4059
    %v4078 = vunpack.c.l.b16 %v4039
    %v4079 = vunpack.c.l.b16 %v4040
    %v4080 = vunpack.c.l.b16 %v4041
    %v4081 = vunpack.c.l.b16 %v4042
    %v4082 = vunpack.c.l.b16 %v4043
    %v4083 = vunpack.c.l.b16 %v4044
    %v4084 = vunpack.c.l.b16 %v4045
    %v4085 = vunpack.c.l.b16 %v4046
    %v4086 = vunpack.c.l.b16 %v4047
    %v4087 = vunpack.c.l.b16 %v4048
    %v4088 = vunpack.c.l.b16 %v4049
    %v4089 = vunpack.c.l.b16 %v4050
    %v4090 = vunpack.c.l.b16 %v4051
    %v4091 = vunpack.c.l.b16 %v4052
    %v4092 = vunpack.c.l.b16 %v4053
    %v4093 = vunpack.c.l.b16 %v4054
    %v4094 = vpack.c.b16 %v4079, %v4078
    %v4095 = vpack.c.b16 %v4081, %v4080
    %v4096 = vpack.c.b16 %v4083, %v4082
    %v4097 = vpack.c.b16 %v4085, %v4084
    %v4098 = vpack.c.b16 %v4087, %v4086
    %v4099 = vpack.c.b16 %v4089, %v4088
    %v4100 = vpack.c.b16 %v4091, %v4090
    %v4101 = vpack.c.b16 %v4093, %v4092
    %4110 = vmatprep.subr.bf16.mxu0 0
    %4111 = vmatpush1.bf16.msra.mxu0 %v4094
    %4112 = vmatprep.subr.bf16.mxu0 0
    %4113 = vmatpush1.bf16.msra.mxu0 %v4095
    %4114 = vmatprep.subr.bf16.mxu0 0
    %4115 = vmatpush1.bf16.msra.mxu0 %v4096
    %4116 = vmatprep.subr.bf16.mxu0 0
    %4117 = vmatpush1.bf16.msra.mxu0 %v4097
    %4118 = vmatprep.subr.bf16.mxu0 0
    %4119 = vmatpush1.bf16.msra.mxu0 %v4098
    %4120 = vmatprep.subr.bf16.mxu0 0
    %4121 = vmatpush1.bf16.msra.mxu0 %v4099
    %4122 = vmatprep.subr.bf16.mxu0 0
    %4123 = vmatpush1.bf16.msra.mxu0 %v4100
    %4124 = vmatprep.subr.bf16.mxu0 0
    %4125 = vmatpush1.bf16.msra.mxu0 %v4101
    %4126 = vmatprep.subr.bf16.mxu0 0
    %4127 = vmatpush1.bf16.msra.mxu0 0
    %4128 = vmatprep.subr.bf16.mxu0 0
    %4129 = vmatpush1.bf16.msra.mxu0 0
    %4130 = vmatprep.subr.bf16.mxu0 0
    %4131 = vmatpush1.bf16.msra.mxu0 0
    %4132 = vmatprep.subr.bf16.mxu0 0
    %4133 = vmatpush1.bf16.msra.mxu0 0
    %4134 = vmatprep.subr.bf16.mxu0 0
    %4135 = vmatpush1.bf16.msra.mxu0 0
    %4136 = vmatprep.subr.bf16.mxu0 0
    %4137 = vmatpush1.bf16.msra.mxu0 0
    %4138 = vmatprep.subr.bf16.mxu0 0
    %4139 = vmatpush1.bf16.msra.mxu0 0
    %4140 = vmatprep.subr.bf16.mxu0 0
    %4141 = vmatpush1.bf16.msra.mxu0 0
    %4142 = vmatprep.mubr.bf16.mxu0 0
    %4143 = vmatmul.mubr.bf16.gmra.mrb[0].mxu0 %v3991
    %v4144 = vpop.f32.mrb[0].mxu0
    %v4145 = vadd.f32 %v4060, %v4144
    %v4146 = vpop.f32.mrb[0].mxu0
    %v4147 = vpop.f32.mrb[0].mxu0
    %v4148 = vadd.f32 %v4060, %v4147
    %v4149 = vpop.f32.mrb[0].mxu0
    %4150 = vmatprep.mubr.bf16.mxu0 0
    %4151 = vmatmul.mubr.bf16.gmra.mrb[0].mxu0 %v3992
    %v4152 = vpop.f32.mrb[0].mxu0
    %v4153 = vadd.f32 %v4060, %v4152
    %v4154 = vpop.f32.mrb[0].mxu0
    %v4155 = vpop.f32.mrb[0].mxu0
    %v4156 = vadd.f32 %v4060, %v4155
    %v4157 = vpop.f32.mrb[0].mxu0
    %4158 = vmatprep.mubr.bf16.mxu0 0
    %4159 = vmatmul.mubr.bf16.gmra.mrb[0].mxu0 %v3993
    %v4160 = vpop.f32.mrb[0].mxu0
    %v4161 = vadd.f32 %v4060, %v4160
    %v4162 = vpop.f32.mrb[0].mxu0
    %v4163 = vpop.f32.mrb[0].mxu0
    %v4164 = vadd.f32 %v4060, %v4163
    %v4165 = vpop.f32.mrb[0].mxu0
    %4166 = vmatprep.mubr.bf16.mxu0 0
    %4167 = vmatmul.mubr.bf16.gmra.mrb[0].mxu0 %v3994
    %v4168 = vpop.f32.mrb[0].mxu0
    %v4169 = vadd.f32 %v4060, %v4168
    %v4170 = vpop.f32.mrb[0].mxu0
    %v4171 = vpop.f32.mrb[0].mxu0
    %v4172 = vadd.f32 %v4060, %v4171
    %v4173 = vpop.f32.mrb[0].mxu0
    %4174 = vmatprep.mubr.bf16.mxu0 0
    %4175 = vmatmul.mubr.bf16.gmra.mrb[0].mxu0 %v3995
    %v4176 = vpop.f32.mrb[0].mxu0
    %v4177 = vadd.f32 %v4060, %v4176
    %v4178 = vpop.f32.mrb[0].mxu0
    %v4179 = vpop.f32.mrb[0].mxu0
    %v4180 = vadd.f32 %v4060, %v4179
    %v4181 = vpop.f32.mrb[0].mxu0
    %4182 = vmatprep.mubr.bf16.mxu0 0
    %4183 = vmatmul.mubr.bf16.gmra.mrb[0].mxu0 %v3996
    %v4184 = vpop.f32.mrb[0].mxu0
    %v4185 = vadd.f32 %v4060, %v4184
    %v4186 = vpop.f32.mrb[0].mxu0
    %v4187 = vpop.f32.mrb[0].mxu0
    %v4188 = vadd.f32 %v4060, %v4187
    %v4189 = vpop.f32.mrb[0].mxu0
    %4190 = vmatprep.mubr.bf16.mxu0 0
    %4191 = vmatmul.mubr.bf16.gmra.mrb[0].mxu0 %v3997
    %v4192 = vpop.f32.mrb[0].mxu0
    %v4193 = vadd.f32 %v4060, %v4192
    %v4194 = vpop.f32.mrb[0].mxu0
    %v4195 = vpop.f32.mrb[0].mxu0
    %v4196 = vadd.f32 %v4060, %v4195
    %v4197 = vpop.f32.mrb[0].mxu0
    %4198 = vmatprep.mubr.bf16.mxu0 0
    %4199 = vmatmul.mubr.bf16.gmra.mrb[0].mxu0 %v3998
    %v4200 = vpop.f32.mrb[0].mxu0
    %v4201 = vadd.f32 %v4060, %v4200
    %v4202 = vpop.f32.mrb[0].mxu0
    %v4203 = vpop.f32.mrb[0].mxu0
    %v4204 = vadd.f32 %v4060, %v4203
    %v4205 = vpop.f32.mrb[0].mxu0
    %4206 = vmatprep.mubr.bf16.mxu0 0
    %4207 = vmatmul.mubr.bf16.gmra.mrb[0].mxu0 %v3999
    %v4208 = vpop.f32.mrb[0].mxu0
    %v4209 = vadd.f32 %v4060, %v4208
    %v4210 = vpop.f32.mrb[0].mxu0
    %v4211 = vpop.f32.mrb[0].mxu0
    %v4212 = vadd.f32 %v4060, %v4211
    %v4213 = vpop.f32.mrb[0].mxu0
    %4214 = vmatprep.mubr.bf16.mxu0 0
    %4215 = vmatmul.mubr.bf16.gmra.mrb[0].mxu0 %v4000
    %v4216 = vpop.f32.mrb[0].mxu0
    %v4217 = vadd.f32 %v4060, %v4216
    %v4218 = vpop.f32.mrb[0].mxu0
    %v4219 = vpop.f32.mrb[0].mxu0
    %v4220 = vadd.f32 %v4060, %v4219
    %v4221 = vpop.f32.mrb[0].mxu0
    %4222 = vmatprep.mubr.bf16.mxu0 0
    %4223 = vmatmul.mubr.bf16.gmra.mrb[0].mxu0 %v4001
    %v4224 = vpop.f32.mrb[0].mxu0
    %v4225 = vadd.f32 %v4060, %v4224
    %v4226 = vpop.f32.mrb[0].mxu0
    %v4227 = vpop.f32.mrb[0].mxu0
    %v4228 = vadd.f32 %v4060, %v4227
    %v4229 = vpop.f32.mrb[0].mxu0
    %4230 = vmatprep.mubr.bf16.mxu0 0
    %4231 = vmatmul.mubr.bf16.gmra.mrb[0].mxu0 %v4002
    %v4232 = vpop.f32.mrb[0].mxu0
    %v4233 = vadd.f32 %v4060, %v4232
    %v4234 = vpop.f32.mrb[0].mxu0
    %v4235 = vpop.f32.mrb[0].mxu0
    %v4236 = vadd.f32 %v4060, %v4235
    %v4237 = vpop.f32.mrb[0].mxu0
    %4238 = vmatprep.mubr.bf16.mxu0 0
    %4239 = vmatmul.mubr.bf16.gmra.mrb[0].mxu0 %v4003
    %v4240 = vpop.f32.mrb[0].mxu0
    %v4241 = vadd.f32 %v4060, %v4240
    %v4242 = vpop.f32.mrb[0].mxu0
    %v4243 = vpop.f32.mrb[0].mxu0
    %v4244 = vadd.f32 %v4060, %v4243
    %v4245 = vpop.f32.mrb[0].mxu0
    %4246 = vmatprep.mubr.bf16.mxu0 0
    %4247 = vmatmul.mubr.bf16.gmra.mrb[0].mxu0 %v4004
    %v4248 = vpop.f32.mrb[0].mxu0
    %v4249 = vadd.f32 %v4060, %v4248
    %v4250 = vpop.f32.mrb[0].mxu0
    %v4251 = vpop.f32.mrb[0].mxu0
    %v4252 = vadd.f32 %v4060, %v4251
    %v4253 = vpop.f32.mrb[0].mxu0
    %4254 = vmatprep.mubr.bf16.mxu0 0
    %4255 = vmatmul.mubr.bf16.gmra.mrb[0].mxu0 %v4005
    %v4256 = vpop.f32.mrb[0].mxu0
    %v4257 = vadd.f32 %v4060, %v4256
    %v4258 = vpop.f32.mrb[0].mxu0
    %v4259 = vpop.f32.mrb[0].mxu0
    %v4260 = vadd.f32 %v4060, %v4259
    %v4261 = vpop.f32.mrb[0].mxu0
    %4262 = vmatprep.mubr.bf16.mxu0 0
    %4263 = vmatmul.mubr.bf16.gmra.mrb[0].mxu0 %v4006
    %v4264 = vpop.f32.mrb[0].mxu0
    %v4265 = vadd.f32 %v4060, %v4264
    %v4266 = vpop.f32.mrb[0].mxu0
    %v4267 = vpop.f32.mrb[0].mxu0
    %v4268 = vadd.f32 %v4060, %v4267
    %v4269 = vpop.f32.mrb[0].mxu0
    %4270 = vmatprep.mubr.bf16.mxu0 0
    %4271 = vmatmul.mubr.bf16.gmra.mrb[0].mxu0 %v4007
    %v4272 = vpop.f32.mrb[0].mxu0
    %v4273 = vadd.f32 %v4060, %v4272
    %v4274 = vpop.f32.mrb[0].mxu0
    %v4275 = vpop.f32.mrb[0].mxu0
    %v4276 = vadd.f32 %v4060, %v4275
    %v4277 = vpop.f32.mrb[0].mxu0
    %4278 = vmatprep.mubr.bf16.mxu0 0
    %4279 = vmatmul.mubr.bf16.gmra.mrb[0].mxu0 %v4008
    %v4280 = vpop.f32.mrb[0].mxu0
    %v4281 = vadd.f32 %v4060, %v4280
    %v4282 = vpop.f32.mrb[0].mxu0
    %v4283 = vpop.f32.mrb[0].mxu0
    %v4284 = vadd.f32 %v4060, %v4283
    %v4285 = vpop.f32.mrb[0].mxu0
    %4286 = vmatprep.mubr.bf16.mxu0 0
    %4287 = vmatmul.mubr.bf16.gmra.mrb[0].mxu0 %v4009
    %v4288 = vpop.f32.mrb[0].mxu0
    %v4289 = vadd.f32 %v4060, %v4288
    %v4290 = vpop.f32.mrb[0].mxu0
    %v4291 = vpop.f32.mrb[0].mxu0
    %v4292 = vadd.f32 %v4060, %v4291
    %v4293 = vpop.f32.mrb[0].mxu0
    %4294 = vmatprep.mubr.bf16.mxu0 0
    %4295 = vmatmul.mubr.bf16.gmra.mrb[0].mxu0 %v4010
    %v4296 = vpop.f32.mrb[0].mxu0
    %v4297 = vadd.f32 %v4060, %v4296
    %v4298 = vpop.f32.mrb[0].mxu0
    %v4299 = vpop.f32.mrb[0].mxu0
    %v4300 = vadd.f32 %v4060, %v4299
    %v4301 = vpop.f32.mrb[0].mxu0
    %4302 = vmatprep.mubr.bf16.mxu0 0
    %4303 = vmatmul.mubr.bf16.gmra.mrb[0].mxu0 %v4011
    %v4304 = vpop.f32.mrb[0].mxu0
    %v4305 = vadd.f32 %v4060, %v4304
    %v4306 = vpop.f32.mrb[0].mxu0
    %v4307 = vpop.f32.mrb[0].mxu0
    %v4308 = vadd.f32 %v4060, %v4307
    %v4309 = vpop.f32.mrb[0].mxu0
    %4310 = vmatprep.mubr.bf16.mxu0 0
    %4311 = vmatmul.mubr.bf16.gmra.mrb[0].mxu0 %v4012
    %v4312 = vpop.f32.mrb[0].mxu0
    %v4313 = vadd.f32 %v4060, %v4312
    %v4314 = vpop.f32.mrb[0].mxu0
    %v4315 = vpop.f32.mrb[0].mxu0
    %v4316 = vadd.f32 %v4060, %v4315
    %v4317 = vpop.f32.mrb[0].mxu0
    %4318 = vmatprep.mubr.bf16.mxu0 0
    %4319 = vmatmul.mubr.bf16.gmra.mrb[0].mxu0 %v4013
    %v4320 = vpop.f32.mrb[0].mxu0
    %v4321 = vadd.f32 %v4060, %v4320
    %v4322 = vpop.f32.mrb[0].mxu0
    %v4323 = vpop.f32.mrb[0].mxu0
    %v4324 = vadd.f32 %v4060, %v4323
    %v4325 = vpop.f32.mrb[0].mxu0
    %4326 = vmatprep.mubr.bf16.mxu0 0
    %4327 = vmatmul.mubr.bf16.gmra.mrb[0].mxu0 %v4014
    %v4328 = vpop.f32.mrb[0].mxu0
    %v4329 = vadd.f32 %v4060, %v4328
    %v4330 = vpop.f32.mrb[0].mxu0
    %v4331 = vpop.f32.mrb[0].mxu0
    %v4332 = vadd.f32 %v4060, %v4331
    %v4333 = vpop.f32.mrb[0].mxu0
    %4334 = vmatprep.mubr.bf16.mxu0 0
    %4335 = vmatmul.mubr.bf16.gmra.mrb[0].mxu0 %v4015
    %v4336 = vpop.f32.mrb[0].mxu0
    %v4337 = vadd.f32 %v4060, %v4336
    %v4338 = vpop.f32.mrb[0].mxu0
    %v4339 = vpop.f32.mrb[0].mxu0
    %v4340 = vadd.f32 %v4060, %v4339
    %v4341 = vpop.f32.mrb[0].mxu0
    %4342 = vmatprep.mubr.bf16.mxu0 0
    %4343 = vmatmul.mubr.bf16.gmra.mrb[0].mxu0 %v4016
    %v4344 = vpop.f32.mrb[0].mxu0
    %v4345 = vadd.f32 %v4060, %v4344
    %v4346 = vpop.f32.mrb[0].mxu0
    %v4347 = vpop.f32.mrb[0].mxu0
    %v4348 = vadd.f32 %v4060, %v4347
    %v4349 = vpop.f32.mrb[0].mxu0
    %4350 = vmatprep.mubr.bf16.mxu0 0
    %4351 = vmatmul.mubr.bf16.gmra.mrb[0].mxu0 %v4017
    %v4352 = vpop.f32.mrb[0].mxu0
    %v4353 = vadd.f32 %v4060, %v4352
    %v4354 = vpop.f32.mrb[0].mxu0
    %v4355 = vpop.f32.mrb[0].mxu0
    %v4356 = vadd.f32 %v4060, %v4355
    %v4357 = vpop.f32.mrb[0].mxu0
    %4358 = vmatprep.mubr.bf16.mxu0 0
    %4359 = vmatmul.mubr.bf16.gmra.mrb[0].mxu0 %v4018
    %v4360 = vpop.f32.mrb[0].mxu0
    %v4361 = vadd.f32 %v4060, %v4360
    %v4362 = vpop.f32.mrb[0].mxu0
    %v4363 = vpop.f32.mrb[0].mxu0
    %v4364 = vadd.f32 %v4060, %v4363
    %v4365 = vpop.f32.mrb[0].mxu0
    %4366 = vmatprep.mubr.bf16.mxu0 0
    %4367 = vmatmul.mubr.bf16.gmra.mrb[0].mxu0 %v4019
    %v4368 = vpop.f32.mrb[0].mxu0
    %v4369 = vadd.f32 %v4060, %v4368
    %v4370 = vpop.f32.mrb[0].mxu0
    %v4371 = vpop.f32.mrb[0].mxu0
    %v4372 = vadd.f32 %v4060, %v4371
    %v4373 = vpop.f32.mrb[0].mxu0
    %4374 = vmatprep.mubr.bf16.mxu0 0
    %4375 = vmatmul.mubr.bf16.gmra.mrb[0].mxu0 %v4020
    %v4376 = vpop.f32.mrb[0].mxu0
    %v4377 = vadd.f32 %v4060, %v4376
    %v4378 = vpop.f32.mrb[0].mxu0
    %v4379 = vpop.f32.mrb[0].mxu0
    %v4380 = vadd.f32 %v4060, %v4379
    %v4381 = vpop.f32.mrb[0].mxu0
    %4382 = vmatprep.mubr.bf16.mxu0 0
    %4383 = vmatmul.mubr.bf16.gmra.mrb[0].mxu0 %v4021
    %v4384 = vpop.f32.mrb[0].mxu0
    %v4385 = vadd.f32 %v4060, %v4384
    %v4386 = vpop.f32.mrb[0].mxu0
    %v4387 = vpop.f32.mrb[0].mxu0
    %v4388 = vadd.f32 %v4060, %v4387
    %v4389 = vpop.f32.mrb[0].mxu0
    %4390 = vmatprep.mubr.bf16.mxu0 0
    %4391 = vmatmul.mubr.bf16.gmra.mrb[0].mxu0 %v4022
    %v4392 = vpop.f32.mrb[0].mxu0
    %v4393 = vadd.f32 %v4060, %v4392
    %v4394 = vpop.f32.mrb[0].mxu0
    %v4395 = vpop.f32.mrb[0].mxu0
    %v4396 = vadd.f32 %v4060, %v4395
    %v4397 = vpop.f32.mrb[0].mxu0
    %4398 = vmatprep.mubr.bf16.mxu0 0
    %4399 = vmatmul.mubr.bf16.gmra.mrb[0].mxu0 %v4023
    %v4400 = vpop.f32.mrb[0].mxu0
    %v4401 = vadd.f32 %v4060, %v4400
    %v4402 = vpop.f32.mrb[0].mxu0
    %v4403 = vpop.f32.mrb[0].mxu0
    %v4404 = vadd.f32 %v4060, %v4403
    %v4405 = vpop.f32.mrb[0].mxu0
    %4406 = vmatprep.mubr.bf16.mxu0 0
    %4407 = vmatmul.mubr.bf16.gmra.mrb[0].mxu0 %v4024
    %v4408 = vpop.f32.mrb[0].mxu0
    %v4409 = vadd.f32 %v4060, %v4408
    %v4410 = vpop.f32.mrb[0].mxu0
    %v4411 = vpop.f32.mrb[0].mxu0
    %v4412 = vadd.f32 %v4060, %v4411
    %v4413 = vpop.f32.mrb[0].mxu0
    %4414 = vmatprep.mubr.bf16.mxu0 0
    %4415 = vmatmul.mubr.bf16.gmra.mrb[0].mxu0 %v4025
    %v4416 = vpop.f32.mrb[0].mxu0
    %v4417 = vadd.f32 %v4060, %v4416
    %v4418 = vpop.f32.mrb[0].mxu0
    %v4419 = vpop.f32.mrb[0].mxu0
    %v4420 = vadd.f32 %v4060, %v4419
    %v4421 = vpop.f32.mrb[0].mxu0
    %4422 = vmatprep.mubr.bf16.mxu0 0
    %4423 = vmatmul.mubr.bf16.gmra.mrb[0].mxu0 %v4026
    %v4424 = vpop.f32.mrb[0].mxu0
    %v4425 = vadd.f32 %v4060, %v4424
    %v4426 = vpop.f32.mrb[0].mxu0
    %v4427 = vpop.f32.mrb[0].mxu0
    %v4428 = vadd.f32 %v4060, %v4427
    %v4429 = vpop.f32.mrb[0].mxu0
    %4430 = vmatprep.mubr.bf16.mxu0 0
    %4431 = vmatmul.mubr.bf16.gmra.mrb[0].mxu0 %v4027
    %v4432 = vpop.f32.mrb[0].mxu0
    %v4433 = vadd.f32 %v4060, %v4432
    %v4434 = vpop.f32.mrb[0].mxu0
    %v4435 = vpop.f32.mrb[0].mxu0
    %v4436 = vadd.f32 %v4060, %v4435
    %v4437 = vpop.f32.mrb[0].mxu0
    %4438 = vmatprep.mubr.bf16.mxu0 0
    %4439 = vmatmul.mubr.bf16.gmra.mrb[0].mxu0 %v4028
    %v4440 = vpop.f32.mrb[0].mxu0
    %v4441 = vadd.f32 %v4060, %v4440
    %v4442 = vpop.f32.mrb[0].mxu0
    %v4443 = vpop.f32.mrb[0].mxu0
    %v4444 = vadd.f32 %v4060, %v4443
    %v4445 = vpop.f32.mrb[0].mxu0
    %4446 = vmatprep.mubr.bf16.mxu0 0
    %4447 = vmatmul.mubr.bf16.gmra.mrb[0].mxu0 %v4029
    %v4448 = vpop.f32.mrb[0].mxu0
    %v4449 = vadd.f32 %v4060, %v4448
    %v4450 = vpop.f32.mrb[0].mxu0
    %v4451 = vpop.f32.mrb[0].mxu0
    %v4452 = vadd.f32 %v4060, %v4451
    %v4453 = vpop.f32.mrb[0].mxu0
    %4454 = vmatprep.mubr.bf16.mxu0 0
    %4455 = vmatmul.mubr.bf16.gmra.mrb[0].mxu0 %v4030
    %v4456 = vpop.f32.mrb[0].mxu0
    %v4457 = vadd.f32 %v4060, %v4456
    %v4458 = vpop.f32.mrb[0].mxu0
    %v4459 = vpop.f32.mrb[0].mxu0
    %v4460 = vadd.f32 %v4060, %v4459
    %v4461 = vpop.f32.mrb[0].mxu0
    %4462 = vmatprep.mubr.bf16.mxu0 0
    %4463 = vmatmul.mubr.bf16.gmra.mrb[0].mxu0 %v4031
    %v4464 = vpop.f32.mrb[0].mxu0
    %v4465 = vadd.f32 %v4060, %v4464
    %v4466 = vpop.f32.mrb[0].mxu0
    %v4467 = vpop.f32.mrb[0].mxu0
    %v4468 = vadd.f32 %v4060, %v4467
    %v4469 = vpop.f32.mrb[0].mxu0
    %4470 = vmatprep.mubr.bf16.mxu0 0
    %4471 = vmatmul.mubr.bf16.gmra.mrb[0].mxu0 %v4032
    %v4472 = vpop.f32.mrb[0].mxu0
    %v4473 = vadd.f32 %v4060, %v4472
    %v4474 = vpop.f32.mrb[0].mxu0
    %v4475 = vpop.f32.mrb[0].mxu0
    %v4476 = vadd.f32 %v4060, %v4475
    %v4477 = vpop.f32.mrb[0].mxu0
    %4478 = vmatprep.mubr.bf16.mxu0 0
    %4479 = vmatmul.mubr.bf16.gmra.mrb[0].mxu0 %v4033
    %v4480 = vpop.f32.mrb[0].mxu0
    %v4481 = vadd.f32 %v4060, %v4480
    %v4482 = vpop.f32.mrb[0].mxu0
    %v4483 = vpop.f32.mrb[0].mxu0
    %v4484 = vadd.f32 %v4060, %v4483
    %v4485 = vpop.f32.mrb[0].mxu0
    %4486 = vmatprep.mubr.bf16.mxu0 0
    %4487 = vmatmul.mubr.bf16.gmra.mrb[0].mxu0 %v4034
    %v4488 = vpop.f32.mrb[0].mxu0
    %v4489 = vadd.f32 %v4060, %v4488
    %v4490 = vpop.f32.mrb[0].mxu0
    %v4491 = vpop.f32.mrb[0].mxu0
    %v4492 = vadd.f32 %v4060, %v4491
    %v4493 = vpop.f32.mrb[0].mxu0
    %4494 = vmatprep.mubr.bf16.mxu0 0
    %4495 = vmatmul.mubr.bf16.gmra.mrb[0].mxu0 %v4035
    %v4496 = vpop.f32.mrb[0].mxu0
    %v4497 = vadd.f32 %v4060, %v4496
    %v4498 = vpop.f32.mrb[0].mxu0
    %v4499 = vpop.f32.mrb[0].mxu0
    %v4500 = vadd.f32 %v4060, %v4499
    %v4501 = vpop.f32.mrb[0].mxu0
    %4502 = vmatprep.mubr.bf16.mxu0 0
    %4503 = vmatmul.mubr.bf16.gmra.mrb[0].mxu0 %v4036
    %v4504 = vpop.f32.mrb[0].mxu0
    %v4505 = vadd.f32 %v4060, %v4504
    %v4506 = vpop.f32.mrb[0].mxu0
    %v4507 = vpop.f32.mrb[0].mxu0
    %v4508 = vadd.f32 %v4060, %v4507
    %v4509 = vpop.f32.mrb[0].mxu0
    %4510 = vmatprep.mubr.bf16.mxu0 0
    %4511 = vmatmul.mubr.bf16.gmra.mrb[0].mxu0 %v4037
    %v4512 = vpop.f32.mrb[0].mxu0
    %v4513 = vadd.f32 %v4060, %v4512
    %v4514 = vpop.f32.mrb[0].mxu0
    %v4515 = vpop.f32.mrb[0].mxu0
    %v4516 = vadd.f32 %v4060, %v4515
    %v4517 = vpop.f32.mrb[0].mxu0
    %4518 = vmatprep.mubr.bf16.mxu0 0
    %4519 = vmatmul.mubr.bf16.gmra.mrb[0].mxu0 %v4038
    %v4520 = vpop.f32.mrb[0].mxu0
    %v4521 = vadd.f32 %v4060, %v4520
    %v4522 = vpop.f32.mrb[0].mxu0
    %v4523 = vpop.f32.mrb[0].mxu0
    %v4524 = vadd.f32 %v4060, %v4523
    %v4525 = vpop.f32.mrb[0].mxu0
    %4526 = vdwg.mxu0
    %v4527 = vmax.f32 %v4145, 0.0
    %v4528 = vmax.f32 %v4148, 0.0
    %v4529 = vmax.f32 %v4153, 0.0
    %v4530 = vmax.f32 %v4156, 0.0
    %v4531 = vmax.f32 %v4161, 0.0
    %v4532 = vmax.f32 %v4164, 0.0
    %v4533 = vmax.f32 %v4169, 0.0
    %v4534 = vmax.f32 %v4172, 0.0
    %v4535 = vmax.f32 %v4177, 0.0
    %v4536 = vmax.f32 %v4180, 0.0
    %v4537 = vmax.f32 %v4185, 0.0
    %v4538 = vmax.f32 %v4188, 0.0
    %v4539 = vmax.f32 %v4193, 0.0
    %v4540 = vmax.f32 %v4196, 0.0
    %v4541 = vmax.f32 %v4201, 0.0
    %v4542 = vmax.f32 %v4204, 0.0
    %v4543 = vmax.f32 %v4209, 0.0
    %v4544 = vmax.f32 %v4212, 0.0
    %v4545 = vmax.f32 %v4217, 0.0
    %v4546 = vmax.f32 %v4220, 0.0
    %v4547 = vmax.f32 %v4225, 0.0
    %v4548 = vmax.f32 %v4228, 0.0
    %v4549 = vmax.f32 %v4233, 0.0
    %v4550 = vmax.f32 %v4236, 0.0
    %v4551 = vmax.f32 %v4241, 0.0
    %v4552 = vmax.f32 %v4244, 0.0
    %v4553 = vmax.f32 %v4249, 0.0
    %v4554 = vmax.f32 %v4252, 0.0
    %v4555 = vmax.f32 %v4257, 0.0
    %v4556 = vmax.f32 %v4260, 0.0
    %v4557 = vmax.f32 %v4265, 0.0
    %v4558 = vmax.f32 %v4268, 0.0
    %v4559 = vmax.f32 %v4273, 0.0
    %v4560 = vmax.f32 %v4276, 0.0
    %v4561 = vmax.f32 %v4281, 0.0
    %v4562 = vmax.f32 %v4284, 0.0
    %v4563 = vmax.f32 %v4289, 0.0
    %v4564 = vmax.f32 %v4292, 0.0
    %v4565 = vmax.f32 %v4297, 0.0
    %v4566 = vmax.f32 %v4300, 0.0
    %v4567 = vmax.f32 %v4305, 0.0
    %v4568 = vmax.f32 %v4308, 0.0
    %v4569 = vmax.f32 %v4313, 0.0
    %v4570 = vmax.f32 %v4316, 0.0
    %v4571 = vmax.f32 %v4321, 0.0
    %v4572 = vmax.f32 %v4324, 0.0
    %v4573 = vmax.f32 %v4329, 0.0
    %v4574 = vmax.f32 %v4332, 0.0
    %v4575 = vmax.f32 %v4337, 0.0
    %v4576 = vmax.f32 %v4340, 0.0
    %v4577 = vmax.f32 %v4345, 0.0
    %v4578 = vmax.f32 %v4348, 0.0
    %v4579 = vmax.f32 %v4353, 0.0
    %v4580 = vmax.f32 %v4356, 0.0
    %v4581 = vmax.f32 %v4361, 0.0
    %v4582 = vmax.f32 %v4364, 0.0
    %v4583 = vmax.f32 %v4369, 0.0
    %v4584 = vmax.f32 %v4372, 0.0
    %v4585 = vmax.f32 %v4377, 0.0
    %v4586 = vmax.f32 %v4380, 0.0
    %v4587 = vmax.f32 %v4385, 0.0
    %v4588 = vmax.f32 %v4388, 0.0
    %v4589 = vmax.f32 %v4393, 0.0
    %v4590 = vmax.f32 %v4396, 0.0
    %v4591 = vmax.f32 %v4401, 0.0
    %v4592 = vmax.f32 %v4404, 0.0
    %v4593 = vmax.f32 %v4409, 0.0
    %v4594 = vmax.f32 %v4412, 0.0
    %v4595 = vmax.f32 %v4417, 0.0
    %v4596 = vmax.f32 %v4420, 0.0
    %v4597 = vmax.f32 %v4425, 0.0
    %v4598 = vmax.f32 %v4428, 0.0
    %v4599 = vmax.f32 %v4433, 0.0
    %v4600 = vmax.f32 %v4436, 0.0
    %v4601 = vmax.f32 %v4441, 0.0
    %v4602 = vmax.f32 %v4444, 0.0
    %v4603 = vmax.f32 %v4449, 0.0
    %v4604 = vmax.f32 %v4452, 0.0
    %v4605 = vmax.f32 %v4457, 0.0
    %v4606 = vmax.f32 %v4460, 0.0
    %v4607 = vmax.f32 %v4465, 0.0
    %v4608 = vmax.f32 %v4468, 0.0
    %v4609 = vmax.f32 %v4473, 0.0
    %v4610 = vmax.f32 %v4476, 0.0
    %v4611 = vmax.f32 %v4481, 0.0
    %v4612 = vmax.f32 %v4484, 0.0
    %v4613 = vmax.f32 %v4489, 0.0
    %v4614 = vmax.f32 %v4492, 0.0
    %v4615 = vmax.f32 %v4497, 0.0
    %v4616 = vmax.f32 %v4500, 0.0
    %v4617 = vmax.f32 %v4505, 0.0
    %v4618 = vmax.f32 %v4508, 0.0
    %v4619 = vmax.f32 %v4513, 0.0
    %v4620 = vmax.f32 %v4516, 0.0
    %v4621 = vmax.f32 %v4521, 0.0
    %v4622 = vmax.f32 %v4524, 0.0
    %4623 = vst [vmem:[#allocation7] sm:$0xff] %v4527
    %4624 = vst [vmem:[#allocation7 + $0x8] sm:$0xff] %v4528
    %4625 = vst [vmem:[#allocation7 + $0x10] sm:$0xff] %v4529
    %4626 = vst [vmem:[#allocation7 + $0x18] sm:$0xff] %v4530
    %4627 = vst [vmem:[#allocation7 + $0x20] sm:$0xff] %v4531
    %4628 = vst [vmem:[#allocation7 + $0x28] sm:$0xff] %v4532
    %4629 = vst [vmem:[#allocation7 + $0x30] sm:$0xff] %v4533
    %4630 = vst [vmem:[#allocation7 + $0x38] sm:$0xff] %v4534
    %4631 = vst [vmem:[#allocation7 + $0x40] sm:$0xff] %v4535
    %4632 = vst [vmem:[#allocation7 + $0x48] sm:$0xff] %v4536
    %4633 = vst [vmem:[#allocation7 + $0x50] sm:$0xff] %v4537
    %4634 = vst [vmem:[#allocation7 + $0x58] sm:$0xff] %v4538
    %4635 = vst [vmem:[#allocation7 + $0x60] sm:$0xff] %v4539
    %4636 = vst [vmem:[#allocation7 + $0x68] sm:$0xff] %v4540
    %4637 = vst [vmem:[#allocation7 + $0x70] sm:$0xff] %v4541
    %4638 = vst [vmem:[#allocation7 + $0x78] sm:$0xff] %v4542
    %4639 = vst [vmem:[#allocation7 + $0x80] sm:$0xff] %v4543
    %4640 = vst [vmem:[#allocation7 + $0x88] sm:$0xff] %v4544
    %4641 = vst [vmem:[#allocation7 + $0x90] sm:$0xff] %v4545
    %4642 = vst [vmem:[#allocation7 + $0x98] sm:$0xff] %v4546
    %4643 = vst [vmem:[#allocation7 + $0xa0] sm:$0xff] %v4547
    %4644 = vst [vmem:[#allocation7 + $0xa8] sm:$0xff] %v4548
    %4645 = vst [vmem:[#allocation7 + $0xb0] sm:$0xff] %v4549
    %4646 = vst [vmem:[#allocation7 + $0xb8] sm:$0xff] %v4550
    %4647 = vst [vmem:[#allocation7 + $0xc0] sm:$0xff] %v4551
    %4648 = vst [vmem:[#allocation7 + $0xc8] sm:$0xff] %v4552
    %4649 = vst [vmem:[#allocation7 + $0xd0] sm:$0xff] %v4553
    %4650 = vst [vmem:[#allocation7 + $0xd8] sm:$0xff] %v4554
    %4651 = vst [vmem:[#allocation7 + $0xe0] sm:$0xff] %v4555
    %4652 = vst [vmem:[#allocation7 + $0xe8] sm:$0xff] %v4556
    %4653 = vst [vmem:[#allocation7 + $0xf0] sm:$0xff] %v4557
    %4654 = vst [vmem:[#allocation7 + $0xf8] sm:$0xff] %v4558
    %4655 = vst [vmem:[#allocation7 + $0x100] sm:$0xff] %v4559
    %4656 = vst [vmem:[#allocation7 + $0x108] sm:$0xff] %v4560
    %4657 = vst [vmem:[#allocation7 + $0x110] sm:$0xff] %v4561
    %4658 = vst [vmem:[#allocation7 + $0x118] sm:$0xff] %v4562
    %4659 = vst [vmem:[#allocation7 + $0x120] sm:$0xff] %v4563
    %4660 = vst [vmem:[#allocation7 + $0x128] sm:$0xff] %v4564
    %4661 = vst [vmem:[#allocation7 + $0x130] sm:$0xff] %v4565
    %4662 = vst [vmem:[#allocation7 + $0x138] sm:$0xff] %v4566
    %4663 = vst [vmem:[#allocation7 + $0x140] sm:$0xff] %v4567
    %4664 = vst [vmem:[#allocation7 + $0x148] sm:$0xff] %v4568
    %4665 = vst [vmem:[#allocation7 + $0x150] sm:$0xff] %v4569
    %4666 = vst [vmem:[#allocation7 + $0x158] sm:$0xff] %v4570
    %4667 = vst [vmem:[#allocation7 + $0x160] sm:$0xff] %v4571
    %4668 = vst [vmem:[#allocation7 + $0x168] sm:$0xff] %v4572
    %4669 = vst [vmem:[#allocation7 + $0x170] sm:$0xff] %v4573
    %4670 = vst [vmem:[#allocation7 + $0x178] sm:$0xff] %v4574
    %4671 = vst [vmem:[#allocation7 + $0x180] sm:$0xff] %v4575
    %4672 = vst [vmem:[#allocation7 + $0x188] sm:$0xff] %v4576
    %4673 = vst [vmem:[#allocation7 + $0x190] sm:$0xff] %v4577
    %4674 = vst [vmem:[#allocation7 + $0x198] sm:$0xff] %v4578
    %4675 = vst [vmem:[#allocation7 + $0x1a0] sm:$0xff] %v4579
    %4676 = vst [vmem:[#allocation7 + $0x1a8] sm:$0xff] %v4580
    %4677 = vst [vmem:[#allocation7 + $0x1b0] sm:$0xff] %v4581
    %4678 = vst [vmem:[#allocation7 + $0x1b8] sm:$0xff] %v4582
    %4679 = vst [vmem:[#allocation7 + $0x1c0] sm:$0xff] %v4583
    %4680 = vst [vmem:[#allocation7 + $0x1c8] sm:$0xff] %v4584
    %4681 = vst [vmem:[#allocation7 + $0x1d0] sm:$0xff] %v4585
    %4682 = vst [vmem:[#allocation7 + $0x1d8] sm:$0xff] %v4586
    %4683 = vst [vmem:[#allocation7 + $0x1e0] sm:$0xff] %v4587
    %4684 = vst [vmem:[#allocation7 + $0x1e8] sm:$0xff] %v4588
    %4685 = vst [vmem:[#allocation7 + $0x1f0] sm:$0xff] %v4589
    %4686 = vst [vmem:[#allocation7 + $0x1f8] sm:$0xff] %v4590
    %4687 = vst [vmem:[#allocation7 + $0x200] sm:$0xff] %v4591
    %4688 = vst [vmem:[#allocation7 + $0x208] sm:$0xff] %v4592
    %4689 = vst [vmem:[#allocation7 + $0x210] sm:$0xff] %v4593
    %4690 = vst [vmem:[#allocation7 + $0x218] sm:$0xff] %v4594
    %4691 = vst [vmem:[#allocation7 + $0x220] sm:$0xff] %v4595
    %4692 = vst [vmem:[#allocation7 + $0x228] sm:$0xff] %v4596
    %4693 = vst [vmem:[#allocation7 + $0x230] sm:$0xff] %v4597
    %4694 = vst [vmem:[#allocation7 + $0x238] sm:$0xff] %v4598
    %4695 = vst [vmem:[#allocation7 + $0x240] sm:$0xff] %v4599
    %4696 = vst [vmem:[#allocation7 + $0x248] sm:$0xff] %v4600
    %4697 = vst [vmem:[#allocation7 + $0x250] sm:$0xff] %v4601
    %4698 = vst [vmem:[#allocation7 + $0x258] sm:$0xff] %v4602
    %4699 = vst [vmem:[#allocation7 + $0x260] sm:$0xff] %v4603
    %4700 = vst [vmem:[#allocation7 + $0x268] sm:$0xff] %v4604
    %4701 = vst [vmem:[#allocation7 + $0x270] sm:$0xff] %v4605
    %4702 = vst [vmem:[#allocation7 + $0x278] sm:$0xff] %v4606
    %4703 = vst [vmem:[#allocation7 + $0x280] sm:$0xff] %v4607
    %4704 = vst [vmem:[#allocation7 + $0x288] sm:$0xff] %v4608
    %4705 = vst [vmem:[#allocation7 + $0x290] sm:$0xff] %v4609
    %4706 = vst [vmem:[#allocation7 + $0x298] sm:$0xff] %v4610
    %4707 = vst [vmem:[#allocation7 + $0x2a0] sm:$0xff] %v4611
    %4708 = vst [vmem:[#allocation7 + $0x2a8] sm:$0xff] %v4612
    %4709 = vst [vmem:[#allocation7 + $0x2b0] sm:$0xff] %v4613
    %4710 = vst [vmem:[#allocation7 + $0x2b8] sm:$0xff] %v4614
    %4711 = vst [vmem:[#allocation7 + $0x2c0] sm:$0xff] %v4615
    %4712 = vst [vmem:[#allocation7 + $0x2c8] sm:$0xff] %v4616
    %4713 = vst [vmem:[#allocation7 + $0x2d0] sm:$0xff] %v4617
    %4714 = vst [vmem:[#allocation7 + $0x2d8] sm:$0xff] %v4618
    %4715 = vst [vmem:[#allocation7 + $0x2e0] sm:$0xff] %v4619
    %4716 = vst [vmem:[#allocation7 + $0x2e8] sm:$0xff] %v4620
    %4717 = vst [vmem:[#allocation7 + $0x2f0] sm:$0xff] %v4621
    %4718 = vst [vmem:[#allocation7 + $0x2f8] sm:$0xff] %v4622
    // Predicated region
    $region42: #{encoder_bert_forward.1} parent=1 // pred_check
      _
    $region43: #{encoder_bert_forward.1} parent=1 // pred_check_branch
      %4720 = sbr.rel (0) target = $region45
    $region44: #{encoder_bert_forward.1} parent=1 // pred_region
      // Predicated region
      $region46: #{encoder_bert_forward.1} parent=44 // pred_check
        _
      $region47: #{encoder_bert_forward.1} parent=44 // pred_check_branch
        %4722 = sbr.rel (0) target = $region49
      $region48: #{encoder_bert_forward.1} parent=44 // pred_region
        // Predicated region
        $region50: #{encoder_bert_forward.1} parent=48 // pred_check
          _
        $region51: #{encoder_bert_forward.1} parent=48 // pred_check_branch
          %4724 = sbr.rel (0) target = $region53
        $region52: #{encoder_bert_forward.1} parent=48 // pred_region
          // Predicated region
          $region65: #{encoder_bert_forward.1} parent=52 // pred_check
            _
          $region66: #{encoder_bert_forward.1} parent=52 // pred_check_branch
            %4887 = sbr.rel (0) target = $region68
          $region67: #{encoder_bert_forward.1} parent=52 // pred_region
            loop: start=0, step=1, limit=1
            $region69: #{encoder_bert_forward.1} parent=67 // loop_pre_header
              _
            $region70: #{encoder_bert_forward.1} parent=67 // loop_header
              %s4889 = sphi 0, %s4893
              %p4890 = scmp.ge.s32.totalorder %s4889, 1
              %s4894 = sphi [#allocation7], [#allocation7]
              %s4895 = sphi %s7, %s7
            $region71: #{encoder_bert_forward.1} parent=67 // loop_header_branch
              %4892 = sbr.rel (%p4890) target = $region75
            $region72: #{encoder_bert_forward.1} parent=67 // loop_body
              %v4896 = vld [vmem:[%s4894] sm:$0xff]
              %4897 = vst [vmem:[%s4895] sm:$0xff] %v4896
              %v4898 = vld [vmem:[%s4894 + $0x8] sm:$0xff]
              %4899 = vst [vmem:[%s4895 + $0x8] sm:$0xff] %v4898
              %v4900 = vld [vmem:[%s4894 + $0x10] sm:$0xff]
              %4901 = vst [vmem:[%s4895 + $0x10] sm:$0xff] %v4900
              %v4902 = vld [vmem:[%s4894 + $0x18] sm:$0xff]
              %4903 = vst [vmem:[%s4895 + $0x18] sm:$0xff] %v4902
              %v4904 = vld [vmem:[%s4894 + $0x20] sm:$0xff]
              %4905 = vst [vmem:[%s4895 + $0x20] sm:$0xff] %v4904
              %v4906 = vld [vmem:[%s4894 + $0x28] sm:$0xff]
              %4907 = vst [vmem:[%s4895 + $0x28] sm:$0xff] %v4906
              %v4908 = vld [vmem:[%s4894 + $0x30] sm:$0xff]
              %4909 = vst [vmem:[%s4895 + $0x30] sm:$0xff] %v4908
              %v4910 = vld [vmem:[%s4894 + $0x38] sm:$0xff]
              %4911 = vst [vmem:[%s4895 + $0x38] sm:$0xff] %v4910
              %v4912 = vld [vmem:[%s4894 + $0x40] sm:$0xff]
              %4913 = vst [vmem:[%s4895 + $0x40] sm:$0xff] %v4912
              %v4914 = vld [vmem:[%s4894 + $0x48] sm:$0xff]
              %4915 = vst [vmem:[%s4895 + $0x48] sm:$0xff] %v4914
              %v4916 = vld [vmem:[%s4894 + $0x50] sm:$0xff]
              %4917 = vst [vmem:[%s4895 + $0x50] sm:$0xff] %v4916
              %v4918 = vld [vmem:[%s4894 + $0x58] sm:$0xff]
              %4919 = vst [vmem:[%s4895 + $0x58] sm:$0xff] %v4918
              %v4920 = vld [vmem:[%s4894 + $0x60] sm:$0xff]
              %4921 = vst [vmem:[%s4895 + $0x60] sm:$0xff] %v4920
              %v4922 = vld [vmem:[%s4894 + $0x68] sm:$0xff]
              %4923 = vst [vmem:[%s4895 + $0x68] sm:$0xff] %v4922
              %v4924 = vld [vmem:[%s4894 + $0x70] sm:$0xff]
              %4925 = vst [vmem:[%s4895 + $0x70] sm:$0xff] %v4924
              %v4926 = vld [vmem:[%s4894 + $0x78] sm:$0xff]
              %4927 = vst [vmem:[%s4895 + $0x78] sm:$0xff] %v4926
              %v4928 = vld [vmem:[%s4894 + $0x80] sm:$0xff]
              %4929 = vst [vmem:[%s4895 + $0x80] sm:$0xff] %v4928
              %v4930 = vld [vmem:[%s4894 + $0x88] sm:$0xff]
              %4931 = vst [vmem:[%s4895 + $0x88] sm:$0xff] %v4930
              %v4932 = vld [vmem:[%s4894 + $0x90] sm:$0xff]
              %4933 = vst [vmem:[%s4895 + $0x90] sm:$0xff] %v4932
              %v4934 = vld [vmem:[%s4894 + $0x98] sm:$0xff]
              %4935 = vst [vmem:[%s4895 + $0x98] sm:$0xff] %v4934
              %v4936 = vld [vmem:[%s4894 + $0xa0] sm:$0xff]
              %4937 = vst [vmem:[%s4895 + $0xa0] sm:$0xff] %v4936
              %v4938 = vld [vmem:[%s4894 + $0xa8] sm:$0xff]
              %4939 = vst [vmem:[%s4895 + $0xa8] sm:$0xff] %v4938
              %v4940 = vld [vmem:[%s4894 + $0xb0] sm:$0xff]
              %4941 = vst [vmem:[%s4895 + $0xb0] sm:$0xff] %v4940
              %v4942 = vld [vmem:[%s4894 + $0xb8] sm:$0xff]
              %4943 = vst [vmem:[%s4895 + $0xb8] sm:$0xff] %v4942
              %v4944 = vld [vmem:[%s4894 + $0xc0] sm:$0xff]
              %4945 = vst [vmem:[%s4895 + $0xc0] sm:$0xff] %v4944
              %v4946 = vld [vmem:[%s4894 + $0xc8] sm:$0xff]
              %4947 = vst [vmem:[%s4895 + $0xc8] sm:$0xff] %v4946
              %v4948 = vld [vmem:[%s4894 + $0xd0] sm:$0xff]
              %4949 = vst [vmem:[%s4895 + $0xd0] sm:$0xff] %v4948
              %v4950 = vld [vmem:[%s4894 + $0xd8] sm:$0xff]
              %4951 = vst [vmem:[%s4895 + $0xd8] sm:$0xff] %v4950
              %v4952 = vld [vmem:[%s4894 + $0xe0] sm:$0xff]
              %4953 = vst [vmem:[%s4895 + $0xe0] sm:$0xff] %v4952
              %v4954 = vld [vmem:[%s4894 + $0xe8] sm:$0xff]
              %4955 = vst [vmem:[%s4895 + $0xe8] sm:$0xff] %v4954
              %v4956 = vld [vmem:[%s4894 + $0xf0] sm:$0xff]
              %4957 = vst [vmem:[%s4895 + $0xf0] sm:$0xff] %v4956
              %v4958 = vld [vmem:[%s4894 + $0xf8] sm:$0xff]
              %4959 = vst [vmem:[%s4895 + $0xf8] sm:$0xff] %v4958
              %v4960 = vld [vmem:[%s4894 + $0x100] sm:$0xff]
              %4961 = vst [vmem:[%s4895 + $0x100] sm:$0xff] %v4960
              %v4962 = vld [vmem:[%s4894 + $0x108] sm:$0xff]
              %4963 = vst [vmem:[%s4895 + $0x108] sm:$0xff] %v4962
              %v4964 = vld [vmem:[%s4894 + $0x110] sm:$0xff]
              %4965 = vst [vmem:[%s4895 + $0x110] sm:$0xff] %v4964
              %v4966 = vld [vmem:[%s4894 + $0x118] sm:$0xff]
              %4967 = vst [vmem:[%s4895 + $0x118] sm:$0xff] %v4966
              %v4968 = vld [vmem:[%s4894 + $0x120] sm:$0xff]
              %4969 = vst [vmem:[%s4895 + $0x120] sm:$0xff] %v4968
              %v4970 = vld [vmem:[%s4894 + $0x128] sm:$0xff]
              %4971 = vst [vmem:[%s4895 + $0x128] sm:$0xff] %v4970
              %v4972 = vld [vmem:[%s4894 + $0x130] sm:$0xff]
              %4973 = vst [vmem:[%s4895 + $0x130] sm:$0xff] %v4972
              %v4974 = vld [vmem:[%s4894 + $0x138] sm:$0xff]
              %4975 = vst [vmem:[%s4895 + $0x138] sm:$0xff] %v4974
              %v4976 = vld [vmem:[%s4894 + $0x140] sm:$0xff]
              %4977 = vst [vmem:[%s4895 + $0x140] sm:$0xff] %v4976
              %v4978 = vld [vmem:[%s4894 + $0x148] sm:$0xff]
              %4979 = vst [vmem:[%s4895 + $0x148] sm:$0xff] %v4978
              %v4980 = vld [vmem:[%s4894 + $0x150] sm:$0xff]
              %4981 = vst [vmem:[%s4895 + $0x150] sm:$0xff] %v4980
              %v4982 = vld [vmem:[%s4894 + $0x158] sm:$0xff]
              %4983 = vst [vmem:[%s4895 + $0x158] sm:$0xff] %v4982
              %v4984 = vld [vmem:[%s4894 + $0x160] sm:$0xff]
              %4985 = vst [vmem:[%s4895 + $0x160] sm:$0xff] %v4984
              %v4986 = vld [vmem:[%s4894 + $0x168] sm:$0xff]
              %4987 = vst [vmem:[%s4895 + $0x168] sm:$0xff] %v4986
              %v4988 = vld [vmem:[%s4894 + $0x170] sm:$0xff]
              %4989 = vst [vmem:[%s4895 + $0x170] sm:$0xff] %v4988
              %v4990 = vld [vmem:[%s4894 + $0x178] sm:$0xff]
              %4991 = vst [vmem:[%s4895 + $0x178] sm:$0xff] %v4990
              %v4992 = vld [vmem:[%s4894 + $0x180] sm:$0xff]
              %4993 = vst [vmem:[%s4895 + $0x180] sm:$0xff] %v4992
              %v4994 = vld [vmem:[%s4894 + $0x188] sm:$0xff]
              %4995 = vst [vmem:[%s4895 + $0x188] sm:$0xff] %v4994
              %v4996 = vld [vmem:[%s4894 + $0x190] sm:$0xff]
              %4997 = vst [vmem:[%s4895 + $0x190] sm:$0xff] %v4996
              %v4998 = vld [vmem:[%s4894 + $0x198] sm:$0xff]
              %4999 = vst [vmem:[%s4895 + $0x198] sm:$0xff] %v4998
              %v5000 = vld [vmem:[%s4894 + $0x1a0] sm:$0xff]
              %5001 = vst [vmem:[%s4895 + $0x1a0] sm:$0xff] %v5000
              %v5002 = vld [vmem:[%s4894 + $0x1a8] sm:$0xff]
              %5003 = vst [vmem:[%s4895 + $0x1a8] sm:$0xff] %v5002
              %v5004 = vld [vmem:[%s4894 + $0x1b0] sm:$0xff]
              %5005 = vst [vmem:[%s4895 + $0x1b0] sm:$0xff] %v5004
              %v5006 = vld [vmem:[%s4894 + $0x1b8] sm:$0xff]
              %5007 = vst [vmem:[%s4895 + $0x1b8] sm:$0xff] %v5006
              %v5008 = vld [vmem:[%s4894 + $0x1c0] sm:$0xff]
              %5009 = vst [vmem:[%s4895 + $0x1c0] sm:$0xff] %v5008
              %v5010 = vld [vmem:[%s4894 + $0x1c8] sm:$0xff]
              %5011 = vst [vmem:[%s4895 + $0x1c8] sm:$0xff] %v5010
              %v5012 = vld [vmem:[%s4894 + $0x1d0] sm:$0xff]
              %5013 = vst [vmem:[%s4895 + $0x1d0] sm:$0xff] %v5012
              %v5014 = vld [vmem:[%s4894 + $0x1d8] sm:$0xff]
              %5015 = vst [vmem:[%s4895 + $0x1d8] sm:$0xff] %v5014
              %v5016 = vld [vmem:[%s4894 + $0x1e0] sm:$0xff]
              %5017 = vst [vmem:[%s4895 + $0x1e0] sm:$0xff] %v5016
              %v5018 = vld [vmem:[%s4894 + $0x1e8] sm:$0xff]
              %5019 = vst [vmem:[%s4895 + $0x1e8] sm:$0xff] %v5018
              %v5020 = vld [vmem:[%s4894 + $0x1f0] sm:$0xff]
              %5021 = vst [vmem:[%s4895 + $0x1f0] sm:$0xff] %v5020
              %v5022 = vld [vmem:[%s4894 + $0x1f8] sm:$0xff]
              %5023 = vst [vmem:[%s4895 + $0x1f8] sm:$0xff] %v5022
              %v5024 = vld [vmem:[%s4894 + $0x200] sm:$0xff]
              %5025 = vst [vmem:[%s4895 + $0x200] sm:$0xff] %v5024
              %v5026 = vld [vmem:[%s4894 + $0x208] sm:$0xff]
              %5027 = vst [vmem:[%s4895 + $0x208] sm:$0xff] %v5026
              %v5028 = vld [vmem:[%s4894 + $0x210] sm:$0xff]
              %5029 = vst [vmem:[%s4895 + $0x210] sm:$0xff] %v5028
              %v5030 = vld [vmem:[%s4894 + $0x218] sm:$0xff]
              %5031 = vst [vmem:[%s4895 + $0x218] sm:$0xff] %v5030
              %v5032 = vld [vmem:[%s4894 + $0x220] sm:$0xff]
              %5033 = vst [vmem:[%s4895 + $0x220] sm:$0xff] %v5032
              %v5034 = vld [vmem:[%s4894 + $0x228] sm:$0xff]
              %5035 = vst [vmem:[%s4895 + $0x228] sm:$0xff] %v5034
              %v5036 = vld [vmem:[%s4894 + $0x230] sm:$0xff]
              %5037 = vst [vmem:[%s4895 + $0x230] sm:$0xff] %v5036
              %v5038 = vld [vmem:[%s4894 + $0x238] sm:$0xff]
              %5039 = vst [vmem:[%s4895 + $0x238] sm:$0xff] %v5038
              %v5040 = vld [vmem:[%s4894 + $0x240] sm:$0xff]
              %5041 = vst [vmem:[%s4895 + $0x240] sm:$0xff] %v5040
              %v5042 = vld [vmem:[%s4894 + $0x248] sm:$0xff]
              %5043 = vst [vmem:[%s4895 + $0x248] sm:$0xff] %v5042
              %v5044 = vld [vmem:[%s4894 + $0x250] sm:$0xff]
              %5045 = vst [vmem:[%s4895 + $0x250] sm:$0xff] %v5044
            $region73: #{encoder_bert_forward.1} parent=67 // loop_footer
              %s4893 = sadd.s32 1, %s4889
            $region74: #{encoder_bert_forward.1} parent=67 // loop_footer_branch
              %4888 = sbr.rel target = $region70
            $region75: #{encoder_bert_forward.1} parent=67 // loop_exit
              _
          $region68: #{encoder_bert_forward.1} parent=52 // pred_fallthru
            _
          // Predicated region
          $region76: #{encoder_bert_forward.1} parent=52 // pred_check
            _
          $region77: #{encoder_bert_forward.1} parent=52 // pred_check_branch
            %5047 = sbr.rel target = $region79
          $region78: #{encoder_bert_forward.1} parent=52 // pred_region
            _
          $region79: #{encoder_bert_forward.1} parent=52 // pred_fallthru
            _
        $region53: #{encoder_bert_forward.1} parent=48 // pred_fallthru
          _
        // Predicated region
        $region54: #{encoder_bert_forward.1} parent=48 // pred_check
          _
        $region55: #{encoder_bert_forward.1} parent=48 // pred_check_branch
          %4726 = sbr.rel target = $region57
        $region56: #{encoder_bert_forward.1} parent=48 // pred_region
          loop: start=0, step=1, limit=1
          $region58: #{encoder_bert_forward.1} parent=56 // loop_pre_header
            _
          $region59: #{encoder_bert_forward.1} parent=56 // loop_header
            %s4729 = sphi 0, %s4733
            %p4730 = scmp.ge.s32.totalorder %s4729, 1
            %s4734 = sphi [#allocation7], [#allocation7]
            %s4735 = sphi %s7, %s7
          $region60: #{encoder_bert_forward.1} parent=56 // loop_header_branch
            %4732 = sbr.rel (%p4730) target = $region64
          $region61: #{encoder_bert_forward.1} parent=56 // loop_body
            %v4736 = vld [vmem:[%s4734] sm:$0xff]
            %4737 = vst [vmem:[%s4735] sm:$0xff] %v4736
            %v4738 = vld [vmem:[%s4734 + $0x8] sm:$0xff]
            %4739 = vst [vmem:[%s4735 + $0x8] sm:$0xff] %v4738
            %v4740 = vld [vmem:[%s4734 + $0x10] sm:$0xff]
            %4741 = vst [vmem:[%s4735 + $0x10] sm:$0xff] %v4740
            %v4742 = vld [vmem:[%s4734 + $0x18] sm:$0xff]
            %4743 = vst [vmem:[%s4735 + $0x18] sm:$0xff] %v4742
            %v4744 = vld [vmem:[%s4734 + $0x20] sm:$0xff]
            %4745 = vst [vmem:[%s4735 + $0x20] sm:$0xff] %v4744
            %v4746 = vld [vmem:[%s4734 + $0x28] sm:$0xff]
            %4747 = vst [vmem:[%s4735 + $0x28] sm:$0xff] %v4746
            %v4748 = vld [vmem:[%s4734 + $0x30] sm:$0xff]
            %4749 = vst [vmem:[%s4735 + $0x30] sm:$0xff] %v4748
            %v4750 = vld [vmem:[%s4734 + $0x38] sm:$0xff]
            %4751 = vst [vmem:[%s4735 + $0x38] sm:$0xff] %v4750
            %v4752 = vld [vmem:[%s4734 + $0x40] sm:$0xff]
            %4753 = vst [vmem:[%s4735 + $0x40] sm:$0xff] %v4752
            %v4754 = vld [vmem:[%s4734 + $0x48] sm:$0xff]
            %4755 = vst [vmem:[%s4735 + $0x48] sm:$0xff] %v4754
            %v4756 = vld [vmem:[%s4734 + $0x50] sm:$0xff]
            %4757 = vst [vmem:[%s4735 + $0x50] sm:$0xff] %v4756
            %v4758 = vld [vmem:[%s4734 + $0x58] sm:$0xff]
            %4759 = vst [vmem:[%s4735 + $0x58] sm:$0xff] %v4758
            %v4760 = vld [vmem:[%s4734 + $0x60] sm:$0xff]
            %4761 = vst [vmem:[%s4735 + $0x60] sm:$0xff] %v4760
            %v4762 = vld [vmem:[%s4734 + $0x68] sm:$0xff]
            %4763 = vst [vmem:[%s4735 + $0x68] sm:$0xff] %v4762
            %v4764 = vld [vmem:[%s4734 + $0x70] sm:$0xff]
            %4765 = vst [vmem:[%s4735 + $0x70] sm:$0xff] %v4764
            %v4766 = vld [vmem:[%s4734 + $0x78] sm:$0xff]
            %4767 = vst [vmem:[%s4735 + $0x78] sm:$0xff] %v4766
            %v4768 = vld [vmem:[%s4734 + $0x80] sm:$0xff]
            %4769 = vst [vmem:[%s4735 + $0x80] sm:$0xff] %v4768
            %v4770 = vld [vmem:[%s4734 + $0x88] sm:$0xff]
            %4771 = vst [vmem:[%s4735 + $0x88] sm:$0xff] %v4770
            %v4772 = vld [vmem:[%s4734 + $0x90] sm:$0xff]
            %4773 = vst [vmem:[%s4735 + $0x90] sm:$0xff] %v4772
            %v4774 = vld [vmem:[%s4734 + $0x98] sm:$0xff]
            %4775 = vst [vmem:[%s4735 + $0x98] sm:$0xff] %v4774
            %v4776 = vld [vmem:[%s4734 + $0xa0] sm:$0xff]
            %4777 = vst [vmem:[%s4735 + $0xa0] sm:$0xff] %v4776
            %v4778 = vld [vmem:[%s4734 + $0xa8] sm:$0xff]
            %4779 = vst [vmem:[%s4735 + $0xa8] sm:$0xff] %v4778
            %v4780 = vld [vmem:[%s4734 + $0xb0] sm:$0xff]
            %4781 = vst [vmem:[%s4735 + $0xb0] sm:$0xff] %v4780
            %v4782 = vld [vmem:[%s4734 + $0xb8] sm:$0xff]
            %4783 = vst [vmem:[%s4735 + $0xb8] sm:$0xff] %v4782
            %v4784 = vld [vmem:[%s4734 + $0xc0] sm:$0xff]
            %4785 = vst [vmem:[%s4735 + $0xc0] sm:$0xff] %v4784
            %v4786 = vld [vmem:[%s4734 + $0xc8] sm:$0xff]
            %4787 = vst [vmem:[%s4735 + $0xc8] sm:$0xff] %v4786
            %v4788 = vld [vmem:[%s4734 + $0xd0] sm:$0xff]
            %4789 = vst [vmem:[%s4735 + $0xd0] sm:$0xff] %v4788
            %v4790 = vld [vmem:[%s4734 + $0xd8] sm:$0xff]
            %4791 = vst [vmem:[%s4735 + $0xd8] sm:$0xff] %v4790
            %v4792 = vld [vmem:[%s4734 + $0xe0] sm:$0xff]
            %4793 = vst [vmem:[%s4735 + $0xe0] sm:$0xff] %v4792
            %v4794 = vld [vmem:[%s4734 + $0xe8] sm:$0xff]
            %4795 = vst [vmem:[%s4735 + $0xe8] sm:$0xff] %v4794
            %v4796 = vld [vmem:[%s4734 + $0xf0] sm:$0xff]
            %4797 = vst [vmem:[%s4735 + $0xf0] sm:$0xff] %v4796
            %v4798 = vld [vmem:[%s4734 + $0xf8] sm:$0xff]
            %4799 = vst [vmem:[%s4735 + $0xf8] sm:$0xff] %v4798
            %v4800 = vld [vmem:[%s4734 + $0x100] sm:$0xff]
            %4801 = vst [vmem:[%s4735 + $0x100] sm:$0xff] %v4800
            %v4802 = vld [vmem:[%s4734 + $0x108] sm:$0xff]
            %4803 = vst [vmem:[%s4735 + $0x108] sm:$0xff] %v4802
            %v4804 = vld [vmem:[%s4734 + $0x110] sm:$0xff]
            %4805 = vst [vmem:[%s4735 + $0x110] sm:$0xff] %v4804
            %v4806 = vld [vmem:[%s4734 + $0x118] sm:$0xff]
            %4807 = vst [vmem:[%s4735 + $0x118] sm:$0xff] %v4806
            %v4808 = vld [vmem:[%s4734 + $0x120] sm:$0xff]
            %4809 = vst [vmem:[%s4735 + $0x120] sm:$0xff] %v4808
            %v4810 = vld [vmem:[%s4734 + $0x128] sm:$0xff]
            %4811 = vst [vmem:[%s4735 + $0x128] sm:$0xff] %v4810
            %v4812 = vld [vmem:[%s4734 + $0x130] sm:$0xff]
            %4813 = vst [vmem:[%s4735 + $0x130] sm:$0xff] %v4812
            %v4814 = vld [vmem:[%s4734 + $0x138] sm:$0xff]
            %4815 = vst [vmem:[%s4735 + $0x138] sm:$0xff] %v4814
            %v4816 = vld [vmem:[%s4734 + $0x140] sm:$0xff]
            %4817 = vst [vmem:[%s4735 + $0x140] sm:$0xff] %v4816
            %v4818 = vld [vmem:[%s4734 + $0x148] sm:$0xff]
            %4819 = vst [vmem:[%s4735 + $0x148] sm:$0xff] %v4818
            %v4820 = vld [vmem:[%s4734 + $0x150] sm:$0xff]
            %4821 = vst [vmem:[%s4735 + $0x150] sm:$0xff] %v4820
            %v4822 = vld [vmem:[%s4734 + $0x158] sm:$0xff]
            %4823 = vst [vmem:[%s4735 + $0x158] sm:$0xff] %v4822
            %v4824 = vld [vmem:[%s4734 + $0x160] sm:$0xff]
            %4825 = vst [vmem:[%s4735 + $0x160] sm:$0xff] %v4824
            %v4826 = vld [vmem:[%s4734 + $0x168] sm:$0xff]
            %4827 = vst [vmem:[%s4735 + $0x168] sm:$0xff] %v4826
            %v4828 = vld [vmem:[%s4734 + $0x170] sm:$0xff]
            %4829 = vst [vmem:[%s4735 + $0x170] sm:$0xff] %v4828
            %v4830 = vld [vmem:[%s4734 + $0x178] sm:$0xff]
            %4831 = vst [vmem:[%s4735 + $0x178] sm:$0xff] %v4830
            %v4832 = vld [vmem:[%s4734 + $0x180] sm:$0xff]
            %4833 = vst [vmem:[%s4735 + $0x180] sm:$0xff] %v4832
            %v4834 = vld [vmem:[%s4734 + $0x188] sm:$0xff]
            %4835 = vst [vmem:[%s4735 + $0x188] sm:$0xff] %v4834
            %v4836 = vld [vmem:[%s4734 + $0x190] sm:$0xff]
            %4837 = vst [vmem:[%s4735 + $0x190] sm:$0xff] %v4836
            %v4838 = vld [vmem:[%s4734 + $0x198] sm:$0xff]
            %4839 = vst [vmem:[%s4735 + $0x198] sm:$0xff] %v4838
            %v4840 = vld [vmem:[%s4734 + $0x1a0] sm:$0xff]
            %4841 = vst [vmem:[%s4735 + $0x1a0] sm:$0xff] %v4840
            %v4842 = vld [vmem:[%s4734 + $0x1a8] sm:$0xff]
            %4843 = vst [vmem:[%s4735 + $0x1a8] sm:$0xff] %v4842
            %v4844 = vld [vmem:[%s4734 + $0x1b0] sm:$0xff]
            %4845 = vst [vmem:[%s4735 + $0x1b0] sm:$0xff] %v4844
            %v4846 = vld [vmem:[%s4734 + $0x1b8] sm:$0xff]
            %4847 = vst [vmem:[%s4735 + $0x1b8] sm:$0xff] %v4846
            %v4848 = vld [vmem:[%s4734 + $0x1c0] sm:$0xff]
            %4849 = vst [vmem:[%s4735 + $0x1c0] sm:$0xff] %v4848
            %v4850 = vld [vmem:[%s4734 + $0x1c8] sm:$0xff]
            %4851 = vst [vmem:[%s4735 + $0x1c8] sm:$0xff] %v4850
            %v4852 = vld [vmem:[%s4734 + $0x1d0] sm:$0xff]
            %4853 = vst [vmem:[%s4735 + $0x1d0] sm:$0xff] %v4852
            %v4854 = vld [vmem:[%s4734 + $0x1d8] sm:$0xff]
            %4855 = vst [vmem:[%s4735 + $0x1d8] sm:$0xff] %v4854
            %v4856 = vld [vmem:[%s4734 + $0x1e0] sm:$0xff]
            %4857 = vst [vmem:[%s4735 + $0x1e0] sm:$0xff] %v4856
            %v4858 = vld [vmem:[%s4734 + $0x1e8] sm:$0xff]
            %4859 = vst [vmem:[%s4735 + $0x1e8] sm:$0xff] %v4858
            %v4860 = vld [vmem:[%s4734 + $0x1f0] sm:$0xff]
            %4861 = vst [vmem:[%s4735 + $0x1f0] sm:$0xff] %v4860
            %v4862 = vld [vmem:[%s4734 + $0x1f8] sm:$0xff]
            %4863 = vst [vmem:[%s4735 + $0x1f8] sm:$0xff] %v4862
            %v4864 = vld [vmem:[%s4734 + $0x200] sm:$0xff]
            %4865 = vst [vmem:[%s4735 + $0x200] sm:$0xff] %v4864
            %v4866 = vld [vmem:[%s4734 + $0x208] sm:$0xff]
            %4867 = vst [vmem:[%s4735 + $0x208] sm:$0xff] %v4866
            %v4868 = vld [vmem:[%s4734 + $0x210] sm:$0xff]
            %4869 = vst [vmem:[%s4735 + $0x210] sm:$0xff] %v4868
            %v4870 = vld [vmem:[%s4734 + $0x218] sm:$0xff]
            %4871 = vst [vmem:[%s4735 + $0x218] sm:$0xff] %v4870
            %v4872 = vld [vmem:[%s4734 + $0x220] sm:$0xff]
            %4873 = vst [vmem:[%s4735 + $0x220] sm:$0xff] %v4872
            %v4874 = vld [vmem:[%s4734 + $0x228] sm:$0xff]
            %4875 = vst [vmem:[%s4735 + $0x228] sm:$0xff] %v4874
            %v4876 = vld [vmem:[%s4734 + $0x230] sm:$0xff]
            %4877 = vst [vmem:[%s4735 + $0x230] sm:$0xff] %v4876
            %v4878 = vld [vmem:[%s4734 + $0x238] sm:$0xff]
            %4879 = vst [vmem:[%s4735 + $0x238] sm:$0xff] %v4878
            %v4880 = vld [vmem:[%s4734 + $0x240] sm:$0xff]
            %4881 = vst [vmem:[%s4735 + $0x240] sm:$0xff] %v4880
            %v4882 = vld [vmem:[%s4734 + $0x248] sm:$0xff]
            %4883 = vst [vmem:[%s4735 + $0x248] sm:$0xff] %v4882
            %v4884 = vld [vmem:[%s4734 + $0x250] sm:$0xff]
            %4885 = vst [vmem:[%s4735 + $0x250] sm:$0xff] %v4884
          $region62: #{encoder_bert_forward.1} parent=56 // loop_footer
            %s4733 = sadd.s32 1, %s4729
          $region63: #{encoder_bert_forward.1} parent=56 // loop_footer_branch
            %4728 = sbr.rel target = $region59
          $region64: #{encoder_bert_forward.1} parent=56 // loop_exit
            _
        $region57: #{encoder_bert_forward.1} parent=48 // pred_fallthru
          _
      $region49: #{encoder_bert_forward.1} parent=44 // pred_fallthru
        _
      %5048 = vnop
    $region45: #{encoder_bert_forward.1} parent=1 // pred_fallthru
      _
    // Predicated region
    $region80: #{encoder_bert_forward.1} parent=1 // pred_check
      _
    $region81: #{encoder_bert_forward.1} parent=1 // pred_check_branch
      %5050 = sbr.rel (0) target = $region83
    $region82: #{encoder_bert_forward.1} parent=1 // pred_region
      _
    $region83: #{encoder_bert_forward.1} parent=1 // pred_fallthru
      _
    %5051 = vsyncpa [#allocation3], 1
    %5052 = vsyncpa [#allocation5], 1

</llo_original>
